<compile_context>
chip_gen: v5e
topology: v5e:2x2
jax: 0.10.0
libtpu: 0.0.40
codegen_flags: <defaults>
</compile_context>

<pallas_src>
import jax
import jax.numpy as jnp
from jax.experimental import pallas as pl
from jax.experimental.pallas import tpu as pltpu


# Set to jnp.bfloat16 on v6e/v7x for ~2x MXU throughput and half the weight DMA
# at larger batch (accumulation stays f32 inside the kernels).  Kept at f32 here
# so the strict 1e-3 check against the f32 reference passes.
MXU_DTYPE = jnp.float32


def _round_up(x, m):
    return (x + m - 1) // m * m


def _pad_to(x, axis, mult):
    """Zero-pad `axis` of x up to a multiple of `mult`."""
    pad = _round_up(x.shape[axis], mult) - x.shape[axis]
    if pad == 0:
        return x
    widths = [(0, 0)] * x.ndim
    widths[axis] = (0, pad)
    return jnp.pad(x, widths)


def _vmem_spec():
    # Whole array, resident in VMEM, no grid / no pipelining.
    return pl.BlockSpec(memory_space=pltpu.MemorySpace.VMEM)


# ----------------------------- kernel bodies --------------------------------

def _matmul_bias_relu_kernel(x_ref, w_ref, b_ref, o_ref):
    """o = relu(x @ w + b), f32 accumulation on the MXU."""
    acc = jnp.dot(x_ref[...], w_ref[...], preferred_element_type=jnp.float32)
    acc = jnp.maximum(acc + b_ref[...], 0.0)
    o_ref[...] = acc.astype(o_ref.dtype)


def _tail_kernel(a_ref, w2_ref, b2_ref, w3_ref, b3_ref,
                 w4_ref, b4_ref, w5_ref, b5_ref, o_ref):
    """conv2 + conv3 + fc1 + fc2 fused: four chained MXU matmuls, f32 accum."""
    def layer(a, w_ref, b_ref, relu):
        y = jnp.dot(a.astype(w_ref.dtype), w_ref[...],
                    preferred_element_type=jnp.float32) + b_ref[...]
        return jnp.maximum(y, 0.0) if relu else y

    a = a_ref[...]
    a = layer(a, w2_ref, b2_ref, True)     # conv2 (as a dense full matrix)
    a = layer(a, w3_ref, b3_ref, True)     # conv3 (as a dense full matrix)
    a = layer(a, w4_ref, b4_ref, True)     # fc1
    a = layer(a, w5_ref, b5_ref, False)    # fc2 (no relu)
    o_ref[...] = a.astype(o_ref.dtype)


# ----------------------------- pallas wrappers -------------------------------

def conv1_matmul(cols, w, b):
    M, _ = cols.shape
    N = w.shape[1]
    return pl.pallas_call(
        _matmul_bias_relu_kernel,
        out_shape=jax.ShapeDtypeStruct((M, N), jnp.float32),
        in_specs=[_vmem_spec()] * 3,
        out_specs=_vmem_spec(),
    )(cols, w, b.reshape(1, N).astype(jnp.float32))


def fused_tail(a0, w2, b2, w3, b3, w4, b4, w5, b5):
    M = a0.shape[0]
    N = w5.shape[1]
    return pl.pallas_call(
        _tail_kernel,
        out_shape=jax.ShapeDtypeStruct((M, N), jnp.float32),
        in_specs=[_vmem_spec()] * 9,
        out_specs=_vmem_spec(),
    )(a0, w2, b2, w3, b3, w4, b4, w5, b5)


# ------------------------ layout glue (plain JAX/XLA) -------------------------

def _im2col(x_nhwc, kh, kw, stride):
    """(N,H,W,C) -> (N*oh*ow, kh*kw*C) patches; column order (kh, kw, C)."""
    N, H, W, C = x_nhwc.shape
    oh = (H - kh) // stride + 1
    ow = (W - kw) // stride + 1
    h_idx = stride * jnp.arange(oh)[:, None] + jnp.arange(kh)[None, :]   # (oh, kh)
    w_idx = stride * jnp.arange(ow)[:, None] + jnp.arange(kw)[None, :]   # (ow, kw)
    # Single gather instead of kh*kw strided slices + stack.
    patches = x_nhwc[:, h_idx[:, None, :, None], w_idx[None, :, None, :], :]
    # patches: (N, oh, ow, kh, kw, C)
    return patches.reshape(N * oh * ow, kh * kw * C), oh, ow


def _conv_full_matrix(w_oihw, in_h, in_w, stride):
    """Dense (in_h*in_w*I, oh*ow*O) matrix so that a VALID conv equals
    flat_in_HWC @ W_full, with an HWC-flattened output.  Built outside the
    kernel as weight preprocessing."""
    O, I, kh, kw = w_oihw.shape
    oh = (in_h - kh) // stride + 1
    ow = (in_w - kw) // stride + 1
    f32 = jnp.float32
    sel_h = (jnp.arange(in_h)[:, None, None]
             == stride * jnp.arange(oh)[None, :, None]
             + jnp.arange(kh)[None, None, :]).astype(f32)     # (in_h, oh, kh)
    sel_w = (jnp.arange(in_w)[:, None, None]
             == stride * jnp.arange(ow)[None, :, None]
             + jnp.arange(kw)[None, None, :]).astype(f32)     # (in_w, ow, kw)
    wt = jnp.transpose(w_oihw, (2, 3, 1, 0)).astype(f32)      # (kh, kw, I, O)
    full = jnp.einsum('hpi,wqj,ijcd->hwcpqd', sel_h, sel_w, wt)
    return full.reshape(in_h * in_w * I, oh * ow * O), oh, ow


# ----------------------------- PlayerNN forward ------------------------------

def player_nn_forward(params, x_nchw):
    cdt = MXU_DTYPE
    B = x_nchw.shape[0]
    n_actions = params["bfc2"].shape[0]

    # --- conv1: im2col (one XLA gather on the input) + Pallas matmul kernel ---
    x = jnp.transpose(x_nchw, (0, 2, 3, 1))                        # NCHW -> NHWC
    O1, I1, kh1, kw1 = params["w1"].shape
    cols1, oh1, ow1 = _im2col(x, kh1, kw1, stride=4)               # (B*oh1*ow1, kh1*kw1*I1)
    M1 = cols1.shape[0]
    w1m = jnp.transpose(params["w1"], (2, 3, 1, 0)).reshape(kh1 * kw1 * I1, O1)
    cols1p = _pad_to(_pad_to(cols1, 0, 8), 1, 128).astype(cdt)     # M->8k, K->128k
    w1p = _pad_to(w1m, 0, 128).astype(cdt)
    y1 = conv1_matmul(cols1p, w1p, params["b1"])                   # (M1P, 32) f32
    y1 = y1[:M1]                                                   # (B*oh1*ow1, O1)

    # --- conv2/conv3/fc1/fc2 fused into ONE Pallas kernel ----------------------
    flat1 = y1.reshape(B, oh1 * ow1 * O1)                          # free bitcast (HWC flatten)
    w2full, oh2, ow2 = _conv_full_matrix(params["w2"], oh1, ow1, 2)
    w3full, oh3, ow3 = _conv_full_matrix(params["w3"], oh2, ow2, 1)
    b2full = jnp.tile(params["b2"], oh2 * ow2)
    b3full = jnp.tile(params["b3"], oh3 * ow3)
    # torch.nn.Flatten orders the conv3 output as CHW; permute fc1 rows to HWC
    # so the kernel consumes the HWC-flattened activation directly.
    C3 = params["w3"].shape[0]
    wfc1 = (params["wfc1"].reshape(C3, oh3, ow3, -1)
            .transpose(1, 2, 0, 3).reshape(oh3 * ow3 * C3, -1))

    # Pad every operand to (8, 128)-aligned tiles (exact: zero bias pad, zero
    # weight pad rows/cols, padded batch rows sliced off at the end).
    a0 = _pad_to(_pad_to(flat1, 0, 8), 1, 128).astype(cdt)
    w2p = _pad_to(_pad_to(w2full, 0, 128), 1, 128).astype(cdt)
    b2p = _pad_to(b2full, 0, 128).reshape(1, -1).astype(jnp.float32)
    w3p = _pad_to(_pad_to(w3full, 0, 128), 1, 128).astype(cdt)
    b3p = _pad_to(b3full, 0, 128).reshape(1, -1).astype(jnp.float32)
    w4p = _pad_to(_pad_to(wfc1, 0, 128), 1, 128).astype(cdt)
    b4p = _pad_to(params["bfc1"], 0, 128).reshape(1, -1).astype(jnp.float32)
    w5p = _pad_to(_pad_to(params["wfc2"], 0, 128), 1, 128).astype(cdt)
    b5p = _pad_to(params["bfc2"], 0, 128).reshape(1, -1).astype(jnp.float32)

    out = fused_tail(a0, w2p, b2p, w3p, b3p, w4p, b4p, w5p, b5p)   # (8, 128)
    return out[:B, :n_actions]


# Pure-JAX reference (mirrors the PyTorch forward exactly) for validation.
def reference_forward(params, x_nchw):
    def conv(x, w, b, s):
        y = jax.lax.conv_general_dilated(
            x, w, window_strides=(s, s), padding="VALID",
            dimension_numbers=("NCHW", "OIHW", "NCHW"))
        return jax.nn.relu(y + b[None, :, None, None])
    x = conv(x_nchw, params["w1"], params["b1"], 4)
    x = conv(x, params["w2"], params["b2"], 2)
    x = conv(x, params["w3"], params["b3"], 1)
    x = x.reshape(x.shape[0], -1)
    x = jax.nn.relu(x @ params["wfc1"] + params["bfc1"])
    return x @ params["wfc2"] + params["bfc2"]


# ----------------------------- parameter init --------------------------------

def init_params(key, in_ch, spatial, n_actions):
    def conv_out(h, k, s):
        return (h - k) // s + 1

    h = conv_out(conv_out(conv_out(spatial, 8, 4), 4, 2), 3, 1)
    conv_out_size = 64 * h * h

    ks = jax.random.split(key, 10)

    def w_init(k, shape, fan_in):
        return (jax.random.normal(k, shape, jnp.float32)
                * jnp.sqrt(2.0 / fan_in)).astype(jnp.float32)

    return {
        "w1": w_init(ks[0], (32, in_ch, 8, 8), in_ch * 8 * 8),
        "b1": jax.random.normal(ks[1], (32,), jnp.float32) * 0.01,
        "w2": w_init(ks[2], (64, 32, 4, 4), 32 * 4 * 4),
        "b2": jax.random.normal(ks[3], (64,), jnp.float32) * 0.01,
        "w3": w_init(ks[4], (64, 64, 3, 3), 64 * 3 * 3),
        "b3": jax.random.normal(ks[5], (64,), jnp.float32) * 0.01,
        "wfc1": w_init(ks[6], (conv_out_size, 512), conv_out_size),
        "bfc1": jax.random.normal(ks[7], (512,), jnp.float32) * 0.01,
        "wfc2": w_init(ks[8], (512, n_actions), 512),
        "bfc2": jax.random.normal(ks[9], (n_actions,), jnp.float32) * 0.01,
    }


# ----------------------------------- main ------------------------------------

if __name__ == "__main__":
    key = jax.random.PRNGKey(0)
    # spatial=36 is the smallest size the 8/4 -> 4/2 -> 3/1 conv stack accepts.
    batch, in_ch, spatial, n_actions = 2, 4, 36, 6

    k_params, k_x = jax.random.split(key)
    params = init_params(k_params, in_ch, spatial, n_actions)
    x = jax.random.normal(k_x, (batch, in_ch, spatial, spatial), jnp.float32)

    out = jax.block_until_ready(jax.jit(player_nn_forward)(params, x))
    ref = jax.block_until_ready(jax.jit(reference_forward)(params, x))

    assert out.shape == (batch, n_actions), out.shape
    tol = 1e-3 if MXU_DTYPE == jnp.float32 else 3e-2
    assert jnp.allclose(out, ref, atol=tol, rtol=tol), (
        f"max abs err {jnp.max(jnp.abs(out - ref))}")

    print("KERNEL_OK")
</pallas_src>

<mosaic_0001>
module attributes {stable_mosaic.version = 11 : i64} {
  func.func @_matmul_bias_relu_kernel(%arg0: memref<128x256xf32, #tpu.memory_space<vmem>>, %arg1: memref<256x32xf32, #tpu.memory_space<vmem>>, %arg2: memref<1x32xf32, #tpu.memory_space<vmem>>, %arg3: memref<128x32xf32, #tpu.memory_space<vmem>>) attributes {dimension_semantics = [], scalar_prefetch = 0 : i64, scratch_operands = 0 : i64, tpu.core_type = #tpu.core_type<tc>} {
    %c0 = arith.constant 0 : index
    %c0_0 = arith.constant 0 : index
    %0 = vector.load %arg0[%c0, %c0_0] : memref<128x256xf32, #tpu.memory_space<vmem>>, vector<128x256xf32>
    %c0_1 = arith.constant 0 : index
    %c0_2 = arith.constant 0 : index
    %1 = vector.load %arg1[%c0_1, %c0_2] : memref<256x32xf32, #tpu.memory_space<vmem>>, vector<256x32xf32>
    %cst = arith.constant dense<0.000000e+00> : vector<128x32xf32>
    %2 = tpu.matmul %0, %1, %cst {dimension_numbers = #tpu.dot_dimension_numbers<[1], [0], [0], [1], [0, 0, 1, 1], [], []>} : vector<128x256xf32>, vector<256x32xf32>, vector<128x32xf32> -> vector<128x32xf32>
    %c0_3 = arith.constant 0 : index
    %c0_4 = arith.constant 0 : index
    %3 = vector.load %arg2[%c0_3, %c0_4] : memref<1x32xf32, #tpu.memory_space<vmem>>, vector<1x32xf32>
    %4 = vector.broadcast %3 : vector<1x32xf32> to vector<128x32xf32>
    %5 = arith.addf %2, %4 : vector<128x32xf32>
    %cst_5 = arith.constant 0.000000e+00 : f32
    %6 = vector.broadcast %cst_5 : f32 to vector<128x32xf32>
    %7 = arith.maximumf %5, %6 : vector<128x32xf32>
    %c0_6 = arith.constant 0 : index
    %c0_7 = arith.constant 0 : index
    %8 = vector.load %arg3[%c0_6, %c0_7] : memref<128x32xf32, #tpu.memory_space<vmem>>, vector<128x32xf32>
    tpu.vector_store %arg3[%c0_6, %c0_7], %7 {strides = array<i32>} : memref<128x32xf32, #tpu.memory_space<vmem>>, vector<128x32xf32>,
    return
  }
}

module attributes {stable_mosaic.version = 11 : i64} {
  func.func @_tail_kernel(%arg0: memref<8x2048xf32, #tpu.memory_space<vmem>>, %arg1: memref<2048x640xf32, #tpu.memory_space<vmem>>, %arg2: memref<1x640xf32, #tpu.memory_space<vmem>>, %arg3: memref<640x128xf32, #tpu.memory_space<vmem>>, %arg4: memref<1x128xf32, #tpu.memory_space<vmem>>, %arg5: memref<128x512xf32, #tpu.memory_space<vmem>>, %arg6: memref<1x512xf32, #tpu.memory_space<vmem>>, %arg7: memref<512x128xf32, #tpu.memory_space<vmem>>, %arg8: memref<1x128xf32, #tpu.memory_space<vmem>>, %arg9: memref<8x128xf32, #tpu.memory_space<vmem>>) attributes {dimension_semantics = [], scalar_prefetch = 0 : i64, scratch_operands = 0 : i64, tpu.core_type = #tpu.core_type<tc>} {
    %c0 = arith.constant 0 : index
    %c0_0 = arith.constant 0 : index
    %0 = vector.load %arg0[%c0, %c0_0] : memref<8x2048xf32, #tpu.memory_space<vmem>>, vector<8x2048xf32>
    %c0_1 = arith.constant 0 : index
    %c0_2 = arith.constant 0 : index
    %1 = vector.load %arg1[%c0_1, %c0_2] : memref<2048x640xf32, #tpu.memory_space<vmem>>, vector<2048x640xf32>
    %cst = arith.constant dense<0.000000e+00> : vector<8x640xf32>
    %2 = tpu.matmul %0, %1, %cst {dimension_numbers = #tpu.dot_dimension_numbers<[1], [0], [0], [1], [0, 0, 1, 1], [], []>} : vector<8x2048xf32>, vector<2048x640xf32>, vector<8x640xf32> -> vector<8x640xf32>
    %c0_3 = arith.constant 0 : index
    %c0_4 = arith.constant 0 : index
    %3 = vector.load %arg2[%c0_3, %c0_4] : memref<1x640xf32, #tpu.memory_space<vmem>>, vector<1x640xf32>
    %4 = vector.broadcast %3 : vector<1x640xf32> to vector<8x640xf32>
    %5 = arith.addf %2, %4 : vector<8x640xf32>
    %cst_5 = arith.constant 0.000000e+00 : f32
    %6 = vector.broadcast %cst_5 : f32 to vector<8x640xf32>
    %7 = arith.maximumf %5, %6 : vector<8x640xf32>
    %c0_6 = arith.constant 0 : index
    %c0_7 = arith.constant 0 : index
    %8 = vector.load %arg3[%c0_6, %c0_7] : memref<640x128xf32, #tpu.memory_space<vmem>>, vector<640x128xf32>
    %cst_8 = arith.constant dense<0.000000e+00> : vector<8x128xf32>
    %9 = tpu.matmul %7, %8, %cst_8 {dimension_numbers = #tpu.dot_dimension_numbers<[1], [0], [0], [1], [0, 0, 1, 1], [], []>} : vector<8x640xf32>, vector<640x128xf32>, vector<8x128xf32> -> vector<8x128xf32>
    %c0_9 = arith.constant 0 : index
    %c0_10 = arith.constant 0 : index
    %10 = vector.load %arg4[%c0_9, %c0_10] : memref<1x128xf32, #tpu.memory_space<vmem>>, vector<1x128xf32>
    %11 = vector.broadcast %10 : vector<1x128xf32> to vector<8x128xf32>
    %12 = arith.addf %9, %11 : vector<8x128xf32>
    %cst_11 = arith.constant 0.000000e+00 : f32
    %13 = vector.broadcast %cst_11 : f32 to vector<8x128xf32>
    %14 = arith.maximumf %12, %13 : vector<8x128xf32>
    %c0_12 = arith.constant 0 : index
    %c0_13 = arith.constant 0 : index
    %15 = vector.load %arg5[%c0_12, %c0_13] : memref<128x512xf32, #tpu.memory_space<vmem>>, vector<128x512xf32>
    %cst_14 = arith.constant dense<0.000000e+00> : vector<8x512xf32>
    %16 = tpu.matmul %14, %15, %cst_14 {dimension_numbers = #tpu.dot_dimension_numbers<[1], [0], [0], [1], [0, 0, 1, 1], [], []>} : vector<8x128xf32>, vector<128x512xf32>, vector<8x512xf32> -> vector<8x512xf32>
    %c0_15 = arith.constant 0 : index
    %c0_16 = arith.constant 0 : index
    %17 = vector.load %arg6[%c0_15, %c0_16] : memref<1x512xf32, #tpu.memory_space<vmem>>, vector<1x512xf32>
    %18 = vector.broadcast %17 : vector<1x512xf32> to vector<8x512xf32>
    %19 = arith.addf %16, %18 : vector<8x512xf32>
    %cst_17 = arith.constant 0.000000e+00 : f32
    %20 = vector.broadcast %cst_17 : f32 to vector<8x512xf32>
    %21 = arith.maximumf %19, %20 : vector<8x512xf32>
    %c0_18 = arith.constant 0 : index
    %c0_19 = arith.constant 0 : index
    %22 = vector.load %arg7[%c0_18, %c0_19] : memref<512x128xf32, #tpu.memory_space<vmem>>, vector<512x128xf32>
    %cst_20 = arith.constant dense<0.000000e+00> : vector<8x128xf32>
    %23 = tpu.matmul %21, %22, %cst_20 {dimension_numbers = #tpu.dot_dimension_numbers<[1], [0], [0], [1], [0, 0, 1, 1], [], []>} : vector<8x512xf32>, vector<512x128xf32>, vector<8x128xf32> -> vector<8x128xf32>
    %c0_21 = arith.constant 0 : index
    %c0_22 = arith.constant 0 : index
    %24 = vector.load %arg8[%c0_21, %c0_22] : memref<1x128xf32, #tpu.memory_space<vmem>>, vector<1x128xf32>
    %25 = vector.broadcast %24 : vector<1x128xf32> to vector<8x128xf32>
    %26 = arith.addf %23, %25 : vector<8x128xf32>
    %c0_23 = arith.constant 0 : index
    %c0_24 = arith.constant 0 : index
    %27 = vector.load %arg9[%c0_23, %c0_24] : memref<8x128xf32, #tpu.memory_space<vmem>>, vector<8x128xf32>
    tpu.vector_store %arg9[%c0_23, %c0_24], %26 {strides = array<i32>} : memref<8x128xf32, #tpu.memory_space<vmem>>, vector<8x128xf32>,
    return
  }
}

</mosaic_0001>

<llo_original>
// kernel: player_nn_forward.2
$region0: #{player_nn_forward.2}
  #allocation0 [shape = 'u32[]', space=smem, size = 0x4, offset = 0x4, fixed_abs, tag = 'smem constant byte address 0x4 - core index']
  #allocation1 [shape = 'u32[72,128]{1,0:T(1,128)}', space=vmem, size = 0x9000, scoped, tag = 'internal scratch']
  %s0 = inlined_call_operand.vmem [shape: f32[128,256], index: 0, kind: input, shape index: {}]
  %s1 = inlined_call_operand.vmem [shape: f32[256,32], index: 1, kind: input, shape index: {}]
  %s2 = inlined_call_operand.vmem [shape: f32[1,32], index: 2, kind: input, shape index: {}]
  %s3 = inlined_call_operand.vmem [shape: f32[128,32], index: 3, kind: output, shape index: {}]
  %s4 = sld [smem:[#allocation0]]
  $region22: #{player_nn_forward.2} parent=0
    _
  %s6 = ssub.s32 1, %s4
  %s7 = scalar_select 0, %s6, %s4
  // Predicated region
  $region2: #{player_nn_forward.2} parent=0 // pred_check
    _
  $region3: #{player_nn_forward.2} parent=0 // pred_check_branch
    %9 = sbr.rel (0) target = $region5
  $region4: #{player_nn_forward.2} parent=0 // pred_region
    _
  $region5: #{player_nn_forward.2} parent=0 // pred_fallthru
    _
  // Predicated region
  $region6: #{player_nn_forward.2} parent=0 // pred_check
    _
  $region7: #{player_nn_forward.2} parent=0 // pred_check_branch
    %11 = sbr.rel (0) target = $region9
  $region8: #{player_nn_forward.2} parent=0 // pred_region
    _
  $region9: #{player_nn_forward.2} parent=0 // pred_fallthru
    _
  // Predicated region
  $region10: #{player_nn_forward.2} parent=0 // pred_check
    _
  $region11: #{player_nn_forward.2} parent=0 // pred_check_branch
    %13 = sbr.rel (0) target = $region13
  $region12: #{player_nn_forward.2} parent=0 // pred_region
    _
  $region13: #{player_nn_forward.2} parent=0 // pred_fallthru
    _
  %v14 = vld [vmem:[%s0] sm:$0xff]
  %v15 = vld [vmem:[%s0 + $0x8] sm:$0xff]
  %v16 = vld [vmem:[%s0 + $0x10] sm:$0xff]
  %v17 = vld [vmem:[%s0 + $0x18] sm:$0xff]
  %v18 = vld [vmem:[%s0 + $0x20] sm:$0xff]
  %v19 = vld [vmem:[%s0 + $0x28] sm:$0xff]
  %v20 = vld [vmem:[%s0 + $0x30] sm:$0xff]
  %v21 = vld [vmem:[%s0 + $0x38] sm:$0xff]
  %v22 = vld [vmem:[%s0 + $0x40] sm:$0xff]
  %v23 = vld [vmem:[%s0 + $0x48] sm:$0xff]
  %v24 = vld [vmem:[%s0 + $0x50] sm:$0xff]
  %v25 = vld [vmem:[%s0 + $0x58] sm:$0xff]
  %v26 = vld [vmem:[%s0 + $0x60] sm:$0xff]
  %v27 = vld [vmem:[%s0 + $0x68] sm:$0xff]
  %v28 = vld [vmem:[%s0 + $0x70] sm:$0xff]
  %v29 = vld [vmem:[%s0 + $0x78] sm:$0xff]
  %v30 = vld [vmem:[%s0 + $0x80] sm:$0xff]
  %v31 = vld [vmem:[%s0 + $0x88] sm:$0xff]
  %v32 = vld [vmem:[%s0 + $0x90] sm:$0xff]
  %v33 = vld [vmem:[%s0 + $0x98] sm:$0xff]
  %v34 = vld [vmem:[%s0 + $0xa0] sm:$0xff]
  %v35 = vld [vmem:[%s0 + $0xa8] sm:$0xff]
  %v36 = vld [vmem:[%s0 + $0xb0] sm:$0xff]
  %v37 = vld [vmem:[%s0 + $0xb8] sm:$0xff]
  %v38 = vld [vmem:[%s0 + $0xc0] sm:$0xff]
  %v39 = vld [vmem:[%s0 + $0xc8] sm:$0xff]
  %v40 = vld [vmem:[%s0 + $0xd0] sm:$0xff]
  %v41 = vld [vmem:[%s0 + $0xd8] sm:$0xff]
  %v42 = vld [vmem:[%s0 + $0xe0] sm:$0xff]
  %v43 = vld [vmem:[%s0 + $0xe8] sm:$0xff]
  %v44 = vld [vmem:[%s0 + $0xf0] sm:$0xff]
  %v45 = vld [vmem:[%s0 + $0xf8] sm:$0xff]
  %v46 = vld [vmem:[%s1] sm:$0xff]
  %v47 = vld [vmem:[%s1 + $0x8] sm:$0xff]
  %v48 = vld [vmem:[%s1 + $0x10] sm:$0xff]
  %v49 = vld [vmem:[%s1 + $0x18] sm:$0xff]
  %v50 = vld [vmem:[%s1 + $0x20] sm:$0xff]
  %v51 = vld [vmem:[%s1 + $0x28] sm:$0xff]
  %v52 = vld [vmem:[%s1 + $0x30] sm:$0xff]
  %v53 = vld [vmem:[%s1 + $0x38] sm:$0xff]
  %v54 = vld [vmem:[%s1 + $0x40] sm:$0xff]
  %v55 = vld [vmem:[%s1 + $0x48] sm:$0xff]
  %v56 = vld [vmem:[%s1 + $0x50] sm:$0xff]
  %v57 = vld [vmem:[%s1 + $0x58] sm:$0xff]
  %v58 = vld [vmem:[%s1 + $0x60] sm:$0xff]
  %v59 = vld [vmem:[%s1 + $0x68] sm:$0xff]
  %v60 = vld [vmem:[%s1 + $0x70] sm:$0xff]
  %v61 = vld [vmem:[%s1 + $0x78] sm:$0xff]
  %v62 = vld [vmem:[%s1 + $0x80] sm:$0xff]
  %v63 = vld [vmem:[%s1 + $0x88] sm:$0xff]
  %v64 = vld [vmem:[%s1 + $0x90] sm:$0xff]
  %v65 = vld [vmem:[%s1 + $0x98] sm:$0xff]
  %v66 = vld [vmem:[%s1 + $0xa0] sm:$0xff]
  %v67 = vld [vmem:[%s1 + $0xa8] sm:$0xff]
  %v68 = vld [vmem:[%s1 + $0xb0] sm:$0xff]
  %v69 = vld [vmem:[%s1 + $0xb8] sm:$0xff]
  %v70 = vld [vmem:[%s1 + $0xc0] sm:$0xff]
  %v71 = vld [vmem:[%s1 + $0xc8] sm:$0xff]
  %v72 = vld [vmem:[%s1 + $0xd0] sm:$0xff]
  %v73 = vld [vmem:[%s1 + $0xd8] sm:$0xff]
  %v74 = vld [vmem:[%s1 + $0xe0] sm:$0xff]
  %v75 = vld [vmem:[%s1 + $0xe8] sm:$0xff]
  %v76 = vld [vmem:[%s1 + $0xf0] sm:$0xff]
  %v77 = vld [vmem:[%s1 + $0xf8] sm:$0xff]
  %v78 = vld [vmem:[%s2] sm:$0x1]
  %v80 = vperm.slane %v78, 0
  %82 = vmatpush.msra.mxu0 %v61
  %83 = vmatpush.msra.mxu0 %v60
  %84 = vmatpush.msra.mxu0 %v59
  %85 = vmatpush.msra.mxu0 %v58
  %86 = vmatpush.msra.mxu0 %v57
  %87 = vmatpush.msra.mxu0 %v56
  %88 = vmatpush.msra.mxu0 %v55
  %89 = vmatpush.msra.mxu0 %v54
  %90 = vmatpush.msra.mxu0 %v53
  %91 = vmatpush.msra.mxu0 %v52
  %92 = vmatpush.msra.mxu0 %v51
  %93 = vmatpush.msra.mxu0 %v50
  %94 = vmatpush.msra.mxu0 %v49
  %95 = vmatpush.msra.mxu0 %v48
  %96 = vmatpush.msra.mxu0 %v47
  %97 = vmatpush.msra.mxu0 %v46
  %98 = vmatmul.f32.gmra.mxu0 %v14
  %v99 = vpop.f32.mrf.mxu0
  %v100 = vadd.f32 %v80, %v99
  %101 = vmatmul.f32.gmra.mxu0 %v16
  %v102 = vpop.f32.mrf.mxu0
  %v103 = vadd.f32 %v80, %v102
  %104 = vmatmul.f32.gmra.mxu0 %v18
  %v105 = vpop.f32.mrf.mxu0
  %v106 = vadd.f32 %v80, %v105
  %107 = vmatmul.f32.gmra.mxu0 %v20
  %v108 = vpop.f32.mrf.mxu0
  %v109 = vadd.f32 %v80, %v108
  %110 = vmatmul.f32.gmra.mxu0 %v22
  %v111 = vpop.f32.mrf.mxu0
  %v112 = vadd.f32 %v80, %v111
  %113 = vmatmul.f32.gmra.mxu0 %v24
  %v114 = vpop.f32.mrf.mxu0
  %v115 = vadd.f32 %v80, %v114
  %116 = vmatmul.f32.gmra.mxu0 %v26
  %v117 = vpop.f32.mrf.mxu0
  %v118 = vadd.f32 %v80, %v117
  %119 = vmatmul.f32.gmra.mxu0 %v28
  %v120 = vpop.f32.mrf.mxu0
  %v121 = vadd.f32 %v80, %v120
  %122 = vmatmul.f32.gmra.mxu0 %v30
  %v123 = vpop.f32.mrf.mxu0
  %v124 = vadd.f32 %v80, %v123
  %125 = vmatmul.f32.gmra.mxu0 %v32
  %v126 = vpop.f32.mrf.mxu0
  %v127 = vadd.f32 %v80, %v126
  %128 = vmatmul.f32.gmra.mxu0 %v34
  %v129 = vpop.f32.mrf.mxu0
  %v130 = vadd.f32 %v80, %v129
  %131 = vmatmul.f32.gmra.mxu0 %v36
  %v132 = vpop.f32.mrf.mxu0
  %v133 = vadd.f32 %v80, %v132
  %134 = vmatmul.f32.gmra.mxu0 %v38
  %v135 = vpop.f32.mrf.mxu0
  %v136 = vadd.f32 %v80, %v135
  %137 = vmatmul.f32.gmra.mxu0 %v40
  %v138 = vpop.f32.mrf.mxu0
  %v139 = vadd.f32 %v80, %v138
  %140 = vmatmul.f32.gmra.mxu0 %v42
  %v141 = vpop.f32.mrf.mxu0
  %v142 = vadd.f32 %v80, %v141
  %143 = vmatmul.f32.gmra.mxu0 %v44
  %v144 = vpop.f32.mrf.mxu0
  %v145 = vadd.f32 %v80, %v144
  %146 = vdwg.mxu0
  %147 = vmatpush.msra.mxu0 %v77
  %148 = vmatpush.msra.mxu0 %v76
  %149 = vmatpush.msra.mxu0 %v75
  %150 = vmatpush.msra.mxu0 %v74
  %151 = vmatpush.msra.mxu0 %v73
  %152 = vmatpush.msra.mxu0 %v72
  %153 = vmatpush.msra.mxu0 %v71
  %154 = vmatpush.msra.mxu0 %v70
  %155 = vmatpush.msra.mxu0 %v69
  %156 = vmatpush.msra.mxu0 %v68
  %157 = vmatpush.msra.mxu0 %v67
  %158 = vmatpush.msra.mxu0 %v66
  %159 = vmatpush.msra.mxu0 %v65
  %160 = vmatpush.msra.mxu0 %v64
  %161 = vmatpush.msra.mxu0 %v63
  %162 = vmatpush.msra.mxu0 %v62
  %163 = vmatmul.f32.gmra.mxu0 %v15
  %v164 = vpop.f32.mrf.mxu0
  %v165 = vadd.f32 %v100, %v164
  %166 = vmatmul.f32.gmra.mxu0 %v17
  %v167 = vpop.f32.mrf.mxu0
  %v168 = vadd.f32 %v103, %v167
  %169 = vmatmul.f32.gmra.mxu0 %v19
  %v170 = vpop.f32.mrf.mxu0
  %v171 = vadd.f32 %v106, %v170
  %172 = vmatmul.f32.gmra.mxu0 %v21
  %v173 = vpop.f32.mrf.mxu0
  %v174 = vadd.f32 %v109, %v173
  %175 = vmatmul.f32.gmra.mxu0 %v23
  %v176 = vpop.f32.mrf.mxu0
  %v177 = vadd.f32 %v112, %v176
  %178 = vmatmul.f32.gmra.mxu0 %v25
  %v179 = vpop.f32.mrf.mxu0
  %v180 = vadd.f32 %v115, %v179
  %181 = vmatmul.f32.gmra.mxu0 %v27
  %v182 = vpop.f32.mrf.mxu0
  %v183 = vadd.f32 %v118, %v182
  %184 = vmatmul.f32.gmra.mxu0 %v29
  %v185 = vpop.f32.mrf.mxu0
  %v186 = vadd.f32 %v121, %v185
  %187 = vmatmul.f32.gmra.mxu0 %v31
  %v188 = vpop.f32.mrf.mxu0
  %v189 = vadd.f32 %v124, %v188
  %190 = vmatmul.f32.gmra.mxu0 %v33
  %v191 = vpop.f32.mrf.mxu0
  %v192 = vadd.f32 %v127, %v191
  %193 = vmatmul.f32.gmra.mxu0 %v35
  %v194 = vpop.f32.mrf.mxu0
  %v195 = vadd.f32 %v130, %v194
  %196 = vmatmul.f32.gmra.mxu0 %v37
  %v197 = vpop.f32.mrf.mxu0
  %v198 = vadd.f32 %v133, %v197
  %199 = vmatmul.f32.gmra.mxu0 %v39
  %v200 = vpop.f32.mrf.mxu0
  %v201 = vadd.f32 %v136, %v200
  %202 = vmatmul.f32.gmra.mxu0 %v41
  %v203 = vpop.f32.mrf.mxu0
  %v204 = vadd.f32 %v139, %v203
  %205 = vmatmul.f32.gmra.mxu0 %v43
  %v206 = vpop.f32.mrf.mxu0
  %v207 = vadd.f32 %v142, %v206
  %208 = vmatmul.f32.gmra.mxu0 %v45
  %v209 = vpop.f32.mrf.mxu0
  %v210 = vadd.f32 %v145, %v209
  %211 = vdwg.mxu0
  %v212 = vmax.f32 %v165, 0.0
  %v213 = vmax.f32 %v168, 0.0
  %v214 = vmax.f32 %v171, 0.0
  %v215 = vmax.f32 %v174, 0.0
  %v216 = vmax.f32 %v177, 0.0
  %v217 = vmax.f32 %v180, 0.0
  %v218 = vmax.f32 %v183, 0.0
  %v219 = vmax.f32 %v186, 0.0
  %v220 = vmax.f32 %v189, 0.0
  %v221 = vmax.f32 %v192, 0.0
  %v222 = vmax.f32 %v195, 0.0
  %v223 = vmax.f32 %v198, 0.0
  %v224 = vmax.f32 %v201, 0.0
  %v225 = vmax.f32 %v204, 0.0
  %v226 = vmax.f32 %v207, 0.0
  %v227 = vmax.f32 %v210, 0.0
  %vm228 = vcmask 261120
  %229 = vst.msk [vmem:[%s3] sm:$0xff] %vm228, %v212
  %230 = vst.msk [vmem:[%s3 + $0x8] sm:$0xff] %vm228, %v213
  %231 = vst.msk [vmem:[%s3 + $0x10] sm:$0xff] %vm228, %v214
  %232 = vst.msk [vmem:[%s3 + $0x18] sm:$0xff] %vm228, %v215
  %233 = vst.msk [vmem:[%s3 + $0x20] sm:$0xff] %vm228, %v216
  %234 = vst.msk [vmem:[%s3 + $0x28] sm:$0xff] %vm228, %v217
  %235 = vst.msk [vmem:[%s3 + $0x30] sm:$0xff] %vm228, %v218
  %236 = vst.msk [vmem:[%s3 + $0x38] sm:$0xff] %vm228, %v219
  %237 = vst.msk [vmem:[%s3 + $0x40] sm:$0xff] %vm228, %v220
  %238 = vst.msk [vmem:[%s3 + $0x48] sm:$0xff] %vm228, %v221
  %239 = vst.msk [vmem:[%s3 + $0x50] sm:$0xff] %vm228, %v222
  %240 = vst.msk [vmem:[%s3 + $0x58] sm:$0xff] %vm228, %v223
  %241 = vst.msk [vmem:[%s3 + $0x60] sm:$0xff] %vm228, %v224
  %242 = vst.msk [vmem:[%s3 + $0x68] sm:$0xff] %vm228, %v225
  %243 = vst.msk [vmem:[%s3 + $0x70] sm:$0xff] %vm228, %v226
  %244 = vst.msk [vmem:[%s3 + $0x78] sm:$0xff] %vm228, %v227
  // Predicated region
  $region14: #{player_nn_forward.2} parent=0 // pred_check
    _
  $region15: #{player_nn_forward.2} parent=0 // pred_check_branch
    %246 = sbr.rel (0) target = $region17
  $region16: #{player_nn_forward.2} parent=0 // pred_region
    _
  $region17: #{player_nn_forward.2} parent=0 // pred_fallthru
    _
  // Predicated region
  $region18: #{player_nn_forward.2} parent=0 // pred_check
    _
  $region19: #{player_nn_forward.2} parent=0 // pred_check_branch
    %248 = sbr.rel (0) target = $region21
  $region20: #{player_nn_forward.2} parent=0 // pred_region
    _
  $region21: #{player_nn_forward.2} parent=0 // pred_fallthru
    _

// kernel: tile.8
$region0: #{tile.8}
  #allocation0 [shape = 's32[1]{0}', space=sflag, size = 0x4, scoped, tag = 'scoped memory for tile.8']
  %s0 = inlined_call_operand.vmem [shape: f32[64], index: 0, kind: input, shape index: {}]
  %s1 = inlined_call_operand.vmem [shape: f32[9,64], index: 1, kind: output, shape index: {}]
  // Predicated region
  $region2: #{tile.8} parent=0 // pred_check
    _
  $region3: #{tile.8} parent=0 // pred_check_branch
    %3 = sbr.rel (0) target = $region5
  $region4: #{tile.8} parent=0 // pred_region
    _
  $region5: #{tile.8} parent=0 // pred_fallthru
    _
  %v4 = vld [vmem:[%s0] ss:$0 sm:$0xff]
  %5 = vst [vmem:[%s1] sm:$0xff] %v4
  %s6 = scalar_lea.vmem %s1, 8
  %7 = vst [vmem:[%s6] sm:$0xff] %v4

// kernel: tile.9
$region0: #{tile.9}
  %s0 = inlined_call_operand.vmem [shape: f32[9,64], index: 0, kind: input, shape index: {}]
  %s1 = inlined_call_operand.vmem [shape: f32[576], index: 1, kind: output, shape index: {}]
  %v2 = vld [vmem:[%s0] ss:$2 sm:$0x1f]
  %vm3 = vcmask 523264
  %4 = vst.msk [vmem:[%s1] sm:$0x1f] %vm3, %v2
  %s5 = scalar_lea.vmem %s0, 1
  %v6 = vld [vmem:[%s5] ss:$2 sm:$0xf]
  %7 = vrot.lane.b32.xlu0 %v6, 64
  %v8 = vpop.permute.xlu0 %7
  %vm9 = vcmask 1048064
  %10 = vst.msk [vmem:[%s1] sm:$0xf] %vm9, %v8

// kernel: player_nn_forward.3
$region0: #{player_nn_forward.3}
  #allocation0 [shape = 'u32[]', space=smem, size = 0x4, offset = 0x4, fixed_abs, tag = 'smem constant byte address 0x4 - core index']
  #allocation1 [shape = 'u32[72,128]{1,0:T(1,128)}', space=vmem, size = 0x9000, scoped, tag = 'internal scratch']
  %s0 = inlined_call_operand.vmem [shape: f32[8,2048], index: 0, kind: input, shape index: {}]
  %s1 = inlined_call_operand.vmem [shape: f32[2048,640], index: 1, kind: input, shape index: {}]
  %s2 = inlined_call_operand.vmem [shape: f32[1,640], index: 2, kind: input, shape index: {}]
  %s3 = inlined_call_operand.vmem [shape: f32[640,128], index: 3, kind: input, shape index: {}]
  %s4 = inlined_call_operand.vmem [shape: f32[1,128], index: 4, kind: input, shape index: {}]
  %s5 = inlined_call_operand.vmem [shape: f32[128,512], index: 5, kind: input, shape index: {}]
  %s6 = inlined_call_operand.vmem [shape: f32[1,512], index: 6, kind: input, shape index: {}]
  %s7 = inlined_call_operand.vmem [shape: f32[512,128], index: 7, kind: input, shape index: {}]
  %s8 = inlined_call_operand.vmem [shape: f32[1,128], index: 8, kind: input, shape index: {}]
  %s9 = inlined_call_operand.vmem [shape: f32[8,128], index: 9, kind: output, shape index: {}]
  %s10 = sld [smem:[#allocation0]]
  $region46: #{player_nn_forward.3} parent=0
    _
  %s12 = ssub.s32 1, %s10
  %s13 = scalar_select 0, %s12, %s10
  // Predicated region
  $region2: #{player_nn_forward.3} parent=0 // pred_check
    _
  $region3: #{player_nn_forward.3} parent=0 // pred_check_branch
    %15 = sbr.rel (0) target = $region5
  $region4: #{player_nn_forward.3} parent=0 // pred_region
    _
  $region5: #{player_nn_forward.3} parent=0 // pred_fallthru
    _
  // Predicated region
  $region6: #{player_nn_forward.3} parent=0 // pred_check
    _
  $region7: #{player_nn_forward.3} parent=0 // pred_check_branch
    %17 = sbr.rel (0) target = $region9
  $region8: #{player_nn_forward.3} parent=0 // pred_region
    _
  $region9: #{player_nn_forward.3} parent=0 // pred_fallthru
    _
  // Predicated region
  $region10: #{player_nn_forward.3} parent=0 // pred_check
    _
  $region11: #{player_nn_forward.3} parent=0 // pred_check_branch
    %19 = sbr.rel (0) target = $region13
  $region12: #{player_nn_forward.3} parent=0 // pred_region
    _
  $region13: #{player_nn_forward.3} parent=0 // pred_fallthru
    _
  // Predicated region
  $region14: #{player_nn_forward.3} parent=0 // pred_check
    _
  $region15: #{player_nn_forward.3} parent=0 // pred_check_branch
    %21 = sbr.rel (0) target = $region17
  $region16: #{player_nn_forward.3} parent=0 // pred_region
    _
  $region17: #{player_nn_forward.3} parent=0 // pred_fallthru
    _
  // Predicated region
  $region18: #{player_nn_forward.3} parent=0 // pred_check
    _
  $region19: #{player_nn_forward.3} parent=0 // pred_check_branch
    %23 = sbr.rel (0) target = $region21
  $region20: #{player_nn_forward.3} parent=0 // pred_region
    _
  $region21: #{player_nn_forward.3} parent=0 // pred_fallthru
    _
  // Predicated region
  $region22: #{player_nn_forward.3} parent=0 // pred_check
    _
  $region23: #{player_nn_forward.3} parent=0 // pred_check_branch
    %25 = sbr.rel (0) target = $region25
  $region24: #{player_nn_forward.3} parent=0 // pred_region
    _
  $region25: #{player_nn_forward.3} parent=0 // pred_fallthru
    _
  // Predicated region
  $region26: #{player_nn_forward.3} parent=0 // pred_check
    _
  $region27: #{player_nn_forward.3} parent=0 // pred_check_branch
    %27 = sbr.rel (0) target = $region29
  $region28: #{player_nn_forward.3} parent=0 // pred_region
    _
  $region29: #{player_nn_forward.3} parent=0 // pred_fallthru
    _
  // Predicated region
  $region30: #{player_nn_forward.3} parent=0 // pred_check
    _
  $region31: #{player_nn_forward.3} parent=0 // pred_check_branch
    %29 = sbr.rel (0) target = $region33
  $region32: #{player_nn_forward.3} parent=0 // pred_region
    _
  $region33: #{player_nn_forward.3} parent=0 // pred_fallthru
    _
  // Predicated region
  $region34: #{player_nn_forward.3} parent=0 // pred_check
    _
  $region35: #{player_nn_forward.3} parent=0 // pred_check_branch
    %31 = sbr.rel (0) target = $region37
  $region36: #{player_nn_forward.3} parent=0 // pred_region
    _
  $region37: #{player_nn_forward.3} parent=0 // pred_fallthru
    _
  %v32 = vld [vmem:[%s0] sm:$0xff]
  %v33 = vld [vmem:[%s0 + $0x8] sm:$0xff]
  %v34 = vld [vmem:[%s0 + $0x10] sm:$0xff]
  %v35 = vld [vmem:[%s0 + $0x18] sm:$0xff]
  %v36 = vld [vmem:[%s0 + $0x20] sm:$0xff]
  %v37 = vld [vmem:[%s0 + $0x28] sm:$0xff]
  %v38 = vld [vmem:[%s0 + $0x30] sm:$0xff]
  %v39 = vld [vmem:[%s0 + $0x38] sm:$0xff]
  %v40 = vld [vmem:[%s0 + $0x40] sm:$0xff]
  %v41 = vld [vmem:[%s0 + $0x48] sm:$0xff]
  %v42 = vld [vmem:[%s0 + $0x50] sm:$0xff]
  %v43 = vld [vmem:[%s0 + $0x58] sm:$0xff]
  %v44 = vld [vmem:[%s0 + $0x60] sm:$0xff]
  %v45 = vld [vmem:[%s0 + $0x68] sm:$0xff]
  %v46 = vld [vmem:[%s0 + $0x70] sm:$0xff]
  %v47 = vld [vmem:[%s0 + $0x78] sm:$0xff]
  %v48 = vld [vmem:[%s1] sm:$0xff]
  %v49 = vld [vmem:[%s1 + $0x8] sm:$0xff]
  %v50 = vld [vmem:[%s1 + $0x10] sm:$0xff]
  %v51 = vld [vmem:[%s1 + $0x18] sm:$0xff]
  %v52 = vld [vmem:[%s1 + $0x20] sm:$0xff]
  %v53 = vld [vmem:[%s1 + $0x28] sm:$0xff]
  %v54 = vld [vmem:[%s1 + $0x30] sm:$0xff]
  %v55 = vld [vmem:[%s1 + $0x38] sm:$0xff]
  %v56 = vld [vmem:[%s1 + $0x40] sm:$0xff]
  %v57 = vld [vmem:[%s1 + $0x48] sm:$0xff]
  %v58 = vld [vmem:[%s1 + $0x50] sm:$0xff]
  %v59 = vld [vmem:[%s1 + $0x58] sm:$0xff]
  %v60 = vld [vmem:[%s1 + $0x60] sm:$0xff]
  %v61 = vld [vmem:[%s1 + $0x68] sm:$0xff]
  %v62 = vld [vmem:[%s1 + $0x70] sm:$0xff]
  %v63 = vld [vmem:[%s1 + $0x78] sm:$0xff]
  %v64 = vld [vmem:[%s1 + $0x80] sm:$0xff]
  %v65 = vld [vmem:[%s1 + $0x88] sm:$0xff]
  %v66 = vld [vmem:[%s1 + $0x90] sm:$0xff]
  %v67 = vld [vmem:[%s1 + $0x98] sm:$0xff]
  %v68 = vld [vmem:[%s1 + $0xa0] sm:$0xff]
  %v69 = vld [vmem:[%s1 + $0xa8] sm:$0xff]
  %v70 = vld [vmem:[%s1 + $0xb0] sm:$0xff]
  %v71 = vld [vmem:[%s1 + $0xb8] sm:$0xff]
  %v72 = vld [vmem:[%s1 + $0xc0] sm:$0xff]
  %v73 = vld [vmem:[%s1 + $0xc8] sm:$0xff]
  %v74 = vld [vmem:[%s1 + $0xd0] sm:$0xff]
  %v75 = vld [vmem:[%s1 + $0xd8] sm:$0xff]
  %v76 = vld [vmem:[%s1 + $0xe0] sm:$0xff]
  %v77 = vld [vmem:[%s1 + $0xe8] sm:$0xff]
  %v78 = vld [vmem:[%s1 + $0xf0] sm:$0xff]
  %v79 = vld [vmem:[%s1 + $0xf8] sm:$0xff]
  %v80 = vld [vmem:[%s1 + $0x100] sm:$0xff]
  %v81 = vld [vmem:[%s1 + $0x108] sm:$0xff]
  %v82 = vld [vmem:[%s1 + $0x110] sm:$0xff]
  %v83 = vld [vmem:[%s1 + $0x118] sm:$0xff]
  %v84 = vld [vmem:[%s1 + $0x120] sm:$0xff]
  %v85 = vld [vmem:[%s1 + $0x128] sm:$0xff]
  %v86 = vld [vmem:[%s1 + $0x130] sm:$0xff]
  %v87 = vld [vmem:[%s1 + $0x138] sm:$0xff]
  %v88 = vld [vmem:[%s1 + $0x140] sm:$0xff]
  %v89 = vld [vmem:[%s1 + $0x148] sm:$0xff]
  %v90 = vld [vmem:[%s1 + $0x150] sm:$0xff]
  %v91 = vld [vmem:[%s1 + $0x158] sm:$0xff]
  %v92 = vld [vmem:[%s1 + $0x160] sm:$0xff]
  %v93 = vld [vmem:[%s1 + $0x168] sm:$0xff]
  %v94 = vld [vmem:[%s1 + $0x170] sm:$0xff]
  %v95 = vld [vmem:[%s1 + $0x178] sm:$0xff]
  %v96 = vld [vmem:[%s1 + $0x180] sm:$0xff]
  %v97 = vld [vmem:[%s1 + $0x188] sm:$0xff]
  %v98 = vld [vmem:[%s1 + $0x190] sm:$0xff]
  %v99 = vld [vmem:[%s1 + $0x198] sm:$0xff]
  %v100 = vld [vmem:[%s1 + $0x1a0] sm:$0xff]
  %v101 = vld [vmem:[%s1 + $0x1a8] sm:$0xff]
  %v102 = vld [vmem:[%s1 + $0x1b0] sm:$0xff]
  %v103 = vld [vmem:[%s1 + $0x1b8] sm:$0xff]
  %v104 = vld [vmem:[%s1 + $0x1c0] sm:$0xff]
  %v105 = vld [vmem:[%s1 + $0x1c8] sm:$0xff]
  %v106 = vld [vmem:[%s1 + $0x1d0] sm:$0xff]
  %v107 = vld [vmem:[%s1 + $0x1d8] sm:$0xff]
  %v108 = vld [vmem:[%s1 + $0x1e0] sm:$0xff]
  %v109 = vld [vmem:[%s1 + $0x1e8] sm:$0xff]
  %v110 = vld [vmem:[%s1 + $0x1f0] sm:$0xff]
  %v111 = vld [vmem:[%s1 + $0x1f8] sm:$0xff]
  %v112 = vld [vmem:[%s1 + $0x200] sm:$0xff]
  %v113 = vld [vmem:[%s1 + $0x208] sm:$0xff]
  %v114 = vld [vmem:[%s1 + $0x210] sm:$0xff]
  %v115 = vld [vmem:[%s1 + $0x218] sm:$0xff]
  %v116 = vld [vmem:[%s1 + $0x220] sm:$0xff]
  %v117 = vld [vmem:[%s1 + $0x228] sm:$0xff]
  %v118 = vld [vmem:[%s1 + $0x230] sm:$0xff]
  %v119 = vld [vmem:[%s1 + $0x238] sm:$0xff]
  %v120 = vld [vmem:[%s1 + $0x240] sm:$0xff]
  %v121 = vld [vmem:[%s1 + $0x248] sm:$0xff]
  %v122 = vld [vmem:[%s1 + $0x250] sm:$0xff]
  %v123 = vld [vmem:[%s1 + $0x258] sm:$0xff]
  %v124 = vld [vmem:[%s1 + $0x260] sm:$0xff]
  %v125 = vld [vmem:[%s1 + $0x268] sm:$0xff]
  %v126 = vld [vmem:[%s1 + $0x270] sm:$0xff]
  %v127 = vld [vmem:[%s1 + $0x278] sm:$0xff]
  %v128 = vld [vmem:[%s1 + $0x280] sm:$0xff]
  %v129 = vld [vmem:[%s1 + $0x288] sm:$0xff]
  %v130 = vld [vmem:[%s1 + $0x290] sm:$0xff]
  %v131 = vld [vmem:[%s1 + $0x298] sm:$0xff]
  %v132 = vld [vmem:[%s1 + $0x2a0] sm:$0xff]
  %v133 = vld [vmem:[%s1 + $0x2a8] sm:$0xff]
  %v134 = vld [vmem:[%s1 + $0x2b0] sm:$0xff]
  %v135 = vld [vmem:[%s1 + $0x2b8] sm:$0xff]
  %v136 = vld [vmem:[%s1 + $0x2c0] sm:$0xff]
  %v137 = vld [vmem:[%s1 + $0x2c8] sm:$0xff]
  %v138 = vld [vmem:[%s1 + $0x2d0] sm:$0xff]
  %v139 = vld [vmem:[%s1 + $0x2d8] sm:$0xff]
  %v140 = vld [vmem:[%s1 + $0x2e0] sm:$0xff]
  %v141 = vld [vmem:[%s1 + $0x2e8] sm:$0xff]
  %v142 = vld [vmem:[%s1 + $0x2f0] sm:$0xff]
  %v143 = vld [vmem:[%s1 + $0x2f8] sm:$0xff]
  %v144 = vld [vmem:[%s1 + $0x300] sm:$0xff]
  %v145 = vld [vmem:[%s1 + $0x308] sm:$0xff]
  %v146 = vld [vmem:[%s1 + $0x310] sm:$0xff]
  %v147 = vld [vmem:[%s1 + $0x318] sm:$0xff]
  %v148 = vld [vmem:[%s1 + $0x320] sm:$0xff]
  %v149 = vld [vmem:[%s1 + $0x328] sm:$0xff]
  %v150 = vld [vmem:[%s1 + $0x330] sm:$0xff]
  %v151 = vld [vmem:[%s1 + $0x338] sm:$0xff]
  %v152 = vld [vmem:[%s1 + $0x340] sm:$0xff]
  %v153 = vld [vmem:[%s1 + $0x348] sm:$0xff]
  %v154 = vld [vmem:[%s1 + $0x350] sm:$0xff]
  %v155 = vld [vmem:[%s1 + $0x358] sm:$0xff]
  %v156 = vld [vmem:[%s1 + $0x360] sm:$0xff]
  %v157 = vld [vmem:[%s1 + $0x368] sm:$0xff]
  %v158 = vld [vmem:[%s1 + $0x370] sm:$0xff]
  %v159 = vld [vmem:[%s1 + $0x378] sm:$0xff]
  %v160 = vld [vmem:[%s1 + $0x380] sm:$0xff]
  %v161 = vld [vmem:[%s1 + $0x388] sm:$0xff]
  %v162 = vld [vmem:[%s1 + $0x390] sm:$0xff]
  %v163 = vld [vmem:[%s1 + $0x398] sm:$0xff]
  %v164 = vld [vmem:[%s1 + $0x3a0] sm:$0xff]
  %v165 = vld [vmem:[%s1 + $0x3a8] sm:$0xff]
  %v166 = vld [vmem:[%s1 + $0x3b0] sm:$0xff]
  %v167 = vld [vmem:[%s1 + $0x3b8] sm:$0xff]
  %v168 = vld [vmem:[%s1 + $0x3c0] sm:$0xff]
  %v169 = vld [vmem:[%s1 + $0x3c8] sm:$0xff]
  %v170 = vld [vmem:[%s1 + $0x3d0] sm:$0xff]
  %v171 = vld [vmem:[%s1 + $0x3d8] sm:$0xff]
  %v172 = vld [vmem:[%s1 + $0x3e0] sm:$0xff]
  %v173 = vld [vmem:[%s1 + $0x3e8] sm:$0xff]
  %v174 = vld [vmem:[%s1 + $0x3f0] sm:$0xff]
  %v175 = vld [vmem:[%s1 + $0x3f8] sm:$0xff]
  %v176 = vld [vmem:[%s1 + $0x400] sm:$0xff]
  %v177 = vld [vmem:[%s1 + $0x408] sm:$0xff]
  %v178 = vld [vmem:[%s1 + $0x410] sm:$0xff]
  %v179 = vld [vmem:[%s1 + $0x418] sm:$0xff]
  %v180 = vld [vmem:[%s1 + $0x420] sm:$0xff]
  %v181 = vld [vmem:[%s1 + $0x428] sm:$0xff]
  %v182 = vld [vmem:[%s1 + $0x430] sm:$0xff]
  %v183 = vld [vmem:[%s1 + $0x438] sm:$0xff]
  %v184 = vld [vmem:[%s1 + $0x440] sm:$0xff]
  %v185 = vld [vmem:[%s1 + $0x448] sm:$0xff]
  %v186 = vld [vmem:[%s1 + $0x450] sm:$0xff]
  %v187 = vld [vmem:[%s1 + $0x458] sm:$0xff]
  %v188 = vld [vmem:[%s1 + $0x460] sm:$0xff]
  %v189 = vld [vmem:[%s1 + $0x468] sm:$0xff]
  %v190 = vld [vmem:[%s1 + $0x470] sm:$0xff]
  %v191 = vld [vmem:[%s1 + $0x478] sm:$0xff]
  %v192 = vld [vmem:[%s1 + $0x480] sm:$0xff]
  %v193 = vld [vmem:[%s1 + $0x488] sm:$0xff]
  %v194 = vld [vmem:[%s1 + $0x490] sm:$0xff]
  %v195 = vld [vmem:[%s1 + $0x498] sm:$0xff]
  %v196 = vld [vmem:[%s1 + $0x4a0] sm:$0xff]
  %v197 = vld [vmem:[%s1 + $0x4a8] sm:$0xff]
  %v198 = vld [vmem:[%s1 + $0x4b0] sm:$0xff]
  %v199 = vld [vmem:[%s1 + $0x4b8] sm:$0xff]
  %v200 = vld [vmem:[%s1 + $0x4c0] sm:$0xff]
  %v201 = vld [vmem:[%s1 + $0x4c8] sm:$0xff]
  %v202 = vld [vmem:[%s1 + $0x4d0] sm:$0xff]
  %v203 = vld [vmem:[%s1 + $0x4d8] sm:$0xff]
  %v204 = vld [vmem:[%s1 + $0x4e0] sm:$0xff]
  %v205 = vld [vmem:[%s1 + $0x4e8] sm:$0xff]
  %v206 = vld [vmem:[%s1 + $0x4f0] sm:$0xff]
  %v207 = vld [vmem:[%s1 + $0x4f8] sm:$0xff]
  %v208 = vld [vmem:[%s1 + $0x500] sm:$0xff]
  %v209 = vld [vmem:[%s1 + $0x508] sm:$0xff]
  %v210 = vld [vmem:[%s1 + $0x510] sm:$0xff]
  %v211 = vld [vmem:[%s1 + $0x518] sm:$0xff]
  %v212 = vld [vmem:[%s1 + $0x520] sm:$0xff]
  %v213 = vld [vmem:[%s1 + $0x528] sm:$0xff]
  %v214 = vld [vmem:[%s1 + $0x530] sm:$0xff]
  %v215 = vld [vmem:[%s1 + $0x538] sm:$0xff]
  %v216 = vld [vmem:[%s1 + $0x540] sm:$0xff]
  %v217 = vld [vmem:[%s1 + $0x548] sm:$0xff]
  %v218 = vld [vmem:[%s1 + $0x550] sm:$0xff]
  %v219 = vld [vmem:[%s1 + $0x558] sm:$0xff]
  %v220 = vld [vmem:[%s1 + $0x560] sm:$0xff]
  %v221 = vld [vmem:[%s1 + $0x568] sm:$0xff]
  %v222 = vld [vmem:[%s1 + $0x570] sm:$0xff]
  %v223 = vld [vmem:[%s1 + $0x578] sm:$0xff]
  %v224 = vld [vmem:[%s1 + $0x580] sm:$0xff]
  %v225 = vld [vmem:[%s1 + $0x588] sm:$0xff]
  %v226 = vld [vmem:[%s1 + $0x590] sm:$0xff]
  %v227 = vld [vmem:[%s1 + $0x598] sm:$0xff]
  %v228 = vld [vmem:[%s1 + $0x5a0] sm:$0xff]
  %v229 = vld [vmem:[%s1 + $0x5a8] sm:$0xff]
  %v230 = vld [vmem:[%s1 + $0x5b0] sm:$0xff]
  %v231 = vld [vmem:[%s1 + $0x5b8] sm:$0xff]
  %v232 = vld [vmem:[%s1 + $0x5c0] sm:$0xff]
  %v233 = vld [vmem:[%s1 + $0x5c8] sm:$0xff]
  %v234 = vld [vmem:[%s1 + $0x5d0] sm:$0xff]
  %v235 = vld [vmem:[%s1 + $0x5d8] sm:$0xff]
  %v236 = vld [vmem:[%s1 + $0x5e0] sm:$0xff]
  %v237 = vld [vmem:[%s1 + $0x5e8] sm:$0xff]
  %v238 = vld [vmem:[%s1 + $0x5f0] sm:$0xff]
  %v239 = vld [vmem:[%s1 + $0x5f8] sm:$0xff]
  %v240 = vld [vmem:[%s1 + $0x600] sm:$0xff]
  %v241 = vld [vmem:[%s1 + $0x608] sm:$0xff]
  %v242 = vld [vmem:[%s1 + $0x610] sm:$0xff]
  %v243 = vld [vmem:[%s1 + $0x618] sm:$0xff]
  %v244 = vld [vmem:[%s1 + $0x620] sm:$0xff]
  %v245 = vld [vmem:[%s1 + $0x628] sm:$0xff]
  %v246 = vld [vmem:[%s1 + $0x630] sm:$0xff]
  %v247 = vld [vmem:[%s1 + $0x638] sm:$0xff]
  %v248 = vld [vmem:[%s1 + $0x640] sm:$0xff]
  %v249 = vld [vmem:[%s1 + $0x648] sm:$0xff]
  %v250 = vld [vmem:[%s1 + $0x650] sm:$0xff]
  %v251 = vld [vmem:[%s1 + $0x658] sm:$0xff]
  %v252 = vld [vmem:[%s1 + $0x660] sm:$0xff]
  %v253 = vld [vmem:[%s1 + $0x668] sm:$0xff]
  %v254 = vld [vmem:[%s1 + $0x670] sm:$0xff]
  %v255 = vld [vmem:[%s1 + $0x678] sm:$0xff]
  %v256 = vld [vmem:[%s1 + $0x680] sm:$0xff]
  %v257 = vld [vmem:[%s1 + $0x688] sm:$0xff]
  %v258 = vld [vmem:[%s1 + $0x690] sm:$0xff]
  %v259 = vld [vmem:[%s1 + $0x698] sm:$0xff]
  %v260 = vld [vmem:[%s1 + $0x6a0] sm:$0xff]
  %v261 = vld [vmem:[%s1 + $0x6a8] sm:$0xff]
  %v262 = vld [vmem:[%s1 + $0x6b0] sm:$0xff]
  %v263 = vld [vmem:[%s1 + $0x6b8] sm:$0xff]
  %v264 = vld [vmem:[%s1 + $0x6c0] sm:$0xff]
  %v265 = vld [vmem:[%s1 + $0x6c8] sm:$0xff]
  %v266 = vld [vmem:[%s1 + $0x6d0] sm:$0xff]
  %v267 = vld [vmem:[%s1 + $0x6d8] sm:$0xff]
  %v268 = vld [vmem:[%s1 + $0x6e0] sm:$0xff]
  %v269 = vld [vmem:[%s1 + $0x6e8] sm:$0xff]
  %v270 = vld [vmem:[%s1 + $0x6f0] sm:$0xff]
  %v271 = vld [vmem:[%s1 + $0x6f8] sm:$0xff]
  %v272 = vld [vmem:[%s1 + $0x700] sm:$0xff]
  %v273 = vld [vmem:[%s1 + $0x708] sm:$0xff]
  %v274 = vld [vmem:[%s1 + $0x710] sm:$0xff]
  %v275 = vld [vmem:[%s1 + $0x718] sm:$0xff]
  %v276 = vld [vmem:[%s1 + $0x720] sm:$0xff]
  %v277 = vld [vmem:[%s1 + $0x728] sm:$0xff]
  %v278 = vld [vmem:[%s1 + $0x730] sm:$0xff]
  %v279 = vld [vmem:[%s1 + $0x738] sm:$0xff]
  %v280 = vld [vmem:[%s1 + $0x740] sm:$0xff]
  %v281 = vld [vmem:[%s1 + $0x748] sm:$0xff]
  %v282 = vld [vmem:[%s1 + $0x750] sm:$0xff]
  %v283 = vld [vmem:[%s1 + $0x758] sm:$0xff]
  %v284 = vld [vmem:[%s1 + $0x760] sm:$0xff]
  %v285 = vld [vmem:[%s1 + $0x768] sm:$0xff]
  %v286 = vld [vmem:[%s1 + $0x770] sm:$0xff]
  %v287 = vld [vmem:[%s1 + $0x778] sm:$0xff]
  %v288 = vld [vmem:[%s1 + $0x780] sm:$0xff]
  %v289 = vld [vmem:[%s1 + $0x788] sm:$0xff]
  %v290 = vld [vmem:[%s1 + $0x790] sm:$0xff]
  %v291 = vld [vmem:[%s1 + $0x798] sm:$0xff]
  %v292 = vld [vmem:[%s1 + $0x7a0] sm:$0xff]
  %v293 = vld [vmem:[%s1 + $0x7a8] sm:$0xff]
  %v294 = vld [vmem:[%s1 + $0x7b0] sm:$0xff]
  %v295 = vld [vmem:[%s1 + $0x7b8] sm:$0xff]
  %v296 = vld [vmem:[%s1 + $0x7c0] sm:$0xff]
  %v297 = vld [vmem:[%s1 + $0x7c8] sm:$0xff]
  %v298 = vld [vmem:[%s1 + $0x7d0] sm:$0xff]
  %v299 = vld [vmem:[%s1 + $0x7d8] sm:$0xff]
  %v300 = vld [vmem:[%s1 + $0x7e0] sm:$0xff]
  %v301 = vld [vmem:[%s1 + $0x7e8] sm:$0xff]
  %v302 = vld [vmem:[%s1 + $0x7f0] sm:$0xff]
  %v303 = vld [vmem:[%s1 + $0x7f8] sm:$0xff]
  %v304 = vld [vmem:[%s1 + $0x800] sm:$0xff]
  %v305 = vld [vmem:[%s1 + $0x808] sm:$0xff]
  %v306 = vld [vmem:[%s1 + $0x810] sm:$0xff]
  %v307 = vld [vmem:[%s1 + $0x818] sm:$0xff]
  %v308 = vld [vmem:[%s1 + $0x820] sm:$0xff]
  %v309 = vld [vmem:[%s1 + $0x828] sm:$0xff]
  %v310 = vld [vmem:[%s1 + $0x830] sm:$0xff]
  %v311 = vld [vmem:[%s1 + $0x838] sm:$0xff]
  %v312 = vld [vmem:[%s1 + $0x840] sm:$0xff]
  %v313 = vld [vmem:[%s1 + $0x848] sm:$0xff]
  %v314 = vld [vmem:[%s1 + $0x850] sm:$0xff]
  %v315 = vld [vmem:[%s1 + $0x858] sm:$0xff]
  %v316 = vld [vmem:[%s1 + $0x860] sm:$0xff]
  %v317 = vld [vmem:[%s1 + $0x868] sm:$0xff]
  %v318 = vld [vmem:[%s1 + $0x870] sm:$0xff]
  %v319 = vld [vmem:[%s1 + $0x878] sm:$0xff]
  %v320 = vld [vmem:[%s1 + $0x880] sm:$0xff]
  %v321 = vld [vmem:[%s1 + $0x888] sm:$0xff]
  %v322 = vld [vmem:[%s1 + $0x890] sm:$0xff]
  %v323 = vld [vmem:[%s1 + $0x898] sm:$0xff]
  %v324 = vld [vmem:[%s1 + $0x8a0] sm:$0xff]
  %v325 = vld [vmem:[%s1 + $0x8a8] sm:$0xff]
  %v326 = vld [vmem:[%s1 + $0x8b0] sm:$0xff]
  %v327 = vld [vmem:[%s1 + $0x8b8] sm:$0xff]
  %v328 = vld [vmem:[%s1 + $0x8c0] sm:$0xff]
  %v329 = vld [vmem:[%s1 + $0x8c8] sm:$0xff]
  %v330 = vld [vmem:[%s1 + $0x8d0] sm:$0xff]
  %v331 = vld [vmem:[%s1 + $0x8d8] sm:$0xff]
  %v332 = vld [vmem:[%s1 + $0x8e0] sm:$0xff]
  %v333 = vld [vmem:[%s1 + $0x8e8] sm:$0xff]
  %v334 = vld [vmem:[%s1 + $0x8f0] sm:$0xff]
  %v335 = vld [vmem:[%s1 + $0x8f8] sm:$0xff]
  %v336 = vld [vmem:[%s1 + $0x900] sm:$0xff]
  %v337 = vld [vmem:[%s1 + $0x908] sm:$0xff]
  %v338 = vld [vmem:[%s1 + $0x910] sm:$0xff]
  %v339 = vld [vmem:[%s1 + $0x918] sm:$0xff]
  %v340 = vld [vmem:[%s1 + $0x920] sm:$0xff]
  %v341 = vld [vmem:[%s1 + $0x928] sm:$0xff]
  %v342 = vld [vmem:[%s1 + $0x930] sm:$0xff]
  %v343 = vld [vmem:[%s1 + $0x938] sm:$0xff]
  %v344 = vld [vmem:[%s1 + $0x940] sm:$0xff]
  %v345 = vld [vmem:[%s1 + $0x948] sm:$0xff]
  %v346 = vld [vmem:[%s1 + $0x950] sm:$0xff]
  %v347 = vld [vmem:[%s1 + $0x958] sm:$0xff]
  %v348 = vld [vmem:[%s1 + $0x960] sm:$0xff]
  %v349 = vld [vmem:[%s1 + $0x968] sm:$0xff]
  %v350 = vld [vmem:[%s1 + $0x970] sm:$0xff]
  %v351 = vld [vmem:[%s1 + $0x978] sm:$0xff]
  %v352 = vld [vmem:[%s1 + $0x980] sm:$0xff]
  %v353 = vld [vmem:[%s1 + $0x988] sm:$0xff]
  %v354 = vld [vmem:[%s1 + $0x990] sm:$0xff]
  %v355 = vld [vmem:[%s1 + $0x998] sm:$0xff]
  %v356 = vld [vmem:[%s1 + $0x9a0] sm:$0xff]
  %v357 = vld [vmem:[%s1 + $0x9a8] sm:$0xff]
  %v358 = vld [vmem:[%s1 + $0x9b0] sm:$0xff]
  %v359 = vld [vmem:[%s1 + $0x9b8] sm:$0xff]
  %v360 = vld [vmem:[%s1 + $0x9c0] sm:$0xff]
  %v361 = vld [vmem:[%s1 + $0x9c8] sm:$0xff]
  %v362 = vld [vmem:[%s1 + $0x9d0] sm:$0xff]
  %v363 = vld [vmem:[%s1 + $0x9d8] sm:$0xff]
  %v364 = vld [vmem:[%s1 + $0x9e0] sm:$0xff]
  %v365 = vld [vmem:[%s1 + $0x9e8] sm:$0xff]
  %v366 = vld [vmem:[%s1 + $0x9f0] sm:$0xff]
  %v367 = vld [vmem:[%s1 + $0x9f8] sm:$0xff]
  %v368 = vld [vmem:[%s1 + $0xa00] sm:$0xff]
  %v369 = vld [vmem:[%s1 + $0xa08] sm:$0xff]
  %v370 = vld [vmem:[%s1 + $0xa10] sm:$0xff]
  %v371 = vld [vmem:[%s1 + $0xa18] sm:$0xff]
  %v372 = vld [vmem:[%s1 + $0xa20] sm:$0xff]
  %v373 = vld [vmem:[%s1 + $0xa28] sm:$0xff]
  %v374 = vld [vmem:[%s1 + $0xa30] sm:$0xff]
  %v375 = vld [vmem:[%s1 + $0xa38] sm:$0xff]
  %v376 = vld [vmem:[%s1 + $0xa40] sm:$0xff]
  %v377 = vld [vmem:[%s1 + $0xa48] sm:$0xff]
  %v378 = vld [vmem:[%s1 + $0xa50] sm:$0xff]
  %v379 = vld [vmem:[%s1 + $0xa58] sm:$0xff]
  %v380 = vld [vmem:[%s1 + $0xa60] sm:$0xff]
  %v381 = vld [vmem:[%s1 + $0xa68] sm:$0xff]
  %v382 = vld [vmem:[%s1 + $0xa70] sm:$0xff]
  %v383 = vld [vmem:[%s1 + $0xa78] sm:$0xff]
  %v384 = vld [vmem:[%s1 + $0xa80] sm:$0xff]
  %v385 = vld [vmem:[%s1 + $0xa88] sm:$0xff]
  %v386 = vld [vmem:[%s1 + $0xa90] sm:$0xff]
  %v387 = vld [vmem:[%s1 + $0xa98] sm:$0xff]
  %v388 = vld [vmem:[%s1 + $0xaa0] sm:$0xff]
  %v389 = vld [vmem:[%s1 + $0xaa8] sm:$0xff]
  %v390 = vld [vmem:[%s1 + $0xab0] sm:$0xff]
  %v391 = vld [vmem:[%s1 + $0xab8] sm:$0xff]
  %v392 = vld [vmem:[%s1 + $0xac0] sm:$0xff]
  %v393 = vld [vmem:[%s1 + $0xac8] sm:$0xff]
  %v394 = vld [vmem:[%s1 + $0xad0] sm:$0xff]
  %v395 = vld [vmem:[%s1 + $0xad8] sm:$0xff]
  %v396 = vld [vmem:[%s1 + $0xae0] sm:$0xff]
  %v397 = vld [vmem:[%s1 + $0xae8] sm:$0xff]
  %v398 = vld [vmem:[%s1 + $0xaf0] sm:$0xff]
  %v399 = vld [vmem:[%s1 + $0xaf8] sm:$0xff]
  %v400 = vld [vmem:[%s1 + $0xb00] sm:$0xff]
  %v401 = vld [vmem:[%s1 + $0xb08] sm:$0xff]
  %v402 = vld [vmem:[%s1 + $0xb10] sm:$0xff]
  %v403 = vld [vmem:[%s1 + $0xb18] sm:$0xff]
  %v404 = vld [vmem:[%s1 + $0xb20] sm:$0xff]
  %v405 = vld [vmem:[%s1 + $0xb28] sm:$0xff]
  %v406 = vld [vmem:[%s1 + $0xb30] sm:$0xff]
  %v407 = vld [vmem:[%s1 + $0xb38] sm:$0xff]
  %v408 = vld [vmem:[%s1 + $0xb40] sm:$0xff]
  %v409 = vld [vmem:[%s1 + $0xb48] sm:$0xff]
  %v410 = vld [vmem:[%s1 + $0xb50] sm:$0xff]
  %v411 = vld [vmem:[%s1 + $0xb58] sm:$0xff]
  %v412 = vld [vmem:[%s1 + $0xb60] sm:$0xff]
  %v413 = vld [vmem:[%s1 + $0xb68] sm:$0xff]
  %v414 = vld [vmem:[%s1 + $0xb70] sm:$0xff]
  %v415 = vld [vmem:[%s1 + $0xb78] sm:$0xff]
  %v416 = vld [vmem:[%s1 + $0xb80] sm:$0xff]
  %v417 = vld [vmem:[%s1 + $0xb88] sm:$0xff]
  %v418 = vld [vmem:[%s1 + $0xb90] sm:$0xff]
  %v419 = vld [vmem:[%s1 + $0xb98] sm:$0xff]
  %v420 = vld [vmem:[%s1 + $0xba0] sm:$0xff]
  %v421 = vld [vmem:[%s1 + $0xba8] sm:$0xff]
  %v422 = vld [vmem:[%s1 + $0xbb0] sm:$0xff]
  %v423 = vld [vmem:[%s1 + $0xbb8] sm:$0xff]
  %v424 = vld [vmem:[%s1 + $0xbc0] sm:$0xff]
  %v425 = vld [vmem:[%s1 + $0xbc8] sm:$0xff]
  %v426 = vld [vmem:[%s1 + $0xbd0] sm:$0xff]
  %v427 = vld [vmem:[%s1 + $0xbd8] sm:$0xff]
  %v428 = vld [vmem:[%s1 + $0xbe0] sm:$0xff]
  %v429 = vld [vmem:[%s1 + $0xbe8] sm:$0xff]
  %v430 = vld [vmem:[%s1 + $0xbf0] sm:$0xff]
  %v431 = vld [vmem:[%s1 + $0xbf8] sm:$0xff]
  %v432 = vld [vmem:[%s1 + $0xc00] sm:$0xff]
  %v433 = vld [vmem:[%s1 + $0xc08] sm:$0xff]
  %v434 = vld [vmem:[%s1 + $0xc10] sm:$0xff]
  %v435 = vld [vmem:[%s1 + $0xc18] sm:$0xff]
  %v436 = vld [vmem:[%s1 + $0xc20] sm:$0xff]
  %v437 = vld [vmem:[%s1 + $0xc28] sm:$0xff]
  %v438 = vld [vmem:[%s1 + $0xc30] sm:$0xff]
  %v439 = vld [vmem:[%s1 + $0xc38] sm:$0xff]
  %v440 = vld [vmem:[%s1 + $0xc40] sm:$0xff]
  %v441 = vld [vmem:[%s1 + $0xc48] sm:$0xff]
  %v442 = vld [vmem:[%s1 + $0xc50] sm:$0xff]
  %v443 = vld [vmem:[%s1 + $0xc58] sm:$0xff]
  %v444 = vld [vmem:[%s1 + $0xc60] sm:$0xff]
  %v445 = vld [vmem:[%s1 + $0xc68] sm:$0xff]
  %v446 = vld [vmem:[%s1 + $0xc70] sm:$0xff]
  %v447 = vld [vmem:[%s1 + $0xc78] sm:$0xff]
  %v448 = vld [vmem:[%s1 + $0xc80] sm:$0xff]
  %v449 = vld [vmem:[%s1 + $0xc88] sm:$0xff]
  %v450 = vld [vmem:[%s1 + $0xc90] sm:$0xff]
  %v451 = vld [vmem:[%s1 + $0xc98] sm:$0xff]
  %v452 = vld [vmem:[%s1 + $0xca0] sm:$0xff]
  %v453 = vld [vmem:[%s1 + $0xca8] sm:$0xff]
  %v454 = vld [vmem:[%s1 + $0xcb0] sm:$0xff]
  %v455 = vld [vmem:[%s1 + $0xcb8] sm:$0xff]
  %v456 = vld [vmem:[%s1 + $0xcc0] sm:$0xff]
  %v457 = vld [vmem:[%s1 + $0xcc8] sm:$0xff]
  %v458 = vld [vmem:[%s1 + $0xcd0] sm:$0xff]
  %v459 = vld [vmem:[%s1 + $0xcd8] sm:$0xff]
  %v460 = vld [vmem:[%s1 + $0xce0] sm:$0xff]
  %v461 = vld [vmem:[%s1 + $0xce8] sm:$0xff]
  %v462 = vld [vmem:[%s1 + $0xcf0] sm:$0xff]
  %v463 = vld [vmem:[%s1 + $0xcf8] sm:$0xff]
  %v464 = vld [vmem:[%s1 + $0xd00] sm:$0xff]
  %v465 = vld [vmem:[%s1 + $0xd08] sm:$0xff]
  %v466 = vld [vmem:[%s1 + $0xd10] sm:$0xff]
  %v467 = vld [vmem:[%s1 + $0xd18] sm:$0xff]
  %v468 = vld [vmem:[%s1 + $0xd20] sm:$0xff]
  %v469 = vld [vmem:[%s1 + $0xd28] sm:$0xff]
  %v470 = vld [vmem:[%s1 + $0xd30] sm:$0xff]
  %v471 = vld [vmem:[%s1 + $0xd38] sm:$0xff]
  %v472 = vld [vmem:[%s1 + $0xd40] sm:$0xff]
  %v473 = vld [vmem:[%s1 + $0xd48] sm:$0xff]
  %v474 = vld [vmem:[%s1 + $0xd50] sm:$0xff]
  %v475 = vld [vmem:[%s1 + $0xd58] sm:$0xff]
  %v476 = vld [vmem:[%s1 + $0xd60] sm:$0xff]
  %v477 = vld [vmem:[%s1 + $0xd68] sm:$0xff]
  %v478 = vld [vmem:[%s1 + $0xd70] sm:$0xff]
  %v479 = vld [vmem:[%s1 + $0xd78] sm:$0xff]
  %v480 = vld [vmem:[%s1 + $0xd80] sm:$0xff]
  %v481 = vld [vmem:[%s1 + $0xd88] sm:$0xff]
  %v482 = vld [vmem:[%s1 + $0xd90] sm:$0xff]
  %v483 = vld [vmem:[%s1 + $0xd98] sm:$0xff]
  %v484 = vld [vmem:[%s1 + $0xda0] sm:$0xff]
  %v485 = vld [vmem:[%s1 + $0xda8] sm:$0xff]
  %v486 = vld [vmem:[%s1 + $0xdb0] sm:$0xff]
  %v487 = vld [vmem:[%s1 + $0xdb8] sm:$0xff]
  %v488 = vld [vmem:[%s1 + $0xdc0] sm:$0xff]
  %v489 = vld [vmem:[%s1 + $0xdc8] sm:$0xff]
  %v490 = vld [vmem:[%s1 + $0xdd0] sm:$0xff]
  %v491 = vld [vmem:[%s1 + $0xdd8] sm:$0xff]
  %v492 = vld [vmem:[%s1 + $0xde0] sm:$0xff]
  %v493 = vld [vmem:[%s1 + $0xde8] sm:$0xff]
  %v494 = vld [vmem:[%s1 + $0xdf0] sm:$0xff]
  %v495 = vld [vmem:[%s1 + $0xdf8] sm:$0xff]
  %v496 = vld [vmem:[%s1 + $0xe00] sm:$0xff]
  %v497 = vld [vmem:[%s1 + $0xe08] sm:$0xff]
  %v498 = vld [vmem:[%s1 + $0xe10] sm:$0xff]
  %v499 = vld [vmem:[%s1 + $0xe18] sm:$0xff]
  %v500 = vld [vmem:[%s1 + $0xe20] sm:$0xff]
  %v501 = vld [vmem:[%s1 + $0xe28] sm:$0xff]
  %v502 = vld [vmem:[%s1 + $0xe30] sm:$0xff]
  %v503 = vld [vmem:[%s1 + $0xe38] sm:$0xff]
  %v504 = vld [vmem:[%s1 + $0xe40] sm:$0xff]
  %v505 = vld [vmem:[%s1 + $0xe48] sm:$0xff]
  %v506 = vld [vmem:[%s1 + $0xe50] sm:$0xff]
  %v507 = vld [vmem:[%s1 + $0xe58] sm:$0xff]
  %v508 = vld [vmem:[%s1 + $0xe60] sm:$0xff]
  %v509 = vld [vmem:[%s1 + $0xe68] sm:$0xff]
  %v510 = vld [vmem:[%s1 + $0xe70] sm:$0xff]
  %v511 = vld [vmem:[%s1 + $0xe78] sm:$0xff]
  %v512 = vld [vmem:[%s1 + $0xe80] sm:$0xff]
  %v513 = vld [vmem:[%s1 + $0xe88] sm:$0xff]
  %v514 = vld [vmem:[%s1 + $0xe90] sm:$0xff]
  %v515 = vld [vmem:[%s1 + $0xe98] sm:$0xff]
  %v516 = vld [vmem:[%s1 + $0xea0] sm:$0xff]
  %v517 = vld [vmem:[%s1 + $0xea8] sm:$0xff]
  %v518 = vld [vmem:[%s1 + $0xeb0] sm:$0xff]
  %v519 = vld [vmem:[%s1 + $0xeb8] sm:$0xff]
  %v520 = vld [vmem:[%s1 + $0xec0] sm:$0xff]
  %v521 = vld [vmem:[%s1 + $0xec8] sm:$0xff]
  %v522 = vld [vmem:[%s1 + $0xed0] sm:$0xff]
  %v523 = vld [vmem:[%s1 + $0xed8] sm:$0xff]
  %v524 = vld [vmem:[%s1 + $0xee0] sm:$0xff]
  %v525 = vld [vmem:[%s1 + $0xee8] sm:$0xff]
  %v526 = vld [vmem:[%s1 + $0xef0] sm:$0xff]
  %v527 = vld [vmem:[%s1 + $0xef8] sm:$0xff]
  %v528 = vld [vmem:[%s1 + $0xf00] sm:$0xff]
  %v529 = vld [vmem:[%s1 + $0xf08] sm:$0xff]
  %v530 = vld [vmem:[%s1 + $0xf10] sm:$0xff]
  %v531 = vld [vmem:[%s1 + $0xf18] sm:$0xff]
  %v532 = vld [vmem:[%s1 + $0xf20] sm:$0xff]
  %v533 = vld [vmem:[%s1 + $0xf28] sm:$0xff]
  %v534 = vld [vmem:[%s1 + $0xf30] sm:$0xff]
  %v535 = vld [vmem:[%s1 + $0xf38] sm:$0xff]
  %v536 = vld [vmem:[%s1 + $0xf40] sm:$0xff]
  %v537 = vld [vmem:[%s1 + $0xf48] sm:$0xff]
  %v538 = vld [vmem:[%s1 + $0xf50] sm:$0xff]
  %v539 = vld [vmem:[%s1 + $0xf58] sm:$0xff]
  %v540 = vld [vmem:[%s1 + $0xf60] sm:$0xff]
  %v541 = vld [vmem:[%s1 + $0xf68] sm:$0xff]
  %v542 = vld [vmem:[%s1 + $0xf70] sm:$0xff]
  %v543 = vld [vmem:[%s1 + $0xf78] sm:$0xff]
  %v544 = vld [vmem:[%s1 + $0xf80] sm:$0xff]
  %v545 = vld [vmem:[%s1 + $0xf88] sm:$0xff]
  %v546 = vld [vmem:[%s1 + $0xf90] sm:$0xff]
  %v547 = vld [vmem:[%s1 + $0xf98] sm:$0xff]
  %v548 = vld [vmem:[%s1 + $0xfa0] sm:$0xff]
  %v549 = vld [vmem:[%s1 + $0xfa8] sm:$0xff]
  %v550 = vld [vmem:[%s1 + $0xfb0] sm:$0xff]
  %v551 = vld [vmem:[%s1 + $0xfb8] sm:$0xff]
  %v552 = vld [vmem:[%s1 + $0xfc0] sm:$0xff]
  %v553 = vld [vmem:[%s1 + $0xfc8] sm:$0xff]
  %v554 = vld [vmem:[%s1 + $0xfd0] sm:$0xff]
  %v555 = vld [vmem:[%s1 + $0xfd8] sm:$0xff]
  %v556 = vld [vmem:[%s1 + $0xfe0] sm:$0xff]
  %v557 = vld [vmem:[%s1 + $0xfe8] sm:$0xff]
  %v558 = vld [vmem:[%s1 + $0xff0] sm:$0xff]
  %v559 = vld [vmem:[%s1 + $0xff8] sm:$0xff]
  %v560 = vld [vmem:[%s1 + $0x1000] sm:$0xff]
  %v561 = vld [vmem:[%s1 + $0x1008] sm:$0xff]
  %v562 = vld [vmem:[%s1 + $0x1010] sm:$0xff]
  %v563 = vld [vmem:[%s1 + $0x1018] sm:$0xff]
  %v564 = vld [vmem:[%s1 + $0x1020] sm:$0xff]
  %v565 = vld [vmem:[%s1 + $0x1028] sm:$0xff]
  %v566 = vld [vmem:[%s1 + $0x1030] sm:$0xff]
  %v567 = vld [vmem:[%s1 + $0x1038] sm:$0xff]
  %v568 = vld [vmem:[%s1 + $0x1040] sm:$0xff]
  %v569 = vld [vmem:[%s1 + $0x1048] sm:$0xff]
  %v570 = vld [vmem:[%s1 + $0x1050] sm:$0xff]
  %v571 = vld [vmem:[%s1 + $0x1058] sm:$0xff]
  %v572 = vld [vmem:[%s1 + $0x1060] sm:$0xff]
  %v573 = vld [vmem:[%s1 + $0x1068] sm:$0xff]
  %v574 = vld [vmem:[%s1 + $0x1070] sm:$0xff]
  %v575 = vld [vmem:[%s1 + $0x1078] sm:$0xff]
  %v576 = vld [vmem:[%s1 + $0x1080] sm:$0xff]
  %v577 = vld [vmem:[%s1 + $0x1088] sm:$0xff]
  %v578 = vld [vmem:[%s1 + $0x1090] sm:$0xff]
  %v579 = vld [vmem:[%s1 + $0x1098] sm:$0xff]
  %v580 = vld [vmem:[%s1 + $0x10a0] sm:$0xff]
  %v581 = vld [vmem:[%s1 + $0x10a8] sm:$0xff]
  %v582 = vld [vmem:[%s1 + $0x10b0] sm:$0xff]
  %v583 = vld [vmem:[%s1 + $0x10b8] sm:$0xff]
  %v584 = vld [vmem:[%s1 + $0x10c0] sm:$0xff]
  %v585 = vld [vmem:[%s1 + $0x10c8] sm:$0xff]
  %v586 = vld [vmem:[%s1 + $0x10d0] sm:$0xff]
  %v587 = vld [vmem:[%s1 + $0x10d8] sm:$0xff]
  %v588 = vld [vmem:[%s1 + $0x10e0] sm:$0xff]
  %v589 = vld [vmem:[%s1 + $0x10e8] sm:$0xff]
  %v590 = vld [vmem:[%s1 + $0x10f0] sm:$0xff]
  %v591 = vld [vmem:[%s1 + $0x10f8] sm:$0xff]
  %v592 = vld [vmem:[%s1 + $0x1100] sm:$0xff]
  %v593 = vld [vmem:[%s1 + $0x1108] sm:$0xff]
  %v594 = vld [vmem:[%s1 + $0x1110] sm:$0xff]
  %v595 = vld [vmem:[%s1 + $0x1118] sm:$0xff]
  %v596 = vld [vmem:[%s1 + $0x1120] sm:$0xff]
  %v597 = vld [vmem:[%s1 + $0x1128] sm:$0xff]
  %v598 = vld [vmem:[%s1 + $0x1130] sm:$0xff]
  %v599 = vld [vmem:[%s1 + $0x1138] sm:$0xff]
  %v600 = vld [vmem:[%s1 + $0x1140] sm:$0xff]
  %v601 = vld [vmem:[%s1 + $0x1148] sm:$0xff]
  %v602 = vld [vmem:[%s1 + $0x1150] sm:$0xff]
  %v603 = vld [vmem:[%s1 + $0x1158] sm:$0xff]
  %v604 = vld [vmem:[%s1 + $0x1160] sm:$0xff]
  %v605 = vld [vmem:[%s1 + $0x1168] sm:$0xff]
  %v606 = vld [vmem:[%s1 + $0x1170] sm:$0xff]
  %v607 = vld [vmem:[%s1 + $0x1178] sm:$0xff]
  %v608 = vld [vmem:[%s1 + $0x1180] sm:$0xff]
  %v609 = vld [vmem:[%s1 + $0x1188] sm:$0xff]
  %v610 = vld [vmem:[%s1 + $0x1190] sm:$0xff]
  %v611 = vld [vmem:[%s1 + $0x1198] sm:$0xff]
  %v612 = vld [vmem:[%s1 + $0x11a0] sm:$0xff]
  %v613 = vld [vmem:[%s1 + $0x11a8] sm:$0xff]
  %v614 = vld [vmem:[%s1 + $0x11b0] sm:$0xff]
  %v615 = vld [vmem:[%s1 + $0x11b8] sm:$0xff]
  %v616 = vld [vmem:[%s1 + $0x11c0] sm:$0xff]
  %v617 = vld [vmem:[%s1 + $0x11c8] sm:$0xff]
  %v618 = vld [vmem:[%s1 + $0x11d0] sm:$0xff]
  %v619 = vld [vmem:[%s1 + $0x11d8] sm:$0xff]
  %v620 = vld [vmem:[%s1 + $0x11e0] sm:$0xff]
  %v621 = vld [vmem:[%s1 + $0x11e8] sm:$0xff]
  %v622 = vld [vmem:[%s1 + $0x11f0] sm:$0xff]
  %v623 = vld [vmem:[%s1 + $0x11f8] sm:$0xff]
  %v624 = vld [vmem:[%s1 + $0x1200] sm:$0xff]
  %v625 = vld [vmem:[%s1 + $0x1208] sm:$0xff]
  %v626 = vld [vmem:[%s1 + $0x1210] sm:$0xff]
  %v627 = vld [vmem:[%s1 + $0x1218] sm:$0xff]
  %v628 = vld [vmem:[%s1 + $0x1220] sm:$0xff]
  %v629 = vld [vmem:[%s1 + $0x1228] sm:$0xff]
  %v630 = vld [vmem:[%s1 + $0x1230] sm:$0xff]
  %v631 = vld [vmem:[%s1 + $0x1238] sm:$0xff]
  %v632 = vld [vmem:[%s1 + $0x1240] sm:$0xff]
  %v633 = vld [vmem:[%s1 + $0x1248] sm:$0xff]
  %v634 = vld [vmem:[%s1 + $0x1250] sm:$0xff]
  %v635 = vld [vmem:[%s1 + $0x1258] sm:$0xff]
  %v636 = vld [vmem:[%s1 + $0x1260] sm:$0xff]
  %v637 = vld [vmem:[%s1 + $0x1268] sm:$0xff]
  %v638 = vld [vmem:[%s1 + $0x1270] sm:$0xff]
  %v639 = vld [vmem:[%s1 + $0x1278] sm:$0xff]
  %v640 = vld [vmem:[%s1 + $0x1280] sm:$0xff]
  %v641 = vld [vmem:[%s1 + $0x1288] sm:$0xff]
  %v642 = vld [vmem:[%s1 + $0x1290] sm:$0xff]
  %v643 = vld [vmem:[%s1 + $0x1298] sm:$0xff]
  %v644 = vld [vmem:[%s1 + $0x12a0] sm:$0xff]
  %v645 = vld [vmem:[%s1 + $0x12a8] sm:$0xff]
  %v646 = vld [vmem:[%s1 + $0x12b0] sm:$0xff]
  %v647 = vld [vmem:[%s1 + $0x12b8] sm:$0xff]
  %v648 = vld [vmem:[%s1 + $0x12c0] sm:$0xff]
  %v649 = vld [vmem:[%s1 + $0x12c8] sm:$0xff]
  %v650 = vld [vmem:[%s1 + $0x12d0] sm:$0xff]
  %v651 = vld [vmem:[%s1 + $0x12d8] sm:$0xff]
  %v652 = vld [vmem:[%s1 + $0x12e0] sm:$0xff]
  %v653 = vld [vmem:[%s1 + $0x12e8] sm:$0xff]
  %v654 = vld [vmem:[%s1 + $0x12f0] sm:$0xff]
  %v655 = vld [vmem:[%s1 + $0x12f8] sm:$0xff]
  %v656 = vld [vmem:[%s1 + $0x1300] sm:$0xff]
  %v657 = vld [vmem:[%s1 + $0x1308] sm:$0xff]
  %v658 = vld [vmem:[%s1 + $0x1310] sm:$0xff]
  %v659 = vld [vmem:[%s1 + $0x1318] sm:$0xff]
  %v660 = vld [vmem:[%s1 + $0x1320] sm:$0xff]
  %v661 = vld [vmem:[%s1 + $0x1328] sm:$0xff]
  %v662 = vld [vmem:[%s1 + $0x1330] sm:$0xff]
  %v663 = vld [vmem:[%s1 + $0x1338] sm:$0xff]
  %v664 = vld [vmem:[%s1 + $0x1340] sm:$0xff]
  %v665 = vld [vmem:[%s1 + $0x1348] sm:$0xff]
  %v666 = vld [vmem:[%s1 + $0x1350] sm:$0xff]
  %v667 = vld [vmem:[%s1 + $0x1358] sm:$0xff]
  %v668 = vld [vmem:[%s1 + $0x1360] sm:$0xff]
  %v669 = vld [vmem:[%s1 + $0x1368] sm:$0xff]
  %v670 = vld [vmem:[%s1 + $0x1370] sm:$0xff]
  %v671 = vld [vmem:[%s1 + $0x1378] sm:$0xff]
  %v672 = vld [vmem:[%s1 + $0x1380] sm:$0xff]
  %v673 = vld [vmem:[%s1 + $0x1388] sm:$0xff]
  %v674 = vld [vmem:[%s1 + $0x1390] sm:$0xff]
  %v675 = vld [vmem:[%s1 + $0x1398] sm:$0xff]
  %v676 = vld [vmem:[%s1 + $0x13a0] sm:$0xff]
  %v677 = vld [vmem:[%s1 + $0x13a8] sm:$0xff]
  %v678 = vld [vmem:[%s1 + $0x13b0] sm:$0xff]
  %v679 = vld [vmem:[%s1 + $0x13b8] sm:$0xff]
  %v680 = vld [vmem:[%s1 + $0x13c0] sm:$0xff]
  %v681 = vld [vmem:[%s1 + $0x13c8] sm:$0xff]
  %v682 = vld [vmem:[%s1 + $0x13d0] sm:$0xff]
  %v683 = vld [vmem:[%s1 + $0x13d8] sm:$0xff]
  %v684 = vld [vmem:[%s1 + $0x13e0] sm:$0xff]
  %v685 = vld [vmem:[%s1 + $0x13e8] sm:$0xff]
  %v686 = vld [vmem:[%s1 + $0x13f0] sm:$0xff]
  %v687 = vld [vmem:[%s1 + $0x13f8] sm:$0xff]
  %v688 = vld [vmem:[%s1 + $0x1400] sm:$0xff]
  %v689 = vld [vmem:[%s1 + $0x1408] sm:$0xff]
  %v690 = vld [vmem:[%s1 + $0x1410] sm:$0xff]
  %v691 = vld [vmem:[%s1 + $0x1418] sm:$0xff]
  %v692 = vld [vmem:[%s1 + $0x1420] sm:$0xff]
  %v693 = vld [vmem:[%s1 + $0x1428] sm:$0xff]
  %v694 = vld [vmem:[%s1 + $0x1430] sm:$0xff]
  %v695 = vld [vmem:[%s1 + $0x1438] sm:$0xff]
  %v696 = vld [vmem:[%s1 + $0x1440] sm:$0xff]
  %v697 = vld [vmem:[%s1 + $0x1448] sm:$0xff]
  %v698 = vld [vmem:[%s1 + $0x1450] sm:$0xff]
  %v699 = vld [vmem:[%s1 + $0x1458] sm:$0xff]
  %v700 = vld [vmem:[%s1 + $0x1460] sm:$0xff]
  %v701 = vld [vmem:[%s1 + $0x1468] sm:$0xff]
  %v702 = vld [vmem:[%s1 + $0x1470] sm:$0xff]
  %v703 = vld [vmem:[%s1 + $0x1478] sm:$0xff]
  %v704 = vld [vmem:[%s1 + $0x1480] sm:$0xff]
  %v705 = vld [vmem:[%s1 + $0x1488] sm:$0xff]
  %v706 = vld [vmem:[%s1 + $0x1490] sm:$0xff]
  %v707 = vld [vmem:[%s1 + $0x1498] sm:$0xff]
  %v708 = vld [vmem:[%s1 + $0x14a0] sm:$0xff]
  %v709 = vld [vmem:[%s1 + $0x14a8] sm:$0xff]
  %v710 = vld [vmem:[%s1 + $0x14b0] sm:$0xff]
  %v711 = vld [vmem:[%s1 + $0x14b8] sm:$0xff]
  %v712 = vld [vmem:[%s1 + $0x14c0] sm:$0xff]
  %v713 = vld [vmem:[%s1 + $0x14c8] sm:$0xff]
  %v714 = vld [vmem:[%s1 + $0x14d0] sm:$0xff]
  %v715 = vld [vmem:[%s1 + $0x14d8] sm:$0xff]
  %v716 = vld [vmem:[%s1 + $0x14e0] sm:$0xff]
  %v717 = vld [vmem:[%s1 + $0x14e8] sm:$0xff]
  %v718 = vld [vmem:[%s1 + $0x14f0] sm:$0xff]
  %v719 = vld [vmem:[%s1 + $0x14f8] sm:$0xff]
  %v720 = vld [vmem:[%s1 + $0x1500] sm:$0xff]
  %v721 = vld [vmem:[%s1 + $0x1508] sm:$0xff]
  %v722 = vld [vmem:[%s1 + $0x1510] sm:$0xff]
  %v723 = vld [vmem:[%s1 + $0x1518] sm:$0xff]
  %v724 = vld [vmem:[%s1 + $0x1520] sm:$0xff]
  %v725 = vld [vmem:[%s1 + $0x1528] sm:$0xff]
  %v726 = vld [vmem:[%s1 + $0x1530] sm:$0xff]
  %v727 = vld [vmem:[%s1 + $0x1538] sm:$0xff]
  %v728 = vld [vmem:[%s1 + $0x1540] sm:$0xff]
  %v729 = vld [vmem:[%s1 + $0x1548] sm:$0xff]
  %v730 = vld [vmem:[%s1 + $0x1550] sm:$0xff]
  %v731 = vld [vmem:[%s1 + $0x1558] sm:$0xff]
  %v732 = vld [vmem:[%s1 + $0x1560] sm:$0xff]
  %v733 = vld [vmem:[%s1 + $0x1568] sm:$0xff]
  %v734 = vld [vmem:[%s1 + $0x1570] sm:$0xff]
  %v735 = vld [vmem:[%s1 + $0x1578] sm:$0xff]
  %v736 = vld [vmem:[%s1 + $0x1580] sm:$0xff]
  %v737 = vld [vmem:[%s1 + $0x1588] sm:$0xff]
  %v738 = vld [vmem:[%s1 + $0x1590] sm:$0xff]
  %v739 = vld [vmem:[%s1 + $0x1598] sm:$0xff]
  %v740 = vld [vmem:[%s1 + $0x15a0] sm:$0xff]
  %v741 = vld [vmem:[%s1 + $0x15a8] sm:$0xff]
  %v742 = vld [vmem:[%s1 + $0x15b0] sm:$0xff]
  %v743 = vld [vmem:[%s1 + $0x15b8] sm:$0xff]
  %v744 = vld [vmem:[%s1 + $0x15c0] sm:$0xff]
  %v745 = vld [vmem:[%s1 + $0x15c8] sm:$0xff]
  %v746 = vld [vmem:[%s1 + $0x15d0] sm:$0xff]
  %v747 = vld [vmem:[%s1 + $0x15d8] sm:$0xff]
  %v748 = vld [vmem:[%s1 + $0x15e0] sm:$0xff]
  %v749 = vld [vmem:[%s1 + $0x15e8] sm:$0xff]
  %v750 = vld [vmem:[%s1 + $0x15f0] sm:$0xff]
  %v751 = vld [vmem:[%s1 + $0x15f8] sm:$0xff]
  %v752 = vld [vmem:[%s1 + $0x1600] sm:$0xff]
  %v753 = vld [vmem:[%s1 + $0x1608] sm:$0xff]
  %v754 = vld [vmem:[%s1 + $0x1610] sm:$0xff]
  %v755 = vld [vmem:[%s1 + $0x1618] sm:$0xff]
  %v756 = vld [vmem:[%s1 + $0x1620] sm:$0xff]
  %v757 = vld [vmem:[%s1 + $0x1628] sm:$0xff]
  %v758 = vld [vmem:[%s1 + $0x1630] sm:$0xff]
  %v759 = vld [vmem:[%s1 + $0x1638] sm:$0xff]
  %v760 = vld [vmem:[%s1 + $0x1640] sm:$0xff]
  %v761 = vld [vmem:[%s1 + $0x1648] sm:$0xff]
  %v762 = vld [vmem:[%s1 + $0x1650] sm:$0xff]
  %v763 = vld [vmem:[%s1 + $0x1658] sm:$0xff]
  %v764 = vld [vmem:[%s1 + $0x1660] sm:$0xff]
  %v765 = vld [vmem:[%s1 + $0x1668] sm:$0xff]
  %v766 = vld [vmem:[%s1 + $0x1670] sm:$0xff]
  %v767 = vld [vmem:[%s1 + $0x1678] sm:$0xff]
  %v768 = vld [vmem:[%s1 + $0x1680] sm:$0xff]
  %v769 = vld [vmem:[%s1 + $0x1688] sm:$0xff]
  %v770 = vld [vmem:[%s1 + $0x1690] sm:$0xff]
  %v771 = vld [vmem:[%s1 + $0x1698] sm:$0xff]
  %v772 = vld [vmem:[%s1 + $0x16a0] sm:$0xff]
  %v773 = vld [vmem:[%s1 + $0x16a8] sm:$0xff]
  %v774 = vld [vmem:[%s1 + $0x16b0] sm:$0xff]
  %v775 = vld [vmem:[%s1 + $0x16b8] sm:$0xff]
  %v776 = vld [vmem:[%s1 + $0x16c0] sm:$0xff]
  %v777 = vld [vmem:[%s1 + $0x16c8] sm:$0xff]
  %v778 = vld [vmem:[%s1 + $0x16d0] sm:$0xff]
  %v779 = vld [vmem:[%s1 + $0x16d8] sm:$0xff]
  %v780 = vld [vmem:[%s1 + $0x16e0] sm:$0xff]
  %v781 = vld [vmem:[%s1 + $0x16e8] sm:$0xff]
  %v782 = vld [vmem:[%s1 + $0x16f0] sm:$0xff]
  %v783 = vld [vmem:[%s1 + $0x16f8] sm:$0xff]
  %v784 = vld [vmem:[%s1 + $0x1700] sm:$0xff]
  %v785 = vld [vmem:[%s1 + $0x1708] sm:$0xff]
  %v786 = vld [vmem:[%s1 + $0x1710] sm:$0xff]
  %v787 = vld [vmem:[%s1 + $0x1718] sm:$0xff]
  %v788 = vld [vmem:[%s1 + $0x1720] sm:$0xff]
  %v789 = vld [vmem:[%s1 + $0x1728] sm:$0xff]
  %v790 = vld [vmem:[%s1 + $0x1730] sm:$0xff]
  %v791 = vld [vmem:[%s1 + $0x1738] sm:$0xff]
  %v792 = vld [vmem:[%s1 + $0x1740] sm:$0xff]
  %v793 = vld [vmem:[%s1 + $0x1748] sm:$0xff]
  %v794 = vld [vmem:[%s1 + $0x1750] sm:$0xff]
  %v795 = vld [vmem:[%s1 + $0x1758] sm:$0xff]
  %v796 = vld [vmem:[%s1 + $0x1760] sm:$0xff]
  %v797 = vld [vmem:[%s1 + $0x1768] sm:$0xff]
  %v798 = vld [vmem:[%s1 + $0x1770] sm:$0xff]
  %v799 = vld [vmem:[%s1 + $0x1778] sm:$0xff]
  %v800 = vld [vmem:[%s1 + $0x1780] sm:$0xff]
  %v801 = vld [vmem:[%s1 + $0x1788] sm:$0xff]
  %v802 = vld [vmem:[%s1 + $0x1790] sm:$0xff]
  %v803 = vld [vmem:[%s1 + $0x1798] sm:$0xff]
  %v804 = vld [vmem:[%s1 + $0x17a0] sm:$0xff]
  %v805 = vld [vmem:[%s1 + $0x17a8] sm:$0xff]
  %v806 = vld [vmem:[%s1 + $0x17b0] sm:$0xff]
  %v807 = vld [vmem:[%s1 + $0x17b8] sm:$0xff]
  %v808 = vld [vmem:[%s1 + $0x17c0] sm:$0xff]
  %v809 = vld [vmem:[%s1 + $0x17c8] sm:$0xff]
  %v810 = vld [vmem:[%s1 + $0x17d0] sm:$0xff]
  %v811 = vld [vmem:[%s1 + $0x17d8] sm:$0xff]
  %v812 = vld [vmem:[%s1 + $0x17e0] sm:$0xff]
  %v813 = vld [vmem:[%s1 + $0x17e8] sm:$0xff]
  %v814 = vld [vmem:[%s1 + $0x17f0] sm:$0xff]
  %v815 = vld [vmem:[%s1 + $0x17f8] sm:$0xff]
  %v816 = vld [vmem:[%s1 + $0x1800] sm:$0xff]
  %v817 = vld [vmem:[%s1 + $0x1808] sm:$0xff]
  %v818 = vld [vmem:[%s1 + $0x1810] sm:$0xff]
  %v819 = vld [vmem:[%s1 + $0x1818] sm:$0xff]
  %v820 = vld [vmem:[%s1 + $0x1820] sm:$0xff]
  %v821 = vld [vmem:[%s1 + $0x1828] sm:$0xff]
  %v822 = vld [vmem:[%s1 + $0x1830] sm:$0xff]
  %v823 = vld [vmem:[%s1 + $0x1838] sm:$0xff]
  %v824 = vld [vmem:[%s1 + $0x1840] sm:$0xff]
  %v825 = vld [vmem:[%s1 + $0x1848] sm:$0xff]
  %v826 = vld [vmem:[%s1 + $0x1850] sm:$0xff]
  %v827 = vld [vmem:[%s1 + $0x1858] sm:$0xff]
  %v828 = vld [vmem:[%s1 + $0x1860] sm:$0xff]
  %v829 = vld [vmem:[%s1 + $0x1868] sm:$0xff]
  %v830 = vld [vmem:[%s1 + $0x1870] sm:$0xff]
  %v831 = vld [vmem:[%s1 + $0x1878] sm:$0xff]
  %v832 = vld [vmem:[%s1 + $0x1880] sm:$0xff]
  %v833 = vld [vmem:[%s1 + $0x1888] sm:$0xff]
  %v834 = vld [vmem:[%s1 + $0x1890] sm:$0xff]
  %v835 = vld [vmem:[%s1 + $0x1898] sm:$0xff]
  %v836 = vld [vmem:[%s1 + $0x18a0] sm:$0xff]
  %v837 = vld [vmem:[%s1 + $0x18a8] sm:$0xff]
  %v838 = vld [vmem:[%s1 + $0x18b0] sm:$0xff]
  %v839 = vld [vmem:[%s1 + $0x18b8] sm:$0xff]
  %v840 = vld [vmem:[%s1 + $0x18c0] sm:$0xff]
  %v841 = vld [vmem:[%s1 + $0x18c8] sm:$0xff]
  %v842 = vld [vmem:[%s1 + $0x18d0] sm:$0xff]
  %v843 = vld [vmem:[%s1 + $0x18d8] sm:$0xff]
  %v844 = vld [vmem:[%s1 + $0x18e0] sm:$0xff]
  %v845 = vld [vmem:[%s1 + $0x18e8] sm:$0xff]
  %v846 = vld [vmem:[%s1 + $0x18f0] sm:$0xff]
  %v847 = vld [vmem:[%s1 + $0x18f8] sm:$0xff]
  %v848 = vld [vmem:[%s1 + $0x1900] sm:$0xff]
  %v849 = vld [vmem:[%s1 + $0x1908] sm:$0xff]
  %v850 = vld [vmem:[%s1 + $0x1910] sm:$0xff]
  %v851 = vld [vmem:[%s1 + $0x1918] sm:$0xff]
  %v852 = vld [vmem:[%s1 + $0x1920] sm:$0xff]
  %v853 = vld [vmem:[%s1 + $0x1928] sm:$0xff]
  %v854 = vld [vmem:[%s1 + $0x1930] sm:$0xff]
  %v855 = vld [vmem:[%s1 + $0x1938] sm:$0xff]
  %v856 = vld [vmem:[%s1 + $0x1940] sm:$0xff]
  %v857 = vld [vmem:[%s1 + $0x1948] sm:$0xff]
  %v858 = vld [vmem:[%s1 + $0x1950] sm:$0xff]
  %v859 = vld [vmem:[%s1 + $0x1958] sm:$0xff]
  %v860 = vld [vmem:[%s1 + $0x1960] sm:$0xff]
  %v861 = vld [vmem:[%s1 + $0x1968] sm:$0xff]
  %v862 = vld [vmem:[%s1 + $0x1970] sm:$0xff]
  %v863 = vld [vmem:[%s1 + $0x1978] sm:$0xff]
  %v864 = vld [vmem:[%s1 + $0x1980] sm:$0xff]
  %v865 = vld [vmem:[%s1 + $0x1988] sm:$0xff]
  %v866 = vld [vmem:[%s1 + $0x1990] sm:$0xff]
  %v867 = vld [vmem:[%s1 + $0x1998] sm:$0xff]
  %v868 = vld [vmem:[%s1 + $0x19a0] sm:$0xff]
  %v869 = vld [vmem:[%s1 + $0x19a8] sm:$0xff]
  %v870 = vld [vmem:[%s1 + $0x19b0] sm:$0xff]
  %v871 = vld [vmem:[%s1 + $0x19b8] sm:$0xff]
  %v872 = vld [vmem:[%s1 + $0x19c0] sm:$0xff]
  %v873 = vld [vmem:[%s1 + $0x19c8] sm:$0xff]
  %v874 = vld [vmem:[%s1 + $0x19d0] sm:$0xff]
  %v875 = vld [vmem:[%s1 + $0x19d8] sm:$0xff]
  %v876 = vld [vmem:[%s1 + $0x19e0] sm:$0xff]
  %v877 = vld [vmem:[%s1 + $0x19e8] sm:$0xff]
  %v878 = vld [vmem:[%s1 + $0x19f0] sm:$0xff]
  %v879 = vld [vmem:[%s1 + $0x19f8] sm:$0xff]
  %v880 = vld [vmem:[%s1 + $0x1a00] sm:$0xff]
  %v881 = vld [vmem:[%s1 + $0x1a08] sm:$0xff]
  %v882 = vld [vmem:[%s1 + $0x1a10] sm:$0xff]
  %v883 = vld [vmem:[%s1 + $0x1a18] sm:$0xff]
  %v884 = vld [vmem:[%s1 + $0x1a20] sm:$0xff]
  %v885 = vld [vmem:[%s1 + $0x1a28] sm:$0xff]
  %v886 = vld [vmem:[%s1 + $0x1a30] sm:$0xff]
  %v887 = vld [vmem:[%s1 + $0x1a38] sm:$0xff]
  %v888 = vld [vmem:[%s1 + $0x1a40] sm:$0xff]
  %v889 = vld [vmem:[%s1 + $0x1a48] sm:$0xff]
  %v890 = vld [vmem:[%s1 + $0x1a50] sm:$0xff]
  %v891 = vld [vmem:[%s1 + $0x1a58] sm:$0xff]
  %v892 = vld [vmem:[%s1 + $0x1a60] sm:$0xff]
  %v893 = vld [vmem:[%s1 + $0x1a68] sm:$0xff]
  %v894 = vld [vmem:[%s1 + $0x1a70] sm:$0xff]
  %v895 = vld [vmem:[%s1 + $0x1a78] sm:$0xff]
  %v896 = vld [vmem:[%s1 + $0x1a80] sm:$0xff]
  %v897 = vld [vmem:[%s1 + $0x1a88] sm:$0xff]
  %v898 = vld [vmem:[%s1 + $0x1a90] sm:$0xff]
  %v899 = vld [vmem:[%s1 + $0x1a98] sm:$0xff]
  %v900 = vld [vmem:[%s1 + $0x1aa0] sm:$0xff]
  %v901 = vld [vmem:[%s1 + $0x1aa8] sm:$0xff]
  %v902 = vld [vmem:[%s1 + $0x1ab0] sm:$0xff]
  %v903 = vld [vmem:[%s1 + $0x1ab8] sm:$0xff]
  %v904 = vld [vmem:[%s1 + $0x1ac0] sm:$0xff]
  %v905 = vld [vmem:[%s1 + $0x1ac8] sm:$0xff]
  %v906 = vld [vmem:[%s1 + $0x1ad0] sm:$0xff]
  %v907 = vld [vmem:[%s1 + $0x1ad8] sm:$0xff]
  %v908 = vld [vmem:[%s1 + $0x1ae0] sm:$0xff]
  %v909 = vld [vmem:[%s1 + $0x1ae8] sm:$0xff]
  %v910 = vld [vmem:[%s1 + $0x1af0] sm:$0xff]
  %v911 = vld [vmem:[%s1 + $0x1af8] sm:$0xff]
  %v912 = vld [vmem:[%s1 + $0x1b00] sm:$0xff]
  %v913 = vld [vmem:[%s1 + $0x1b08] sm:$0xff]
  %v914 = vld [vmem:[%s1 + $0x1b10] sm:$0xff]
  %v915 = vld [vmem:[%s1 + $0x1b18] sm:$0xff]
  %v916 = vld [vmem:[%s1 + $0x1b20] sm:$0xff]
  %v917 = vld [vmem:[%s1 + $0x1b28] sm:$0xff]
  %v918 = vld [vmem:[%s1 + $0x1b30] sm:$0xff]
  %v919 = vld [vmem:[%s1 + $0x1b38] sm:$0xff]
  %v920 = vld [vmem:[%s1 + $0x1b40] sm:$0xff]
  %v921 = vld [vmem:[%s1 + $0x1b48] sm:$0xff]
  %v922 = vld [vmem:[%s1 + $0x1b50] sm:$0xff]
  %v923 = vld [vmem:[%s1 + $0x1b58] sm:$0xff]
  %v924 = vld [vmem:[%s1 + $0x1b60] sm:$0xff]
  %v925 = vld [vmem:[%s1 + $0x1b68] sm:$0xff]
  %v926 = vld [vmem:[%s1 + $0x1b70] sm:$0xff]
  %v927 = vld [vmem:[%s1 + $0x1b78] sm:$0xff]
  %v928 = vld [vmem:[%s1 + $0x1b80] sm:$0xff]
  %v929 = vld [vmem:[%s1 + $0x1b88] sm:$0xff]
  %v930 = vld [vmem:[%s1 + $0x1b90] sm:$0xff]
  %v931 = vld [vmem:[%s1 + $0x1b98] sm:$0xff]
  %v932 = vld [vmem:[%s1 + $0x1ba0] sm:$0xff]
  %v933 = vld [vmem:[%s1 + $0x1ba8] sm:$0xff]
  %v934 = vld [vmem:[%s1 + $0x1bb0] sm:$0xff]
  %v935 = vld [vmem:[%s1 + $0x1bb8] sm:$0xff]
  %v936 = vld [vmem:[%s1 + $0x1bc0] sm:$0xff]
  %v937 = vld [vmem:[%s1 + $0x1bc8] sm:$0xff]
  %v938 = vld [vmem:[%s1 + $0x1bd0] sm:$0xff]
  %v939 = vld [vmem:[%s1 + $0x1bd8] sm:$0xff]
  %v940 = vld [vmem:[%s1 + $0x1be0] sm:$0xff]
  %v941 = vld [vmem:[%s1 + $0x1be8] sm:$0xff]
  %v942 = vld [vmem:[%s1 + $0x1bf0] sm:$0xff]
  %v943 = vld [vmem:[%s1 + $0x1bf8] sm:$0xff]
  %v944 = vld [vmem:[%s1 + $0x1c00] sm:$0xff]
  %v945 = vld [vmem:[%s1 + $0x1c08] sm:$0xff]
  %v946 = vld [vmem:[%s1 + $0x1c10] sm:$0xff]
  %v947 = vld [vmem:[%s1 + $0x1c18] sm:$0xff]
  %v948 = vld [vmem:[%s1 + $0x1c20] sm:$0xff]
  %v949 = vld [vmem:[%s1 + $0x1c28] sm:$0xff]
  %v950 = vld [vmem:[%s1 + $0x1c30] sm:$0xff]
  %v951 = vld [vmem:[%s1 + $0x1c38] sm:$0xff]
  %v952 = vld [vmem:[%s1 + $0x1c40] sm:$0xff]
  %v953 = vld [vmem:[%s1 + $0x1c48] sm:$0xff]
  %v954 = vld [vmem:[%s1 + $0x1c50] sm:$0xff]
  %v955 = vld [vmem:[%s1 + $0x1c58] sm:$0xff]
  %v956 = vld [vmem:[%s1 + $0x1c60] sm:$0xff]
  %v957 = vld [vmem:[%s1 + $0x1c68] sm:$0xff]
  %v958 = vld [vmem:[%s1 + $0x1c70] sm:$0xff]
  %v959 = vld [vmem:[%s1 + $0x1c78] sm:$0xff]
  %v960 = vld [vmem:[%s1 + $0x1c80] sm:$0xff]
  %v961 = vld [vmem:[%s1 + $0x1c88] sm:$0xff]
  %v962 = vld [vmem:[%s1 + $0x1c90] sm:$0xff]
  %v963 = vld [vmem:[%s1 + $0x1c98] sm:$0xff]
  %v964 = vld [vmem:[%s1 + $0x1ca0] sm:$0xff]
  %v965 = vld [vmem:[%s1 + $0x1ca8] sm:$0xff]
  %v966 = vld [vmem:[%s1 + $0x1cb0] sm:$0xff]
  %v967 = vld [vmem:[%s1 + $0x1cb8] sm:$0xff]
  %v968 = vld [vmem:[%s1 + $0x1cc0] sm:$0xff]
  %v969 = vld [vmem:[%s1 + $0x1cc8] sm:$0xff]
  %v970 = vld [vmem:[%s1 + $0x1cd0] sm:$0xff]
  %v971 = vld [vmem:[%s1 + $0x1cd8] sm:$0xff]
  %v972 = vld [vmem:[%s1 + $0x1ce0] sm:$0xff]
  %v973 = vld [vmem:[%s1 + $0x1ce8] sm:$0xff]
  %v974 = vld [vmem:[%s1 + $0x1cf0] sm:$0xff]
  %v975 = vld [vmem:[%s1 + $0x1cf8] sm:$0xff]
  %v976 = vld [vmem:[%s1 + $0x1d00] sm:$0xff]
  %v977 = vld [vmem:[%s1 + $0x1d08] sm:$0xff]
  %v978 = vld [vmem:[%s1 + $0x1d10] sm:$0xff]
  %v979 = vld [vmem:[%s1 + $0x1d18] sm:$0xff]
  %v980 = vld [vmem:[%s1 + $0x1d20] sm:$0xff]
  %v981 = vld [vmem:[%s1 + $0x1d28] sm:$0xff]
  %v982 = vld [vmem:[%s1 + $0x1d30] sm:$0xff]
  %v983 = vld [vmem:[%s1 + $0x1d38] sm:$0xff]
  %v984 = vld [vmem:[%s1 + $0x1d40] sm:$0xff]
  %v985 = vld [vmem:[%s1 + $0x1d48] sm:$0xff]
  %v986 = vld [vmem:[%s1 + $0x1d50] sm:$0xff]
  %v987 = vld [vmem:[%s1 + $0x1d58] sm:$0xff]
  %v988 = vld [vmem:[%s1 + $0x1d60] sm:$0xff]
  %v989 = vld [vmem:[%s1 + $0x1d68] sm:$0xff]
  %v990 = vld [vmem:[%s1 + $0x1d70] sm:$0xff]
  %v991 = vld [vmem:[%s1 + $0x1d78] sm:$0xff]
  %v992 = vld [vmem:[%s1 + $0x1d80] sm:$0xff]
  %v993 = vld [vmem:[%s1 + $0x1d88] sm:$0xff]
  %v994 = vld [vmem:[%s1 + $0x1d90] sm:$0xff]
  %v995 = vld [vmem:[%s1 + $0x1d98] sm:$0xff]
  %v996 = vld [vmem:[%s1 + $0x1da0] sm:$0xff]
  %v997 = vld [vmem:[%s1 + $0x1da8] sm:$0xff]
  %v998 = vld [vmem:[%s1 + $0x1db0] sm:$0xff]
  %v999 = vld [vmem:[%s1 + $0x1db8] sm:$0xff]
  %v1000 = vld [vmem:[%s1 + $0x1dc0] sm:$0xff]
  %v1001 = vld [vmem:[%s1 + $0x1dc8] sm:$0xff]
  %v1002 = vld [vmem:[%s1 + $0x1dd0] sm:$0xff]
  %v1003 = vld [vmem:[%s1 + $0x1dd8] sm:$0xff]
  %v1004 = vld [vmem:[%s1 + $0x1de0] sm:$0xff]
  %v1005 = vld [vmem:[%s1 + $0x1de8] sm:$0xff]
  %v1006 = vld [vmem:[%s1 + $0x1df0] sm:$0xff]
  %v1007 = vld [vmem:[%s1 + $0x1df8] sm:$0xff]
  %v1008 = vld [vmem:[%s1 + $0x1e00] sm:$0xff]
  %v1009 = vld [vmem:[%s1 + $0x1e08] sm:$0xff]
  %v1010 = vld [vmem:[%s1 + $0x1e10] sm:$0xff]
  %v1011 = vld [vmem:[%s1 + $0x1e18] sm:$0xff]
  %v1012 = vld [vmem:[%s1 + $0x1e20] sm:$0xff]
  %v1013 = vld [vmem:[%s1 + $0x1e28] sm:$0xff]
  %v1014 = vld [vmem:[%s1 + $0x1e30] sm:$0xff]
  %v1015 = vld [vmem:[%s1 + $0x1e38] sm:$0xff]
  %v1016 = vld [vmem:[%s1 + $0x1e40] sm:$0xff]
  %v1017 = vld [vmem:[%s1 + $0x1e48] sm:$0xff]
  %v1018 = vld [vmem:[%s1 + $0x1e50] sm:$0xff]
  %v1019 = vld [vmem:[%s1 + $0x1e58] sm:$0xff]
  %v1020 = vld [vmem:[%s1 + $0x1e60] sm:$0xff]
  %v1021 = vld [vmem:[%s1 + $0x1e68] sm:$0xff]
  %v1022 = vld [vmem:[%s1 + $0x1e70] sm:$0xff]
  %v1023 = vld [vmem:[%s1 + $0x1e78] sm:$0xff]
  %v1024 = vld [vmem:[%s1 + $0x1e80] sm:$0xff]
  %v1025 = vld [vmem:[%s1 + $0x1e88] sm:$0xff]
  %v1026 = vld [vmem:[%s1 + $0x1e90] sm:$0xff]
  %v1027 = vld [vmem:[%s1 + $0x1e98] sm:$0xff]
  %v1028 = vld [vmem:[%s1 + $0x1ea0] sm:$0xff]
  %v1029 = vld [vmem:[%s1 + $0x1ea8] sm:$0xff]
  %v1030 = vld [vmem:[%s1 + $0x1eb0] sm:$0xff]
  %v1031 = vld [vmem:[%s1 + $0x1eb8] sm:$0xff]
  %v1032 = vld [vmem:[%s1 + $0x1ec0] sm:$0xff]
  %v1033 = vld [vmem:[%s1 + $0x1ec8] sm:$0xff]
  %v1034 = vld [vmem:[%s1 + $0x1ed0] sm:$0xff]
  %v1035 = vld [vmem:[%s1 + $0x1ed8] sm:$0xff]
  %v1036 = vld [vmem:[%s1 + $0x1ee0] sm:$0xff]
  %v1037 = vld [vmem:[%s1 + $0x1ee8] sm:$0xff]
  %v1038 = vld [vmem:[%s1 + $0x1ef0] sm:$0xff]
  %v1039 = vld [vmem:[%s1 + $0x1ef8] sm:$0xff]
  %v1040 = vld [vmem:[%s1 + $0x1f00] sm:$0xff]
  %v1041 = vld [vmem:[%s1 + $0x1f08] sm:$0xff]
  %v1042 = vld [vmem:[%s1 + $0x1f10] sm:$0xff]
  %v1043 = vld [vmem:[%s1 + $0x1f18] sm:$0xff]
  %v1044 = vld [vmem:[%s1 + $0x1f20] sm:$0xff]
  %v1045 = vld [vmem:[%s1 + $0x1f28] sm:$0xff]
  %v1046 = vld [vmem:[%s1 + $0x1f30] sm:$0xff]
  %v1047 = vld [vmem:[%s1 + $0x1f38] sm:$0xff]
  %v1048 = vld [vmem:[%s1 + $0x1f40] sm:$0xff]
  %v1049 = vld [vmem:[%s1 + $0x1f48] sm:$0xff]
  %v1050 = vld [vmem:[%s1 + $0x1f50] sm:$0xff]
  %v1051 = vld [vmem:[%s1 + $0x1f58] sm:$0xff]
  %v1052 = vld [vmem:[%s1 + $0x1f60] sm:$0xff]
  %v1053 = vld [vmem:[%s1 + $0x1f68] sm:$0xff]
  %v1054 = vld [vmem:[%s1 + $0x1f70] sm:$0xff]
  %v1055 = vld [vmem:[%s1 + $0x1f78] sm:$0xff]
  %v1056 = vld [vmem:[%s1 + $0x1f80] sm:$0xff]
  %v1057 = vld [vmem:[%s1 + $0x1f88] sm:$0xff]
  %v1058 = vld [vmem:[%s1 + $0x1f90] sm:$0xff]
  %v1059 = vld [vmem:[%s1 + $0x1f98] sm:$0xff]
  %v1060 = vld [vmem:[%s1 + $0x1fa0] sm:$0xff]
  %v1061 = vld [vmem:[%s1 + $0x1fa8] sm:$0xff]
  %v1062 = vld [vmem:[%s1 + $0x1fb0] sm:$0xff]
  %v1063 = vld [vmem:[%s1 + $0x1fb8] sm:$0xff]
  %v1064 = vld [vmem:[%s1 + $0x1fc0] sm:$0xff]
  %v1065 = vld [vmem:[%s1 + $0x1fc8] sm:$0xff]
  %v1066 = vld [vmem:[%s1 + $0x1fd0] sm:$0xff]
  %v1067 = vld [vmem:[%s1 + $0x1fd8] sm:$0xff]
  %v1068 = vld [vmem:[%s1 + $0x1fe0] sm:$0xff]
  %v1069 = vld [vmem:[%s1 + $0x1fe8] sm:$0xff]
  %v1070 = vld [vmem:[%s1 + $0x1ff0] sm:$0xff]
  %v1071 = vld [vmem:[%s1 + $0x1ff8] sm:$0xff]
  %v1072 = vld [vmem:[%s1 + $0x2000] sm:$0xff]
  %v1073 = vld [vmem:[%s1 + $0x2008] sm:$0xff]
  %v1074 = vld [vmem:[%s1 + $0x2010] sm:$0xff]
  %v1075 = vld [vmem:[%s1 + $0x2018] sm:$0xff]
  %v1076 = vld [vmem:[%s1 + $0x2020] sm:$0xff]
  %v1077 = vld [vmem:[%s1 + $0x2028] sm:$0xff]
  %v1078 = vld [vmem:[%s1 + $0x2030] sm:$0xff]
  %v1079 = vld [vmem:[%s1 + $0x2038] sm:$0xff]
  %v1080 = vld [vmem:[%s1 + $0x2040] sm:$0xff]
  %v1081 = vld [vmem:[%s1 + $0x2048] sm:$0xff]
  %v1082 = vld [vmem:[%s1 + $0x2050] sm:$0xff]
  %v1083 = vld [vmem:[%s1 + $0x2058] sm:$0xff]
  %v1084 = vld [vmem:[%s1 + $0x2060] sm:$0xff]
  %v1085 = vld [vmem:[%s1 + $0x2068] sm:$0xff]
  %v1086 = vld [vmem:[%s1 + $0x2070] sm:$0xff]
  %v1087 = vld [vmem:[%s1 + $0x2078] sm:$0xff]
  %v1088 = vld [vmem:[%s1 + $0x2080] sm:$0xff]
  %v1089 = vld [vmem:[%s1 + $0x2088] sm:$0xff]
  %v1090 = vld [vmem:[%s1 + $0x2090] sm:$0xff]
  %v1091 = vld [vmem:[%s1 + $0x2098] sm:$0xff]
  %v1092 = vld [vmem:[%s1 + $0x20a0] sm:$0xff]
  %v1093 = vld [vmem:[%s1 + $0x20a8] sm:$0xff]
  %v1094 = vld [vmem:[%s1 + $0x20b0] sm:$0xff]
  %v1095 = vld [vmem:[%s1 + $0x20b8] sm:$0xff]
  %v1096 = vld [vmem:[%s1 + $0x20c0] sm:$0xff]
  %v1097 = vld [vmem:[%s1 + $0x20c8] sm:$0xff]
  %v1098 = vld [vmem:[%s1 + $0x20d0] sm:$0xff]
  %v1099 = vld [vmem:[%s1 + $0x20d8] sm:$0xff]
  %v1100 = vld [vmem:[%s1 + $0x20e0] sm:$0xff]
  %v1101 = vld [vmem:[%s1 + $0x20e8] sm:$0xff]
  %v1102 = vld [vmem:[%s1 + $0x20f0] sm:$0xff]
  %v1103 = vld [vmem:[%s1 + $0x20f8] sm:$0xff]
  %v1104 = vld [vmem:[%s1 + $0x2100] sm:$0xff]
  %v1105 = vld [vmem:[%s1 + $0x2108] sm:$0xff]
  %v1106 = vld [vmem:[%s1 + $0x2110] sm:$0xff]
  %v1107 = vld [vmem:[%s1 + $0x2118] sm:$0xff]
  %v1108 = vld [vmem:[%s1 + $0x2120] sm:$0xff]
  %v1109 = vld [vmem:[%s1 + $0x2128] sm:$0xff]
  %v1110 = vld [vmem:[%s1 + $0x2130] sm:$0xff]
  %v1111 = vld [vmem:[%s1 + $0x2138] sm:$0xff]
  %v1112 = vld [vmem:[%s1 + $0x2140] sm:$0xff]
  %v1113 = vld [vmem:[%s1 + $0x2148] sm:$0xff]
  %v1114 = vld [vmem:[%s1 + $0x2150] sm:$0xff]
  %v1115 = vld [vmem:[%s1 + $0x2158] sm:$0xff]
  %v1116 = vld [vmem:[%s1 + $0x2160] sm:$0xff]
  %v1117 = vld [vmem:[%s1 + $0x2168] sm:$0xff]
  %v1118 = vld [vmem:[%s1 + $0x2170] sm:$0xff]
  %v1119 = vld [vmem:[%s1 + $0x2178] sm:$0xff]
  %v1120 = vld [vmem:[%s1 + $0x2180] sm:$0xff]
  %v1121 = vld [vmem:[%s1 + $0x2188] sm:$0xff]
  %v1122 = vld [vmem:[%s1 + $0x2190] sm:$0xff]
  %v1123 = vld [vmem:[%s1 + $0x2198] sm:$0xff]
  %v1124 = vld [vmem:[%s1 + $0x21a0] sm:$0xff]
  %v1125 = vld [vmem:[%s1 + $0x21a8] sm:$0xff]
  %v1126 = vld [vmem:[%s1 + $0x21b0] sm:$0xff]
  %v1127 = vld [vmem:[%s1 + $0x21b8] sm:$0xff]
  %v1128 = vld [vmem:[%s1 + $0x21c0] sm:$0xff]
  %v1129 = vld [vmem:[%s1 + $0x21c8] sm:$0xff]
  %v1130 = vld [vmem:[%s1 + $0x21d0] sm:$0xff]
  %v1131 = vld [vmem:[%s1 + $0x21d8] sm:$0xff]
  %v1132 = vld [vmem:[%s1 + $0x21e0] sm:$0xff]
  %v1133 = vld [vmem:[%s1 + $0x21e8] sm:$0xff]
  %v1134 = vld [vmem:[%s1 + $0x21f0] sm:$0xff]
  %v1135 = vld [vmem:[%s1 + $0x21f8] sm:$0xff]
  %v1136 = vld [vmem:[%s1 + $0x2200] sm:$0xff]
  %v1137 = vld [vmem:[%s1 + $0x2208] sm:$0xff]
  %v1138 = vld [vmem:[%s1 + $0x2210] sm:$0xff]
  %v1139 = vld [vmem:[%s1 + $0x2218] sm:$0xff]
  %v1140 = vld [vmem:[%s1 + $0x2220] sm:$0xff]
  %v1141 = vld [vmem:[%s1 + $0x2228] sm:$0xff]
  %v1142 = vld [vmem:[%s1 + $0x2230] sm:$0xff]
  %v1143 = vld [vmem:[%s1 + $0x2238] sm:$0xff]
  %v1144 = vld [vmem:[%s1 + $0x2240] sm:$0xff]
  %v1145 = vld [vmem:[%s1 + $0x2248] sm:$0xff]
  %v1146 = vld [vmem:[%s1 + $0x2250] sm:$0xff]
  %v1147 = vld [vmem:[%s1 + $0x2258] sm:$0xff]
  %v1148 = vld [vmem:[%s1 + $0x2260] sm:$0xff]
  %v1149 = vld [vmem:[%s1 + $0x2268] sm:$0xff]
  %v1150 = vld [vmem:[%s1 + $0x2270] sm:$0xff]
  %v1151 = vld [vmem:[%s1 + $0x2278] sm:$0xff]
  %v1152 = vld [vmem:[%s1 + $0x2280] sm:$0xff]
  %v1153 = vld [vmem:[%s1 + $0x2288] sm:$0xff]
  %v1154 = vld [vmem:[%s1 + $0x2290] sm:$0xff]
  %v1155 = vld [vmem:[%s1 + $0x2298] sm:$0xff]
  %v1156 = vld [vmem:[%s1 + $0x22a0] sm:$0xff]
  %v1157 = vld [vmem:[%s1 + $0x22a8] sm:$0xff]
  %v1158 = vld [vmem:[%s1 + $0x22b0] sm:$0xff]
  %v1159 = vld [vmem:[%s1 + $0x22b8] sm:$0xff]
  %v1160 = vld [vmem:[%s1 + $0x22c0] sm:$0xff]
  %v1161 = vld [vmem:[%s1 + $0x22c8] sm:$0xff]
  %v1162 = vld [vmem:[%s1 + $0x22d0] sm:$0xff]
  %v1163 = vld [vmem:[%s1 + $0x22d8] sm:$0xff]
  %v1164 = vld [vmem:[%s1 + $0x22e0] sm:$0xff]
  %v1165 = vld [vmem:[%s1 + $0x22e8] sm:$0xff]
  %v1166 = vld [vmem:[%s1 + $0x22f0] sm:$0xff]
  %v1167 = vld [vmem:[%s1 + $0x22f8] sm:$0xff]
  %v1168 = vld [vmem:[%s1 + $0x2300] sm:$0xff]
  %v1169 = vld [vmem:[%s1 + $0x2308] sm:$0xff]
  %v1170 = vld [vmem:[%s1 + $0x2310] sm:$0xff]
  %v1171 = vld [vmem:[%s1 + $0x2318] sm:$0xff]
  %v1172 = vld [vmem:[%s1 + $0x2320] sm:$0xff]
  %v1173 = vld [vmem:[%s1 + $0x2328] sm:$0xff]
  %v1174 = vld [vmem:[%s1 + $0x2330] sm:$0xff]
  %v1175 = vld [vmem:[%s1 + $0x2338] sm:$0xff]
  %v1176 = vld [vmem:[%s1 + $0x2340] sm:$0xff]
  %v1177 = vld [vmem:[%s1 + $0x2348] sm:$0xff]
  %v1178 = vld [vmem:[%s1 + $0x2350] sm:$0xff]
  %v1179 = vld [vmem:[%s1 + $0x2358] sm:$0xff]
  %v1180 = vld [vmem:[%s1 + $0x2360] sm:$0xff]
  %v1181 = vld [vmem:[%s1 + $0x2368] sm:$0xff]
  %v1182 = vld [vmem:[%s1 + $0x2370] sm:$0xff]
  %v1183 = vld [vmem:[%s1 + $0x2378] sm:$0xff]
  %v1184 = vld [vmem:[%s1 + $0x2380] sm:$0xff]
  %v1185 = vld [vmem:[%s1 + $0x2388] sm:$0xff]
  %v1186 = vld [vmem:[%s1 + $0x2390] sm:$0xff]
  %v1187 = vld [vmem:[%s1 + $0x2398] sm:$0xff]
  %v1188 = vld [vmem:[%s1 + $0x23a0] sm:$0xff]
  %v1189 = vld [vmem:[%s1 + $0x23a8] sm:$0xff]
  %v1190 = vld [vmem:[%s1 + $0x23b0] sm:$0xff]
  %v1191 = vld [vmem:[%s1 + $0x23b8] sm:$0xff]
  %v1192 = vld [vmem:[%s1 + $0x23c0] sm:$0xff]
  %v1193 = vld [vmem:[%s1 + $0x23c8] sm:$0xff]
  %v1194 = vld [vmem:[%s1 + $0x23d0] sm:$0xff]
  %v1195 = vld [vmem:[%s1 + $0x23d8] sm:$0xff]
  %v1196 = vld [vmem:[%s1 + $0x23e0] sm:$0xff]
  %v1197 = vld [vmem:[%s1 + $0x23e8] sm:$0xff]
  %v1198 = vld [vmem:[%s1 + $0x23f0] sm:$0xff]
  %v1199 = vld [vmem:[%s1 + $0x23f8] sm:$0xff]
  %v1200 = vld [vmem:[%s1 + $0x2400] sm:$0xff]
  %v1201 = vld [vmem:[%s1 + $0x2408] sm:$0xff]
  %v1202 = vld [vmem:[%s1 + $0x2410] sm:$0xff]
  %v1203 = vld [vmem:[%s1 + $0x2418] sm:$0xff]
  %v1204 = vld [vmem:[%s1 + $0x2420] sm:$0xff]
  %v1205 = vld [vmem:[%s1 + $0x2428] sm:$0xff]
  %v1206 = vld [vmem:[%s1 + $0x2430] sm:$0xff]
  %v1207 = vld [vmem:[%s1 + $0x2438] sm:$0xff]
  %v1208 = vld [vmem:[%s1 + $0x2440] sm:$0xff]
  %v1209 = vld [vmem:[%s1 + $0x2448] sm:$0xff]
  %v1210 = vld [vmem:[%s1 + $0x2450] sm:$0xff]
  %v1211 = vld [vmem:[%s1 + $0x2458] sm:$0xff]
  %v1212 = vld [vmem:[%s1 + $0x2460] sm:$0xff]
  %v1213 = vld [vmem:[%s1 + $0x2468] sm:$0xff]
  %v1214 = vld [vmem:[%s1 + $0x2470] sm:$0xff]
  %v1215 = vld [vmem:[%s1 + $0x2478] sm:$0xff]
  %v1216 = vld [vmem:[%s1 + $0x2480] sm:$0xff]
  %v1217 = vld [vmem:[%s1 + $0x2488] sm:$0xff]
  %v1218 = vld [vmem:[%s1 + $0x2490] sm:$0xff]
  %v1219 = vld [vmem:[%s1 + $0x2498] sm:$0xff]
  %v1220 = vld [vmem:[%s1 + $0x24a0] sm:$0xff]
  %v1221 = vld [vmem:[%s1 + $0x24a8] sm:$0xff]
  %v1222 = vld [vmem:[%s1 + $0x24b0] sm:$0xff]
  %v1223 = vld [vmem:[%s1 + $0x24b8] sm:$0xff]
  %v1224 = vld [vmem:[%s1 + $0x24c0] sm:$0xff]
  %v1225 = vld [vmem:[%s1 + $0x24c8] sm:$0xff]
  %v1226 = vld [vmem:[%s1 + $0x24d0] sm:$0xff]
  %v1227 = vld [vmem:[%s1 + $0x24d8] sm:$0xff]
  %v1228 = vld [vmem:[%s1 + $0x24e0] sm:$0xff]
  %v1229 = vld [vmem:[%s1 + $0x24e8] sm:$0xff]
  %v1230 = vld [vmem:[%s1 + $0x24f0] sm:$0xff]
  %v1231 = vld [vmem:[%s1 + $0x24f8] sm:$0xff]
  %v1232 = vld [vmem:[%s1 + $0x2500] sm:$0xff]
  %v1233 = vld [vmem:[%s1 + $0x2508] sm:$0xff]
  %v1234 = vld [vmem:[%s1 + $0x2510] sm:$0xff]
  %v1235 = vld [vmem:[%s1 + $0x2518] sm:$0xff]
  %v1236 = vld [vmem:[%s1 + $0x2520] sm:$0xff]
  %v1237 = vld [vmem:[%s1 + $0x2528] sm:$0xff]
  %v1238 = vld [vmem:[%s1 + $0x2530] sm:$0xff]
  %v1239 = vld [vmem:[%s1 + $0x2538] sm:$0xff]
  %v1240 = vld [vmem:[%s1 + $0x2540] sm:$0xff]
  %v1241 = vld [vmem:[%s1 + $0x2548] sm:$0xff]
  %v1242 = vld [vmem:[%s1 + $0x2550] sm:$0xff]
  %v1243 = vld [vmem:[%s1 + $0x2558] sm:$0xff]
  %v1244 = vld [vmem:[%s1 + $0x2560] sm:$0xff]
  %v1245 = vld [vmem:[%s1 + $0x2568] sm:$0xff]
  %v1246 = vld [vmem:[%s1 + $0x2570] sm:$0xff]
  %v1247 = vld [vmem:[%s1 + $0x2578] sm:$0xff]
  %v1248 = vld [vmem:[%s1 + $0x2580] sm:$0xff]
  %v1249 = vld [vmem:[%s1 + $0x2588] sm:$0xff]
  %v1250 = vld [vmem:[%s1 + $0x2590] sm:$0xff]
  %v1251 = vld [vmem:[%s1 + $0x2598] sm:$0xff]
  %v1252 = vld [vmem:[%s1 + $0x25a0] sm:$0xff]
  %v1253 = vld [vmem:[%s1 + $0x25a8] sm:$0xff]
  %v1254 = vld [vmem:[%s1 + $0x25b0] sm:$0xff]
  %v1255 = vld [vmem:[%s1 + $0x25b8] sm:$0xff]
  %v1256 = vld [vmem:[%s1 + $0x25c0] sm:$0xff]
  %v1257 = vld [vmem:[%s1 + $0x25c8] sm:$0xff]
  %v1258 = vld [vmem:[%s1 + $0x25d0] sm:$0xff]
  %v1259 = vld [vmem:[%s1 + $0x25d8] sm:$0xff]
  %v1260 = vld [vmem:[%s1 + $0x25e0] sm:$0xff]
  %v1261 = vld [vmem:[%s1 + $0x25e8] sm:$0xff]
  %v1262 = vld [vmem:[%s1 + $0x25f0] sm:$0xff]
  %v1263 = vld [vmem:[%s1 + $0x25f8] sm:$0xff]
  %v1264 = vld [vmem:[%s1 + $0x2600] sm:$0xff]
  %v1265 = vld [vmem:[%s1 + $0x2608] sm:$0xff]
  %v1266 = vld [vmem:[%s1 + $0x2610] sm:$0xff]
  %v1267 = vld [vmem:[%s1 + $0x2618] sm:$0xff]
  %v1268 = vld [vmem:[%s1 + $0x2620] sm:$0xff]
  %v1269 = vld [vmem:[%s1 + $0x2628] sm:$0xff]
  %v1270 = vld [vmem:[%s1 + $0x2630] sm:$0xff]
  %v1271 = vld [vmem:[%s1 + $0x2638] sm:$0xff]
  %v1272 = vld [vmem:[%s1 + $0x2640] sm:$0xff]
  %v1273 = vld [vmem:[%s1 + $0x2648] sm:$0xff]
  %v1274 = vld [vmem:[%s1 + $0x2650] sm:$0xff]
  %v1275 = vld [vmem:[%s1 + $0x2658] sm:$0xff]
  %v1276 = vld [vmem:[%s1 + $0x2660] sm:$0xff]
  %v1277 = vld [vmem:[%s1 + $0x2668] sm:$0xff]
  %v1278 = vld [vmem:[%s1 + $0x2670] sm:$0xff]
  %v1279 = vld [vmem:[%s1 + $0x2678] sm:$0xff]
  %v1280 = vld [vmem:[%s1 + $0x2680] sm:$0xff]
  %v1281 = vld [vmem:[%s1 + $0x2688] sm:$0xff]
  %v1282 = vld [vmem:[%s1 + $0x2690] sm:$0xff]
  %v1283 = vld [vmem:[%s1 + $0x2698] sm:$0xff]
  %v1284 = vld [vmem:[%s1 + $0x26a0] sm:$0xff]
  %v1285 = vld [vmem:[%s1 + $0x26a8] sm:$0xff]
  %v1286 = vld [vmem:[%s1 + $0x26b0] sm:$0xff]
  %v1287 = vld [vmem:[%s1 + $0x26b8] sm:$0xff]
  %v1288 = vld [vmem:[%s1 + $0x26c0] sm:$0xff]
  %v1289 = vld [vmem:[%s1 + $0x26c8] sm:$0xff]
  %v1290 = vld [vmem:[%s1 + $0x26d0] sm:$0xff]
  %v1291 = vld [vmem:[%s1 + $0x26d8] sm:$0xff]
  %v1292 = vld [vmem:[%s1 + $0x26e0] sm:$0xff]
  %v1293 = vld [vmem:[%s1 + $0x26e8] sm:$0xff]
  %v1294 = vld [vmem:[%s1 + $0x26f0] sm:$0xff]
  %v1295 = vld [vmem:[%s1 + $0x26f8] sm:$0xff]
  %v1296 = vld [vmem:[%s1 + $0x2700] sm:$0xff]
  %v1297 = vld [vmem:[%s1 + $0x2708] sm:$0xff]
  %v1298 = vld [vmem:[%s1 + $0x2710] sm:$0xff]
  %v1299 = vld [vmem:[%s1 + $0x2718] sm:$0xff]
  %v1300 = vld [vmem:[%s1 + $0x2720] sm:$0xff]
  %v1301 = vld [vmem:[%s1 + $0x2728] sm:$0xff]
  %v1302 = vld [vmem:[%s1 + $0x2730] sm:$0xff]
  %v1303 = vld [vmem:[%s1 + $0x2738] sm:$0xff]
  %v1304 = vld [vmem:[%s1 + $0x2740] sm:$0xff]
  %v1305 = vld [vmem:[%s1 + $0x2748] sm:$0xff]
  %v1306 = vld [vmem:[%s1 + $0x2750] sm:$0xff]
  %v1307 = vld [vmem:[%s1 + $0x2758] sm:$0xff]
  %v1308 = vld [vmem:[%s1 + $0x2760] sm:$0xff]
  %v1309 = vld [vmem:[%s1 + $0x2768] sm:$0xff]
  %v1310 = vld [vmem:[%s1 + $0x2770] sm:$0xff]
  %v1311 = vld [vmem:[%s1 + $0x2778] sm:$0xff]
  %v1312 = vld [vmem:[%s1 + $0x2780] sm:$0xff]
  %v1313 = vld [vmem:[%s1 + $0x2788] sm:$0xff]
  %v1314 = vld [vmem:[%s1 + $0x2790] sm:$0xff]
  %v1315 = vld [vmem:[%s1 + $0x2798] sm:$0xff]
  %v1316 = vld [vmem:[%s1 + $0x27a0] sm:$0xff]
  %v1317 = vld [vmem:[%s1 + $0x27a8] sm:$0xff]
  %v1318 = vld [vmem:[%s1 + $0x27b0] sm:$0xff]
  %v1319 = vld [vmem:[%s1 + $0x27b8] sm:$0xff]
  %v1320 = vld [vmem:[%s1 + $0x27c0] sm:$0xff]
  %v1321 = vld [vmem:[%s1 + $0x27c8] sm:$0xff]
  %v1322 = vld [vmem:[%s1 + $0x27d0] sm:$0xff]
  %v1323 = vld [vmem:[%s1 + $0x27d8] sm:$0xff]
  %v1324 = vld [vmem:[%s1 + $0x27e0] sm:$0xff]
  %v1325 = vld [vmem:[%s1 + $0x27e8] sm:$0xff]
  %v1326 = vld [vmem:[%s1 + $0x27f0] sm:$0xff]
  %v1327 = vld [vmem:[%s1 + $0x27f8] sm:$0xff]
  %v1328 = vld [vmem:[%s2] sm:$0x1f]
  %v1330 = vperm.slane %v1328, 0
  %v1331 = vperm.slane %v1328, 1
  %v1332 = vperm.slane %v1328, 2
  %v1333 = vperm.slane %v1328, 3
  %v1334 = vperm.slane %v1328, 4
  %1340 = vmatpush.msra.mxu0 %v123
  %1341 = vmatpush.msra.mxu0 %v118
  %1342 = vmatpush.msra.mxu0 %v113
  %1343 = vmatpush.msra.mxu0 %v108
  %1344 = vmatpush.msra.mxu0 %v103
  %1345 = vmatpush.msra.mxu0 %v98
  %1346 = vmatpush.msra.mxu0 %v93
  %1347 = vmatpush.msra.mxu0 %v88
  %1348 = vmatpush.msra.mxu0 %v83
  %1349 = vmatpush.msra.mxu0 %v78
  %1350 = vmatpush.msra.mxu0 %v73
  %1351 = vmatpush.msra.mxu0 %v68
  %1352 = vmatpush.msra.mxu0 %v63
  %1353 = vmatpush.msra.mxu0 %v58
  %1354 = vmatpush.msra.mxu0 %v53
  %1355 = vmatpush.msra.mxu0 %v48
  %1356 = vmatmul.f32.gmra.mxu0 %v32
  %v1357 = vpop.f32.mrf.mxu0
  %v1358 = vadd.f32 %v1330, %v1357
  %1359 = vdwg.mxu0
  %1360 = vmatpush.msra.mxu0 %v203
  %1361 = vmatpush.msra.mxu0 %v198
  %1362 = vmatpush.msra.mxu0 %v193
  %1363 = vmatpush.msra.mxu0 %v188
  %1364 = vmatpush.msra.mxu0 %v183
  %1365 = vmatpush.msra.mxu0 %v178
  %1366 = vmatpush.msra.mxu0 %v173
  %1367 = vmatpush.msra.mxu0 %v168
  %1368 = vmatpush.msra.mxu0 %v163
  %1369 = vmatpush.msra.mxu0 %v158
  %1370 = vmatpush.msra.mxu0 %v153
  %1371 = vmatpush.msra.mxu0 %v148
  %1372 = vmatpush.msra.mxu0 %v143
  %1373 = vmatpush.msra.mxu0 %v138
  %1374 = vmatpush.msra.mxu0 %v133
  %1375 = vmatpush.msra.mxu0 %v128
  %1376 = vmatmul.f32.gmra.mxu0 %v33
  %v1377 = vpop.f32.mrf.mxu0
  %v1378 = vadd.f32 %v1358, %v1377
  %1379 = vdwg.mxu0
  %1380 = vmatpush.msra.mxu0 %v283
  %1381 = vmatpush.msra.mxu0 %v278
  %1382 = vmatpush.msra.mxu0 %v273
  %1383 = vmatpush.msra.mxu0 %v268
  %1384 = vmatpush.msra.mxu0 %v263
  %1385 = vmatpush.msra.mxu0 %v258
  %1386 = vmatpush.msra.mxu0 %v253
  %1387 = vmatpush.msra.mxu0 %v248
  %1388 = vmatpush.msra.mxu0 %v243
  %1389 = vmatpush.msra.mxu0 %v238
  %1390 = vmatpush.msra.mxu0 %v233
  %1391 = vmatpush.msra.mxu0 %v228
  %1392 = vmatpush.msra.mxu0 %v223
  %1393 = vmatpush.msra.mxu0 %v218
  %1394 = vmatpush.msra.mxu0 %v213
  %1395 = vmatpush.msra.mxu0 %v208
  %1396 = vmatmul.f32.gmra.mxu0 %v34
  %v1397 = vpop.f32.mrf.mxu0
  %v1398 = vadd.f32 %v1378, %v1397
  %1399 = vdwg.mxu0
  %1400 = vmatpush.msra.mxu0 %v363
  %1401 = vmatpush.msra.mxu0 %v358
  %1402 = vmatpush.msra.mxu0 %v353
  %1403 = vmatpush.msra.mxu0 %v348
  %1404 = vmatpush.msra.mxu0 %v343
  %1405 = vmatpush.msra.mxu0 %v338
  %1406 = vmatpush.msra.mxu0 %v333
  %1407 = vmatpush.msra.mxu0 %v328
  %1408 = vmatpush.msra.mxu0 %v323
  %1409 = vmatpush.msra.mxu0 %v318
  %1410 = vmatpush.msra.mxu0 %v313
  %1411 = vmatpush.msra.mxu0 %v308
  %1412 = vmatpush.msra.mxu0 %v303
  %1413 = vmatpush.msra.mxu0 %v298
  %1414 = vmatpush.msra.mxu0 %v293
  %1415 = vmatpush.msra.mxu0 %v288
  %1416 = vmatmul.f32.gmra.mxu0 %v35
  %v1417 = vpop.f32.mrf.mxu0
  %v1418 = vadd.f32 %v1398, %v1417
  %1419 = vdwg.mxu0
  %1420 = vmatpush.msra.mxu0 %v443
  %1421 = vmatpush.msra.mxu0 %v438
  %1422 = vmatpush.msra.mxu0 %v433
  %1423 = vmatpush.msra.mxu0 %v428
  %1424 = vmatpush.msra.mxu0 %v423
  %1425 = vmatpush.msra.mxu0 %v418
  %1426 = vmatpush.msra.mxu0 %v413
  %1427 = vmatpush.msra.mxu0 %v408
  %1428 = vmatpush.msra.mxu0 %v403
  %1429 = vmatpush.msra.mxu0 %v398
  %1430 = vmatpush.msra.mxu0 %v393
  %1431 = vmatpush.msra.mxu0 %v388
  %1432 = vmatpush.msra.mxu0 %v383
  %1433 = vmatpush.msra.mxu0 %v378
  %1434 = vmatpush.msra.mxu0 %v373
  %1435 = vmatpush.msra.mxu0 %v368
  %1436 = vmatmul.f32.gmra.mxu0 %v36
  %v1437 = vpop.f32.mrf.mxu0
  %v1438 = vadd.f32 %v1418, %v1437
  %1439 = vdwg.mxu0
  %1440 = vmatpush.msra.mxu0 %v523
  %1441 = vmatpush.msra.mxu0 %v518
  %1442 = vmatpush.msra.mxu0 %v513
  %1443 = vmatpush.msra.mxu0 %v508
  %1444 = vmatpush.msra.mxu0 %v503
  %1445 = vmatpush.msra.mxu0 %v498
  %1446 = vmatpush.msra.mxu0 %v493
  %1447 = vmatpush.msra.mxu0 %v488
  %1448 = vmatpush.msra.mxu0 %v483
  %1449 = vmatpush.msra.mxu0 %v478
  %1450 = vmatpush.msra.mxu0 %v473
  %1451 = vmatpush.msra.mxu0 %v468
  %1452 = vmatpush.msra.mxu0 %v463
  %1453 = vmatpush.msra.mxu0 %v458
  %1454 = vmatpush.msra.mxu0 %v453
  %1455 = vmatpush.msra.mxu0 %v448
  %1456 = vmatmul.f32.gmra.mxu0 %v37
  %v1457 = vpop.f32.mrf.mxu0
  %v1458 = vadd.f32 %v1438, %v1457
  %1459 = vdwg.mxu0
  %1460 = vmatpush.msra.mxu0 %v603
  %1461 = vmatpush.msra.mxu0 %v598
  %1462 = vmatpush.msra.mxu0 %v593
  %1463 = vmatpush.msra.mxu0 %v588
  %1464 = vmatpush.msra.mxu0 %v583
  %1465 = vmatpush.msra.mxu0 %v578
  %1466 = vmatpush.msra.mxu0 %v573
  %1467 = vmatpush.msra.mxu0 %v568
  %1468 = vmatpush.msra.mxu0 %v563
  %1469 = vmatpush.msra.mxu0 %v558
  %1470 = vmatpush.msra.mxu0 %v553
  %1471 = vmatpush.msra.mxu0 %v548
  %1472 = vmatpush.msra.mxu0 %v543
  %1473 = vmatpush.msra.mxu0 %v538
  %1474 = vmatpush.msra.mxu0 %v533
  %1475 = vmatpush.msra.mxu0 %v528
  %1476 = vmatmul.f32.gmra.mxu0 %v38
  %v1477 = vpop.f32.mrf.mxu0
  %v1478 = vadd.f32 %v1458, %v1477
  %1479 = vdwg.mxu0
  %1480 = vmatpush.msra.mxu0 %v683
  %1481 = vmatpush.msra.mxu0 %v678
  %1482 = vmatpush.msra.mxu0 %v673
  %1483 = vmatpush.msra.mxu0 %v668
  %1484 = vmatpush.msra.mxu0 %v663
  %1485 = vmatpush.msra.mxu0 %v658
  %1486 = vmatpush.msra.mxu0 %v653
  %1487 = vmatpush.msra.mxu0 %v648
  %1488 = vmatpush.msra.mxu0 %v643
  %1489 = vmatpush.msra.mxu0 %v638
  %1490 = vmatpush.msra.mxu0 %v633
  %1491 = vmatpush.msra.mxu0 %v628
  %1492 = vmatpush.msra.mxu0 %v623
  %1493 = vmatpush.msra.mxu0 %v618
  %1494 = vmatpush.msra.mxu0 %v613
  %1495 = vmatpush.msra.mxu0 %v608
  %1496 = vmatmul.f32.gmra.mxu0 %v39
  %v1497 = vpop.f32.mrf.mxu0
  %v1498 = vadd.f32 %v1478, %v1497
  %1499 = vdwg.mxu0
  %1500 = vmatpush.msra.mxu0 %v763
  %1501 = vmatpush.msra.mxu0 %v758
  %1502 = vmatpush.msra.mxu0 %v753
  %1503 = vmatpush.msra.mxu0 %v748
  %1504 = vmatpush.msra.mxu0 %v743
  %1505 = vmatpush.msra.mxu0 %v738
  %1506 = vmatpush.msra.mxu0 %v733
  %1507 = vmatpush.msra.mxu0 %v728
  %1508 = vmatpush.msra.mxu0 %v723
  %1509 = vmatpush.msra.mxu0 %v718
  %1510 = vmatpush.msra.mxu0 %v713
  %1511 = vmatpush.msra.mxu0 %v708
  %1512 = vmatpush.msra.mxu0 %v703
  %1513 = vmatpush.msra.mxu0 %v698
  %1514 = vmatpush.msra.mxu0 %v693
  %1515 = vmatpush.msra.mxu0 %v688
  %1516 = vmatmul.f32.gmra.mxu0 %v40
  %v1517 = vpop.f32.mrf.mxu0
  %v1518 = vadd.f32 %v1498, %v1517
  %1519 = vdwg.mxu0
  %1520 = vmatpush.msra.mxu0 %v843
  %1521 = vmatpush.msra.mxu0 %v838
  %1522 = vmatpush.msra.mxu0 %v833
  %1523 = vmatpush.msra.mxu0 %v828
  %1524 = vmatpush.msra.mxu0 %v823
  %1525 = vmatpush.msra.mxu0 %v818
  %1526 = vmatpush.msra.mxu0 %v813
  %1527 = vmatpush.msra.mxu0 %v808
  %1528 = vmatpush.msra.mxu0 %v803
  %1529 = vmatpush.msra.mxu0 %v798
  %1530 = vmatpush.msra.mxu0 %v793
  %1531 = vmatpush.msra.mxu0 %v788
  %1532 = vmatpush.msra.mxu0 %v783
  %1533 = vmatpush.msra.mxu0 %v778
  %1534 = vmatpush.msra.mxu0 %v773
  %1535 = vmatpush.msra.mxu0 %v768
  %1536 = vmatmul.f32.gmra.mxu0 %v41
  %v1537 = vpop.f32.mrf.mxu0
  %v1538 = vadd.f32 %v1518, %v1537
  %1539 = vdwg.mxu0
  %1540 = vmatpush.msra.mxu0 %v923
  %1541 = vmatpush.msra.mxu0 %v918
  %1542 = vmatpush.msra.mxu0 %v913
  %1543 = vmatpush.msra.mxu0 %v908
  %1544 = vmatpush.msra.mxu0 %v903
  %1545 = vmatpush.msra.mxu0 %v898
  %1546 = vmatpush.msra.mxu0 %v893
  %1547 = vmatpush.msra.mxu0 %v888
  %1548 = vmatpush.msra.mxu0 %v883
  %1549 = vmatpush.msra.mxu0 %v878
  %1550 = vmatpush.msra.mxu0 %v873
  %1551 = vmatpush.msra.mxu0 %v868
  %1552 = vmatpush.msra.mxu0 %v863
  %1553 = vmatpush.msra.mxu0 %v858
  %1554 = vmatpush.msra.mxu0 %v853
  %1555 = vmatpush.msra.mxu0 %v848
  %1556 = vmatmul.f32.gmra.mxu0 %v42
  %v1557 = vpop.f32.mrf.mxu0
  %v1558 = vadd.f32 %v1538, %v1557
  %1559 = vdwg.mxu0
  %1560 = vmatpush.msra.mxu0 %v1003
  %1561 = vmatpush.msra.mxu0 %v998
  %1562 = vmatpush.msra.mxu0 %v993
  %1563 = vmatpush.msra.mxu0 %v988
  %1564 = vmatpush.msra.mxu0 %v983
  %1565 = vmatpush.msra.mxu0 %v978
  %1566 = vmatpush.msra.mxu0 %v973
  %1567 = vmatpush.msra.mxu0 %v968
  %1568 = vmatpush.msra.mxu0 %v963
  %1569 = vmatpush.msra.mxu0 %v958
  %1570 = vmatpush.msra.mxu0 %v953
  %1571 = vmatpush.msra.mxu0 %v948
  %1572 = vmatpush.msra.mxu0 %v943
  %1573 = vmatpush.msra.mxu0 %v938
  %1574 = vmatpush.msra.mxu0 %v933
  %1575 = vmatpush.msra.mxu0 %v928
  %1576 = vmatmul.f32.gmra.mxu0 %v43
  %v1577 = vpop.f32.mrf.mxu0
  %v1578 = vadd.f32 %v1558, %v1577
  %1579 = vdwg.mxu0
  %1580 = vmatpush.msra.mxu0 %v1083
  %1581 = vmatpush.msra.mxu0 %v1078
  %1582 = vmatpush.msra.mxu0 %v1073
  %1583 = vmatpush.msra.mxu0 %v1068
  %1584 = vmatpush.msra.mxu0 %v1063
  %1585 = vmatpush.msra.mxu0 %v1058
  %1586 = vmatpush.msra.mxu0 %v1053
  %1587 = vmatpush.msra.mxu0 %v1048
  %1588 = vmatpush.msra.mxu0 %v1043
  %1589 = vmatpush.msra.mxu0 %v1038
  %1590 = vmatpush.msra.mxu0 %v1033
  %1591 = vmatpush.msra.mxu0 %v1028
  %1592 = vmatpush.msra.mxu0 %v1023
  %1593 = vmatpush.msra.mxu0 %v1018
  %1594 = vmatpush.msra.mxu0 %v1013
  %1595 = vmatpush.msra.mxu0 %v1008
  %1596 = vmatmul.f32.gmra.mxu0 %v44
  %v1597 = vpop.f32.mrf.mxu0
  %v1598 = vadd.f32 %v1578, %v1597
  %1599 = vdwg.mxu0
  %1600 = vmatpush.msra.mxu0 %v1163
  %1601 = vmatpush.msra.mxu0 %v1158
  %1602 = vmatpush.msra.mxu0 %v1153
  %1603 = vmatpush.msra.mxu0 %v1148
  %1604 = vmatpush.msra.mxu0 %v1143
  %1605 = vmatpush.msra.mxu0 %v1138
  %1606 = vmatpush.msra.mxu0 %v1133
  %1607 = vmatpush.msra.mxu0 %v1128
  %1608 = vmatpush.msra.mxu0 %v1123
  %1609 = vmatpush.msra.mxu0 %v1118
  %1610 = vmatpush.msra.mxu0 %v1113
  %1611 = vmatpush.msra.mxu0 %v1108
  %1612 = vmatpush.msra.mxu0 %v1103
  %1613 = vmatpush.msra.mxu0 %v1098
  %1614 = vmatpush.msra.mxu0 %v1093
  %1615 = vmatpush.msra.mxu0 %v1088
  %1616 = vmatmul.f32.gmra.mxu0 %v45
  %v1617 = vpop.f32.mrf.mxu0
  %v1618 = vadd.f32 %v1598, %v1617
  %1619 = vdwg.mxu0
  %1620 = vmatpush.msra.mxu0 %v1243
  %1621 = vmatpush.msra.mxu0 %v1238
  %1622 = vmatpush.msra.mxu0 %v1233
  %1623 = vmatpush.msra.mxu0 %v1228
  %1624 = vmatpush.msra.mxu0 %v1223
  %1625 = vmatpush.msra.mxu0 %v1218
  %1626 = vmatpush.msra.mxu0 %v1213
  %1627 = vmatpush.msra.mxu0 %v1208
  %1628 = vmatpush.msra.mxu0 %v1203
  %1629 = vmatpush.msra.mxu0 %v1198
  %1630 = vmatpush.msra.mxu0 %v1193
  %1631 = vmatpush.msra.mxu0 %v1188
  %1632 = vmatpush.msra.mxu0 %v1183
  %1633 = vmatpush.msra.mxu0 %v1178
  %1634 = vmatpush.msra.mxu0 %v1173
  %1635 = vmatpush.msra.mxu0 %v1168
  %1636 = vmatmul.f32.gmra.mxu0 %v46
  %v1637 = vpop.f32.mrf.mxu0
  %v1638 = vadd.f32 %v1618, %v1637
  %1639 = vdwg.mxu0
  %1640 = vmatpush.msra.mxu0 %v1323
  %1641 = vmatpush.msra.mxu0 %v1318
  %1642 = vmatpush.msra.mxu0 %v1313
  %1643 = vmatpush.msra.mxu0 %v1308
  %1644 = vmatpush.msra.mxu0 %v1303
  %1645 = vmatpush.msra.mxu0 %v1298
  %1646 = vmatpush.msra.mxu0 %v1293
  %1647 = vmatpush.msra.mxu0 %v1288
  %1648 = vmatpush.msra.mxu0 %v1283
  %1649 = vmatpush.msra.mxu0 %v1278
  %1650 = vmatpush.msra.mxu0 %v1273
  %1651 = vmatpush.msra.mxu0 %v1268
  %1652 = vmatpush.msra.mxu0 %v1263
  %1653 = vmatpush.msra.mxu0 %v1258
  %1654 = vmatpush.msra.mxu0 %v1253
  %1655 = vmatpush.msra.mxu0 %v1248
  %1656 = vmatmul.f32.gmra.mxu0 %v47
  %v1657 = vpop.f32.mrf.mxu0
  %v1658 = vadd.f32 %v1638, %v1657
  %1659 = vdwg.mxu0
  %1660 = vmatpush.msra.mxu0 %v124
  %1661 = vmatpush.msra.mxu0 %v119
  %1662 = vmatpush.msra.mxu0 %v114
  %1663 = vmatpush.msra.mxu0 %v109
  %1664 = vmatpush.msra.mxu0 %v104
  %1665 = vmatpush.msra.mxu0 %v99
  %1666 = vmatpush.msra.mxu0 %v94
  %1667 = vmatpush.msra.mxu0 %v89
  %1668 = vmatpush.msra.mxu0 %v84
  %1669 = vmatpush.msra.mxu0 %v79
  %1670 = vmatpush.msra.mxu0 %v74
  %1671 = vmatpush.msra.mxu0 %v69
  %1672 = vmatpush.msra.mxu0 %v64
  %1673 = vmatpush.msra.mxu0 %v59
  %1674 = vmatpush.msra.mxu0 %v54
  %1675 = vmatpush.msra.mxu0 %v49
  %1676 = vmatmul.f32.gmra.mxu0 %v32
  %v1677 = vpop.f32.mrf.mxu0
  %v1678 = vadd.f32 %v1331, %v1677
  %1679 = vdwg.mxu0
  %1680 = vmatpush.msra.mxu0 %v204
  %1681 = vmatpush.msra.mxu0 %v199
  %1682 = vmatpush.msra.mxu0 %v194
  %1683 = vmatpush.msra.mxu0 %v189
  %1684 = vmatpush.msra.mxu0 %v184
  %1685 = vmatpush.msra.mxu0 %v179
  %1686 = vmatpush.msra.mxu0 %v174
  %1687 = vmatpush.msra.mxu0 %v169
  %1688 = vmatpush.msra.mxu0 %v164
  %1689 = vmatpush.msra.mxu0 %v159
  %1690 = vmatpush.msra.mxu0 %v154
  %1691 = vmatpush.msra.mxu0 %v149
  %1692 = vmatpush.msra.mxu0 %v144
  %1693 = vmatpush.msra.mxu0 %v139
  %1694 = vmatpush.msra.mxu0 %v134
  %1695 = vmatpush.msra.mxu0 %v129
  %1696 = vmatmul.f32.gmra.mxu0 %v33
  %v1697 = vpop.f32.mrf.mxu0
  %v1698 = vadd.f32 %v1678, %v1697
  %1699 = vdwg.mxu0
  %1700 = vmatpush.msra.mxu0 %v284
  %1701 = vmatpush.msra.mxu0 %v279
  %1702 = vmatpush.msra.mxu0 %v274
  %1703 = vmatpush.msra.mxu0 %v269
  %1704 = vmatpush.msra.mxu0 %v264
  %1705 = vmatpush.msra.mxu0 %v259
  %1706 = vmatpush.msra.mxu0 %v254
  %1707 = vmatpush.msra.mxu0 %v249
  %1708 = vmatpush.msra.mxu0 %v244
  %1709 = vmatpush.msra.mxu0 %v239
  %1710 = vmatpush.msra.mxu0 %v234
  %1711 = vmatpush.msra.mxu0 %v229
  %1712 = vmatpush.msra.mxu0 %v224
  %1713 = vmatpush.msra.mxu0 %v219
  %1714 = vmatpush.msra.mxu0 %v214
  %1715 = vmatpush.msra.mxu0 %v209
  %1716 = vmatmul.f32.gmra.mxu0 %v34
  %v1717 = vpop.f32.mrf.mxu0
  %v1718 = vadd.f32 %v1698, %v1717
  %1719 = vdwg.mxu0
  %1720 = vmatpush.msra.mxu0 %v364
  %1721 = vmatpush.msra.mxu0 %v359
  %1722 = vmatpush.msra.mxu0 %v354
  %1723 = vmatpush.msra.mxu0 %v349
  %1724 = vmatpush.msra.mxu0 %v344
  %1725 = vmatpush.msra.mxu0 %v339
  %1726 = vmatpush.msra.mxu0 %v334
  %1727 = vmatpush.msra.mxu0 %v329
  %1728 = vmatpush.msra.mxu0 %v324
  %1729 = vmatpush.msra.mxu0 %v319
  %1730 = vmatpush.msra.mxu0 %v314
  %1731 = vmatpush.msra.mxu0 %v309
  %1732 = vmatpush.msra.mxu0 %v304
  %1733 = vmatpush.msra.mxu0 %v299
  %1734 = vmatpush.msra.mxu0 %v294
  %1735 = vmatpush.msra.mxu0 %v289
  %1736 = vmatmul.f32.gmra.mxu0 %v35
  %v1737 = vpop.f32.mrf.mxu0
  %v1738 = vadd.f32 %v1718, %v1737
  %1739 = vdwg.mxu0
  %1740 = vmatpush.msra.mxu0 %v444
  %1741 = vmatpush.msra.mxu0 %v439
  %1742 = vmatpush.msra.mxu0 %v434
  %1743 = vmatpush.msra.mxu0 %v429
  %1744 = vmatpush.msra.mxu0 %v424
  %1745 = vmatpush.msra.mxu0 %v419
  %1746 = vmatpush.msra.mxu0 %v414
  %1747 = vmatpush.msra.mxu0 %v409
  %1748 = vmatpush.msra.mxu0 %v404
  %1749 = vmatpush.msra.mxu0 %v399
  %1750 = vmatpush.msra.mxu0 %v394
  %1751 = vmatpush.msra.mxu0 %v389
  %1752 = vmatpush.msra.mxu0 %v384
  %1753 = vmatpush.msra.mxu0 %v379
  %1754 = vmatpush.msra.mxu0 %v374
  %1755 = vmatpush.msra.mxu0 %v369
  %1756 = vmatmul.f32.gmra.mxu0 %v36
  %v1757 = vpop.f32.mrf.mxu0
  %v1758 = vadd.f32 %v1738, %v1757
  %1759 = vdwg.mxu0
  %1760 = vmatpush.msra.mxu0 %v524
  %1761 = vmatpush.msra.mxu0 %v519
  %1762 = vmatpush.msra.mxu0 %v514
  %1763 = vmatpush.msra.mxu0 %v509
  %1764 = vmatpush.msra.mxu0 %v504
  %1765 = vmatpush.msra.mxu0 %v499
  %1766 = vmatpush.msra.mxu0 %v494
  %1767 = vmatpush.msra.mxu0 %v489
  %1768 = vmatpush.msra.mxu0 %v484
  %1769 = vmatpush.msra.mxu0 %v479
  %1770 = vmatpush.msra.mxu0 %v474
  %1771 = vmatpush.msra.mxu0 %v469
  %1772 = vmatpush.msra.mxu0 %v464
  %1773 = vmatpush.msra.mxu0 %v459
  %1774 = vmatpush.msra.mxu0 %v454
  %1775 = vmatpush.msra.mxu0 %v449
  %1776 = vmatmul.f32.gmra.mxu0 %v37
  %v1777 = vpop.f32.mrf.mxu0
  %v1778 = vadd.f32 %v1758, %v1777
  %1779 = vdwg.mxu0
  %1780 = vmatpush.msra.mxu0 %v604
  %1781 = vmatpush.msra.mxu0 %v599
  %1782 = vmatpush.msra.mxu0 %v594
  %1783 = vmatpush.msra.mxu0 %v589
  %1784 = vmatpush.msra.mxu0 %v584
  %1785 = vmatpush.msra.mxu0 %v579
  %1786 = vmatpush.msra.mxu0 %v574
  %1787 = vmatpush.msra.mxu0 %v569
  %1788 = vmatpush.msra.mxu0 %v564
  %1789 = vmatpush.msra.mxu0 %v559
  %1790 = vmatpush.msra.mxu0 %v554
  %1791 = vmatpush.msra.mxu0 %v549
  %1792 = vmatpush.msra.mxu0 %v544
  %1793 = vmatpush.msra.mxu0 %v539
  %1794 = vmatpush.msra.mxu0 %v534
  %1795 = vmatpush.msra.mxu0 %v529
  %1796 = vmatmul.f32.gmra.mxu0 %v38
  %v1797 = vpop.f32.mrf.mxu0
  %v1798 = vadd.f32 %v1778, %v1797
  %1799 = vdwg.mxu0
  %1800 = vmatpush.msra.mxu0 %v684
  %1801 = vmatpush.msra.mxu0 %v679
  %1802 = vmatpush.msra.mxu0 %v674
  %1803 = vmatpush.msra.mxu0 %v669
  %1804 = vmatpush.msra.mxu0 %v664
  %1805 = vmatpush.msra.mxu0 %v659
  %1806 = vmatpush.msra.mxu0 %v654
  %1807 = vmatpush.msra.mxu0 %v649
  %1808 = vmatpush.msra.mxu0 %v644
  %1809 = vmatpush.msra.mxu0 %v639
  %1810 = vmatpush.msra.mxu0 %v634
  %1811 = vmatpush.msra.mxu0 %v629
  %1812 = vmatpush.msra.mxu0 %v624
  %1813 = vmatpush.msra.mxu0 %v619
  %1814 = vmatpush.msra.mxu0 %v614
  %1815 = vmatpush.msra.mxu0 %v609
  %1816 = vmatmul.f32.gmra.mxu0 %v39
  %v1817 = vpop.f32.mrf.mxu0
  %v1818 = vadd.f32 %v1798, %v1817
  %1819 = vdwg.mxu0
  %1820 = vmatpush.msra.mxu0 %v764
  %1821 = vmatpush.msra.mxu0 %v759
  %1822 = vmatpush.msra.mxu0 %v754
  %1823 = vmatpush.msra.mxu0 %v749
  %1824 = vmatpush.msra.mxu0 %v744
  %1825 = vmatpush.msra.mxu0 %v739
  %1826 = vmatpush.msra.mxu0 %v734
  %1827 = vmatpush.msra.mxu0 %v729
  %1828 = vmatpush.msra.mxu0 %v724
  %1829 = vmatpush.msra.mxu0 %v719
  %1830 = vmatpush.msra.mxu0 %v714
  %1831 = vmatpush.msra.mxu0 %v709
  %1832 = vmatpush.msra.mxu0 %v704
  %1833 = vmatpush.msra.mxu0 %v699
  %1834 = vmatpush.msra.mxu0 %v694
  %1835 = vmatpush.msra.mxu0 %v689
  %1836 = vmatmul.f32.gmra.mxu0 %v40
  %v1837 = vpop.f32.mrf.mxu0
  %v1838 = vadd.f32 %v1818, %v1837
  %1839 = vdwg.mxu0
  %1840 = vmatpush.msra.mxu0 %v844
  %1841 = vmatpush.msra.mxu0 %v839
  %1842 = vmatpush.msra.mxu0 %v834
  %1843 = vmatpush.msra.mxu0 %v829
  %1844 = vmatpush.msra.mxu0 %v824
  %1845 = vmatpush.msra.mxu0 %v819
  %1846 = vmatpush.msra.mxu0 %v814
  %1847 = vmatpush.msra.mxu0 %v809
  %1848 = vmatpush.msra.mxu0 %v804
  %1849 = vmatpush.msra.mxu0 %v799
  %1850 = vmatpush.msra.mxu0 %v794
  %1851 = vmatpush.msra.mxu0 %v789
  %1852 = vmatpush.msra.mxu0 %v784
  %1853 = vmatpush.msra.mxu0 %v779
  %1854 = vmatpush.msra.mxu0 %v774
  %1855 = vmatpush.msra.mxu0 %v769
  %1856 = vmatmul.f32.gmra.mxu0 %v41
  %v1857 = vpop.f32.mrf.mxu0
  %v1858 = vadd.f32 %v1838, %v1857
  %1859 = vdwg.mxu0
  %1860 = vmatpush.msra.mxu0 %v924
  %1861 = vmatpush.msra.mxu0 %v919
  %1862 = vmatpush.msra.mxu0 %v914
  %1863 = vmatpush.msra.mxu0 %v909
  %1864 = vmatpush.msra.mxu0 %v904
  %1865 = vmatpush.msra.mxu0 %v899
  %1866 = vmatpush.msra.mxu0 %v894
  %1867 = vmatpush.msra.mxu0 %v889
  %1868 = vmatpush.msra.mxu0 %v884
  %1869 = vmatpush.msra.mxu0 %v879
  %1870 = vmatpush.msra.mxu0 %v874
  %1871 = vmatpush.msra.mxu0 %v869
  %1872 = vmatpush.msra.mxu0 %v864
  %1873 = vmatpush.msra.mxu0 %v859
  %1874 = vmatpush.msra.mxu0 %v854
  %1875 = vmatpush.msra.mxu0 %v849
  %1876 = vmatmul.f32.gmra.mxu0 %v42
  %v1877 = vpop.f32.mrf.mxu0
  %v1878 = vadd.f32 %v1858, %v1877
  %1879 = vdwg.mxu0
  %1880 = vmatpush.msra.mxu0 %v1004
  %1881 = vmatpush.msra.mxu0 %v999
  %1882 = vmatpush.msra.mxu0 %v994
  %1883 = vmatpush.msra.mxu0 %v989
  %1884 = vmatpush.msra.mxu0 %v984
  %1885 = vmatpush.msra.mxu0 %v979
  %1886 = vmatpush.msra.mxu0 %v974
  %1887 = vmatpush.msra.mxu0 %v969
  %1888 = vmatpush.msra.mxu0 %v964
  %1889 = vmatpush.msra.mxu0 %v959
  %1890 = vmatpush.msra.mxu0 %v954
  %1891 = vmatpush.msra.mxu0 %v949
  %1892 = vmatpush.msra.mxu0 %v944
  %1893 = vmatpush.msra.mxu0 %v939
  %1894 = vmatpush.msra.mxu0 %v934
  %1895 = vmatpush.msra.mxu0 %v929
  %1896 = vmatmul.f32.gmra.mxu0 %v43
  %v1897 = vpop.f32.mrf.mxu0
  %v1898 = vadd.f32 %v1878, %v1897
  %1899 = vdwg.mxu0
  %1900 = vmatpush.msra.mxu0 %v1084
  %1901 = vmatpush.msra.mxu0 %v1079
  %1902 = vmatpush.msra.mxu0 %v1074
  %1903 = vmatpush.msra.mxu0 %v1069
  %1904 = vmatpush.msra.mxu0 %v1064
  %1905 = vmatpush.msra.mxu0 %v1059
  %1906 = vmatpush.msra.mxu0 %v1054
  %1907 = vmatpush.msra.mxu0 %v1049
  %1908 = vmatpush.msra.mxu0 %v1044
  %1909 = vmatpush.msra.mxu0 %v1039
  %1910 = vmatpush.msra.mxu0 %v1034
  %1911 = vmatpush.msra.mxu0 %v1029
  %1912 = vmatpush.msra.mxu0 %v1024
  %1913 = vmatpush.msra.mxu0 %v1019
  %1914 = vmatpush.msra.mxu0 %v1014
  %1915 = vmatpush.msra.mxu0 %v1009
  %1916 = vmatmul.f32.gmra.mxu0 %v44
  %v1917 = vpop.f32.mrf.mxu0
  %v1918 = vadd.f32 %v1898, %v1917
  %1919 = vdwg.mxu0
  %1920 = vmatpush.msra.mxu0 %v1164
  %1921 = vmatpush.msra.mxu0 %v1159
  %1922 = vmatpush.msra.mxu0 %v1154
  %1923 = vmatpush.msra.mxu0 %v1149
  %1924 = vmatpush.msra.mxu0 %v1144
  %1925 = vmatpush.msra.mxu0 %v1139
  %1926 = vmatpush.msra.mxu0 %v1134
  %1927 = vmatpush.msra.mxu0 %v1129
  %1928 = vmatpush.msra.mxu0 %v1124
  %1929 = vmatpush.msra.mxu0 %v1119
  %1930 = vmatpush.msra.mxu0 %v1114
  %1931 = vmatpush.msra.mxu0 %v1109
  %1932 = vmatpush.msra.mxu0 %v1104
  %1933 = vmatpush.msra.mxu0 %v1099
  %1934 = vmatpush.msra.mxu0 %v1094
  %1935 = vmatpush.msra.mxu0 %v1089
  %1936 = vmatmul.f32.gmra.mxu0 %v45
  %v1937 = vpop.f32.mrf.mxu0
  %v1938 = vadd.f32 %v1918, %v1937
  %1939 = vdwg.mxu0
  %1940 = vmatpush.msra.mxu0 %v1244
  %1941 = vmatpush.msra.mxu0 %v1239
  %1942 = vmatpush.msra.mxu0 %v1234
  %1943 = vmatpush.msra.mxu0 %v1229
  %1944 = vmatpush.msra.mxu0 %v1224
  %1945 = vmatpush.msra.mxu0 %v1219
  %1946 = vmatpush.msra.mxu0 %v1214
  %1947 = vmatpush.msra.mxu0 %v1209
  %1948 = vmatpush.msra.mxu0 %v1204
  %1949 = vmatpush.msra.mxu0 %v1199
  %1950 = vmatpush.msra.mxu0 %v1194
  %1951 = vmatpush.msra.mxu0 %v1189
  %1952 = vmatpush.msra.mxu0 %v1184
  %1953 = vmatpush.msra.mxu0 %v1179
  %1954 = vmatpush.msra.mxu0 %v1174
  %1955 = vmatpush.msra.mxu0 %v1169
  %1956 = vmatmul.f32.gmra.mxu0 %v46
  %v1957 = vpop.f32.mrf.mxu0
  %v1958 = vadd.f32 %v1938, %v1957
  %1959 = vdwg.mxu0
  %1960 = vmatpush.msra.mxu0 %v1324
  %1961 = vmatpush.msra.mxu0 %v1319
  %1962 = vmatpush.msra.mxu0 %v1314
  %1963 = vmatpush.msra.mxu0 %v1309
  %1964 = vmatpush.msra.mxu0 %v1304
  %1965 = vmatpush.msra.mxu0 %v1299
  %1966 = vmatpush.msra.mxu0 %v1294
  %1967 = vmatpush.msra.mxu0 %v1289
  %1968 = vmatpush.msra.mxu0 %v1284
  %1969 = vmatpush.msra.mxu0 %v1279
  %1970 = vmatpush.msra.mxu0 %v1274
  %1971 = vmatpush.msra.mxu0 %v1269
  %1972 = vmatpush.msra.mxu0 %v1264
  %1973 = vmatpush.msra.mxu0 %v1259
  %1974 = vmatpush.msra.mxu0 %v1254
  %1975 = vmatpush.msra.mxu0 %v1249
  %1976 = vmatmul.f32.gmra.mxu0 %v47
  %v1977 = vpop.f32.mrf.mxu0
  %v1978 = vadd.f32 %v1958, %v1977
  %1979 = vdwg.mxu0
  %1980 = vmatpush.msra.mxu0 %v125
  %1981 = vmatpush.msra.mxu0 %v120
  %1982 = vmatpush.msra.mxu0 %v115
  %1983 = vmatpush.msra.mxu0 %v110
  %1984 = vmatpush.msra.mxu0 %v105
  %1985 = vmatpush.msra.mxu0 %v100
  %1986 = vmatpush.msra.mxu0 %v95
  %1987 = vmatpush.msra.mxu0 %v90
  %1988 = vmatpush.msra.mxu0 %v85
  %1989 = vmatpush.msra.mxu0 %v80
  %1990 = vmatpush.msra.mxu0 %v75
  %1991 = vmatpush.msra.mxu0 %v70
  %1992 = vmatpush.msra.mxu0 %v65
  %1993 = vmatpush.msra.mxu0 %v60
  %1994 = vmatpush.msra.mxu0 %v55
  %1995 = vmatpush.msra.mxu0 %v50
  %1996 = vmatmul.f32.gmra.mxu0 %v32
  %v1997 = vpop.f32.mrf.mxu0
  %v1998 = vadd.f32 %v1332, %v1997
  %1999 = vdwg.mxu0
  %2000 = vmatpush.msra.mxu0 %v205
  %2001 = vmatpush.msra.mxu0 %v200
  %2002 = vmatpush.msra.mxu0 %v195
  %2003 = vmatpush.msra.mxu0 %v190
  %2004 = vmatpush.msra.mxu0 %v185
  %2005 = vmatpush.msra.mxu0 %v180
  %2006 = vmatpush.msra.mxu0 %v175
  %2007 = vmatpush.msra.mxu0 %v170
  %2008 = vmatpush.msra.mxu0 %v165
  %2009 = vmatpush.msra.mxu0 %v160
  %2010 = vmatpush.msra.mxu0 %v155
  %2011 = vmatpush.msra.mxu0 %v150
  %2012 = vmatpush.msra.mxu0 %v145
  %2013 = vmatpush.msra.mxu0 %v140
  %2014 = vmatpush.msra.mxu0 %v135
  %2015 = vmatpush.msra.mxu0 %v130
  %2016 = vmatmul.f32.gmra.mxu0 %v33
  %v2017 = vpop.f32.mrf.mxu0
  %v2018 = vadd.f32 %v1998, %v2017
  %2019 = vdwg.mxu0
  %2020 = vmatpush.msra.mxu0 %v285
  %2021 = vmatpush.msra.mxu0 %v280
  %2022 = vmatpush.msra.mxu0 %v275
  %2023 = vmatpush.msra.mxu0 %v270
  %2024 = vmatpush.msra.mxu0 %v265
  %2025 = vmatpush.msra.mxu0 %v260
  %2026 = vmatpush.msra.mxu0 %v255
  %2027 = vmatpush.msra.mxu0 %v250
  %2028 = vmatpush.msra.mxu0 %v245
  %2029 = vmatpush.msra.mxu0 %v240
  %2030 = vmatpush.msra.mxu0 %v235
  %2031 = vmatpush.msra.mxu0 %v230
  %2032 = vmatpush.msra.mxu0 %v225
  %2033 = vmatpush.msra.mxu0 %v220
  %2034 = vmatpush.msra.mxu0 %v215
  %2035 = vmatpush.msra.mxu0 %v210
  %2036 = vmatmul.f32.gmra.mxu0 %v34
  %v2037 = vpop.f32.mrf.mxu0
  %v2038 = vadd.f32 %v2018, %v2037
  %2039 = vdwg.mxu0
  %2040 = vmatpush.msra.mxu0 %v365
  %2041 = vmatpush.msra.mxu0 %v360
  %2042 = vmatpush.msra.mxu0 %v355
  %2043 = vmatpush.msra.mxu0 %v350
  %2044 = vmatpush.msra.mxu0 %v345
  %2045 = vmatpush.msra.mxu0 %v340
  %2046 = vmatpush.msra.mxu0 %v335
  %2047 = vmatpush.msra.mxu0 %v330
  %2048 = vmatpush.msra.mxu0 %v325
  %2049 = vmatpush.msra.mxu0 %v320
  %2050 = vmatpush.msra.mxu0 %v315
  %2051 = vmatpush.msra.mxu0 %v310
  %2052 = vmatpush.msra.mxu0 %v305
  %2053 = vmatpush.msra.mxu0 %v300
  %2054 = vmatpush.msra.mxu0 %v295
  %2055 = vmatpush.msra.mxu0 %v290
  %2056 = vmatmul.f32.gmra.mxu0 %v35
  %v2057 = vpop.f32.mrf.mxu0
  %v2058 = vadd.f32 %v2038, %v2057
  %2059 = vdwg.mxu0
  %2060 = vmatpush.msra.mxu0 %v445
  %2061 = vmatpush.msra.mxu0 %v440
  %2062 = vmatpush.msra.mxu0 %v435
  %2063 = vmatpush.msra.mxu0 %v430
  %2064 = vmatpush.msra.mxu0 %v425
  %2065 = vmatpush.msra.mxu0 %v420
  %2066 = vmatpush.msra.mxu0 %v415
  %2067 = vmatpush.msra.mxu0 %v410
  %2068 = vmatpush.msra.mxu0 %v405
  %2069 = vmatpush.msra.mxu0 %v400
  %2070 = vmatpush.msra.mxu0 %v395
  %2071 = vmatpush.msra.mxu0 %v390
  %2072 = vmatpush.msra.mxu0 %v385
  %2073 = vmatpush.msra.mxu0 %v380
  %2074 = vmatpush.msra.mxu0 %v375
  %2075 = vmatpush.msra.mxu0 %v370
  %2076 = vmatmul.f32.gmra.mxu0 %v36
  %v2077 = vpop.f32.mrf.mxu0
  %v2078 = vadd.f32 %v2058, %v2077
  %2079 = vdwg.mxu0
  %2080 = vmatpush.msra.mxu0 %v525
  %2081 = vmatpush.msra.mxu0 %v520
  %2082 = vmatpush.msra.mxu0 %v515
  %2083 = vmatpush.msra.mxu0 %v510
  %2084 = vmatpush.msra.mxu0 %v505
  %2085 = vmatpush.msra.mxu0 %v500
  %2086 = vmatpush.msra.mxu0 %v495
  %2087 = vmatpush.msra.mxu0 %v490
  %2088 = vmatpush.msra.mxu0 %v485
  %2089 = vmatpush.msra.mxu0 %v480
  %2090 = vmatpush.msra.mxu0 %v475
  %2091 = vmatpush.msra.mxu0 %v470
  %2092 = vmatpush.msra.mxu0 %v465
  %2093 = vmatpush.msra.mxu0 %v460
  %2094 = vmatpush.msra.mxu0 %v455
  %2095 = vmatpush.msra.mxu0 %v450
  %2096 = vmatmul.f32.gmra.mxu0 %v37
  %v2097 = vpop.f32.mrf.mxu0
  %v2098 = vadd.f32 %v2078, %v2097
  %2099 = vdwg.mxu0
  %2100 = vmatpush.msra.mxu0 %v605
  %2101 = vmatpush.msra.mxu0 %v600
  %2102 = vmatpush.msra.mxu0 %v595
  %2103 = vmatpush.msra.mxu0 %v590
  %2104 = vmatpush.msra.mxu0 %v585
  %2105 = vmatpush.msra.mxu0 %v580
  %2106 = vmatpush.msra.mxu0 %v575
  %2107 = vmatpush.msra.mxu0 %v570
  %2108 = vmatpush.msra.mxu0 %v565
  %2109 = vmatpush.msra.mxu0 %v560
  %2110 = vmatpush.msra.mxu0 %v555
  %2111 = vmatpush.msra.mxu0 %v550
  %2112 = vmatpush.msra.mxu0 %v545
  %2113 = vmatpush.msra.mxu0 %v540
  %2114 = vmatpush.msra.mxu0 %v535
  %2115 = vmatpush.msra.mxu0 %v530
  %2116 = vmatmul.f32.gmra.mxu0 %v38
  %v2117 = vpop.f32.mrf.mxu0
  %v2118 = vadd.f32 %v2098, %v2117
  %2119 = vdwg.mxu0
  %2120 = vmatpush.msra.mxu0 %v685
  %2121 = vmatpush.msra.mxu0 %v680
  %2122 = vmatpush.msra.mxu0 %v675
  %2123 = vmatpush.msra.mxu0 %v670
  %2124 = vmatpush.msra.mxu0 %v665
  %2125 = vmatpush.msra.mxu0 %v660
  %2126 = vmatpush.msra.mxu0 %v655
  %2127 = vmatpush.msra.mxu0 %v650
  %2128 = vmatpush.msra.mxu0 %v645
  %2129 = vmatpush.msra.mxu0 %v640
  %2130 = vmatpush.msra.mxu0 %v635
  %2131 = vmatpush.msra.mxu0 %v630
  %2132 = vmatpush.msra.mxu0 %v625
  %2133 = vmatpush.msra.mxu0 %v620
  %2134 = vmatpush.msra.mxu0 %v615
  %2135 = vmatpush.msra.mxu0 %v610
  %2136 = vmatmul.f32.gmra.mxu0 %v39
  %v2137 = vpop.f32.mrf.mxu0
  %v2138 = vadd.f32 %v2118, %v2137
  %2139 = vdwg.mxu0
  %2140 = vmatpush.msra.mxu0 %v765
  %2141 = vmatpush.msra.mxu0 %v760
  %2142 = vmatpush.msra.mxu0 %v755
  %2143 = vmatpush.msra.mxu0 %v750
  %2144 = vmatpush.msra.mxu0 %v745
  %2145 = vmatpush.msra.mxu0 %v740
  %2146 = vmatpush.msra.mxu0 %v735
  %2147 = vmatpush.msra.mxu0 %v730
  %2148 = vmatpush.msra.mxu0 %v725
  %2149 = vmatpush.msra.mxu0 %v720
  %2150 = vmatpush.msra.mxu0 %v715
  %2151 = vmatpush.msra.mxu0 %v710
  %2152 = vmatpush.msra.mxu0 %v705
  %2153 = vmatpush.msra.mxu0 %v700
  %2154 = vmatpush.msra.mxu0 %v695
  %2155 = vmatpush.msra.mxu0 %v690
  %2156 = vmatmul.f32.gmra.mxu0 %v40
  %v2157 = vpop.f32.mrf.mxu0
  %v2158 = vadd.f32 %v2138, %v2157
  %2159 = vdwg.mxu0
  %2160 = vmatpush.msra.mxu0 %v845
  %2161 = vmatpush.msra.mxu0 %v840
  %2162 = vmatpush.msra.mxu0 %v835
  %2163 = vmatpush.msra.mxu0 %v830
  %2164 = vmatpush.msra.mxu0 %v825
  %2165 = vmatpush.msra.mxu0 %v820
  %2166 = vmatpush.msra.mxu0 %v815
  %2167 = vmatpush.msra.mxu0 %v810
  %2168 = vmatpush.msra.mxu0 %v805
  %2169 = vmatpush.msra.mxu0 %v800
  %2170 = vmatpush.msra.mxu0 %v795
  %2171 = vmatpush.msra.mxu0 %v790
  %2172 = vmatpush.msra.mxu0 %v785
  %2173 = vmatpush.msra.mxu0 %v780
  %2174 = vmatpush.msra.mxu0 %v775
  %2175 = vmatpush.msra.mxu0 %v770
  %2176 = vmatmul.f32.gmra.mxu0 %v41
  %v2177 = vpop.f32.mrf.mxu0
  %v2178 = vadd.f32 %v2158, %v2177
  %2179 = vdwg.mxu0
  %2180 = vmatpush.msra.mxu0 %v925
  %2181 = vmatpush.msra.mxu0 %v920
  %2182 = vmatpush.msra.mxu0 %v915
  %2183 = vmatpush.msra.mxu0 %v910
  %2184 = vmatpush.msra.mxu0 %v905
  %2185 = vmatpush.msra.mxu0 %v900
  %2186 = vmatpush.msra.mxu0 %v895
  %2187 = vmatpush.msra.mxu0 %v890
  %2188 = vmatpush.msra.mxu0 %v885
  %2189 = vmatpush.msra.mxu0 %v880
  %2190 = vmatpush.msra.mxu0 %v875
  %2191 = vmatpush.msra.mxu0 %v870
  %2192 = vmatpush.msra.mxu0 %v865
  %2193 = vmatpush.msra.mxu0 %v860
  %2194 = vmatpush.msra.mxu0 %v855
  %2195 = vmatpush.msra.mxu0 %v850
  %2196 = vmatmul.f32.gmra.mxu0 %v42
  %v2197 = vpop.f32.mrf.mxu0
  %v2198 = vadd.f32 %v2178, %v2197
  %2199 = vdwg.mxu0
  %2200 = vmatpush.msra.mxu0 %v1005
  %2201 = vmatpush.msra.mxu0 %v1000
  %2202 = vmatpush.msra.mxu0 %v995
  %2203 = vmatpush.msra.mxu0 %v990
  %2204 = vmatpush.msra.mxu0 %v985
  %2205 = vmatpush.msra.mxu0 %v980
  %2206 = vmatpush.msra.mxu0 %v975
  %2207 = vmatpush.msra.mxu0 %v970
  %2208 = vmatpush.msra.mxu0 %v965
  %2209 = vmatpush.msra.mxu0 %v960
  %2210 = vmatpush.msra.mxu0 %v955
  %2211 = vmatpush.msra.mxu0 %v950
  %2212 = vmatpush.msra.mxu0 %v945
  %2213 = vmatpush.msra.mxu0 %v940
  %2214 = vmatpush.msra.mxu0 %v935
  %2215 = vmatpush.msra.mxu0 %v930
  %2216 = vmatmul.f32.gmra.mxu0 %v43
  %v2217 = vpop.f32.mrf.mxu0
  %v2218 = vadd.f32 %v2198, %v2217
  %2219 = vdwg.mxu0
  %2220 = vmatpush.msra.mxu0 %v1085
  %2221 = vmatpush.msra.mxu0 %v1080
  %2222 = vmatpush.msra.mxu0 %v1075
  %2223 = vmatpush.msra.mxu0 %v1070
  %2224 = vmatpush.msra.mxu0 %v1065
  %2225 = vmatpush.msra.mxu0 %v1060
  %2226 = vmatpush.msra.mxu0 %v1055
  %2227 = vmatpush.msra.mxu0 %v1050
  %2228 = vmatpush.msra.mxu0 %v1045
  %2229 = vmatpush.msra.mxu0 %v1040
  %2230 = vmatpush.msra.mxu0 %v1035
  %2231 = vmatpush.msra.mxu0 %v1030
  %2232 = vmatpush.msra.mxu0 %v1025
  %2233 = vmatpush.msra.mxu0 %v1020
  %2234 = vmatpush.msra.mxu0 %v1015
  %2235 = vmatpush.msra.mxu0 %v1010
  %2236 = vmatmul.f32.gmra.mxu0 %v44
  %v2237 = vpop.f32.mrf.mxu0
  %v2238 = vadd.f32 %v2218, %v2237
  %2239 = vdwg.mxu0
  %2240 = vmatpush.msra.mxu0 %v1165
  %2241 = vmatpush.msra.mxu0 %v1160
  %2242 = vmatpush.msra.mxu0 %v1155
  %2243 = vmatpush.msra.mxu0 %v1150
  %2244 = vmatpush.msra.mxu0 %v1145
  %2245 = vmatpush.msra.mxu0 %v1140
  %2246 = vmatpush.msra.mxu0 %v1135
  %2247 = vmatpush.msra.mxu0 %v1130
  %2248 = vmatpush.msra.mxu0 %v1125
  %2249 = vmatpush.msra.mxu0 %v1120
  %2250 = vmatpush.msra.mxu0 %v1115
  %2251 = vmatpush.msra.mxu0 %v1110
  %2252 = vmatpush.msra.mxu0 %v1105
  %2253 = vmatpush.msra.mxu0 %v1100
  %2254 = vmatpush.msra.mxu0 %v1095
  %2255 = vmatpush.msra.mxu0 %v1090
  %2256 = vmatmul.f32.gmra.mxu0 %v45
  %v2257 = vpop.f32.mrf.mxu0
  %v2258 = vadd.f32 %v2238, %v2257
  %2259 = vdwg.mxu0
  %2260 = vmatpush.msra.mxu0 %v1245
  %2261 = vmatpush.msra.mxu0 %v1240
  %2262 = vmatpush.msra.mxu0 %v1235
  %2263 = vmatpush.msra.mxu0 %v1230
  %2264 = vmatpush.msra.mxu0 %v1225
  %2265 = vmatpush.msra.mxu0 %v1220
  %2266 = vmatpush.msra.mxu0 %v1215
  %2267 = vmatpush.msra.mxu0 %v1210
  %2268 = vmatpush.msra.mxu0 %v1205
  %2269 = vmatpush.msra.mxu0 %v1200
  %2270 = vmatpush.msra.mxu0 %v1195
  %2271 = vmatpush.msra.mxu0 %v1190
  %2272 = vmatpush.msra.mxu0 %v1185
  %2273 = vmatpush.msra.mxu0 %v1180
  %2274 = vmatpush.msra.mxu0 %v1175
  %2275 = vmatpush.msra.mxu0 %v1170
  %2276 = vmatmul.f32.gmra.mxu0 %v46
  %v2277 = vpop.f32.mrf.mxu0
  %v2278 = vadd.f32 %v2258, %v2277
  %2279 = vdwg.mxu0
  %2280 = vmatpush.msra.mxu0 %v1325
  %2281 = vmatpush.msra.mxu0 %v1320
  %2282 = vmatpush.msra.mxu0 %v1315
  %2283 = vmatpush.msra.mxu0 %v1310
  %2284 = vmatpush.msra.mxu0 %v1305
  %2285 = vmatpush.msra.mxu0 %v1300
  %2286 = vmatpush.msra.mxu0 %v1295
  %2287 = vmatpush.msra.mxu0 %v1290
  %2288 = vmatpush.msra.mxu0 %v1285
  %2289 = vmatpush.msra.mxu0 %v1280
  %2290 = vmatpush.msra.mxu0 %v1275
  %2291 = vmatpush.msra.mxu0 %v1270
  %2292 = vmatpush.msra.mxu0 %v1265
  %2293 = vmatpush.msra.mxu0 %v1260
  %2294 = vmatpush.msra.mxu0 %v1255
  %2295 = vmatpush.msra.mxu0 %v1250
  %2296 = vmatmul.f32.gmra.mxu0 %v47
  %v2297 = vpop.f32.mrf.mxu0
  %v2298 = vadd.f32 %v2278, %v2297
  %2299 = vdwg.mxu0
  %2300 = vmatpush.msra.mxu0 %v126
  %2301 = vmatpush.msra.mxu0 %v121
  %2302 = vmatpush.msra.mxu0 %v116
  %2303 = vmatpush.msra.mxu0 %v111
  %2304 = vmatpush.msra.mxu0 %v106
  %2305 = vmatpush.msra.mxu0 %v101
  %2306 = vmatpush.msra.mxu0 %v96
  %2307 = vmatpush.msra.mxu0 %v91
  %2308 = vmatpush.msra.mxu0 %v86
  %2309 = vmatpush.msra.mxu0 %v81
  %2310 = vmatpush.msra.mxu0 %v76
  %2311 = vmatpush.msra.mxu0 %v71
  %2312 = vmatpush.msra.mxu0 %v66
  %2313 = vmatpush.msra.mxu0 %v61
  %2314 = vmatpush.msra.mxu0 %v56
  %2315 = vmatpush.msra.mxu0 %v51
  %2316 = vmatmul.f32.gmra.mxu0 %v32
  %v2317 = vpop.f32.mrf.mxu0
  %v2318 = vadd.f32 %v1333, %v2317
  %2319 = vdwg.mxu0
  %2320 = vmatpush.msra.mxu0 %v206
  %2321 = vmatpush.msra.mxu0 %v201
  %2322 = vmatpush.msra.mxu0 %v196
  %2323 = vmatpush.msra.mxu0 %v191
  %2324 = vmatpush.msra.mxu0 %v186
  %2325 = vmatpush.msra.mxu0 %v181
  %2326 = vmatpush.msra.mxu0 %v176
  %2327 = vmatpush.msra.mxu0 %v171
  %2328 = vmatpush.msra.mxu0 %v166
  %2329 = vmatpush.msra.mxu0 %v161
  %2330 = vmatpush.msra.mxu0 %v156
  %2331 = vmatpush.msra.mxu0 %v151
  %2332 = vmatpush.msra.mxu0 %v146
  %2333 = vmatpush.msra.mxu0 %v141
  %2334 = vmatpush.msra.mxu0 %v136
  %2335 = vmatpush.msra.mxu0 %v131
  %2336 = vmatmul.f32.gmra.mxu0 %v33
  %v2337 = vpop.f32.mrf.mxu0
  %v2338 = vadd.f32 %v2318, %v2337
  %2339 = vdwg.mxu0
  %2340 = vmatpush.msra.mxu0 %v286
  %2341 = vmatpush.msra.mxu0 %v281
  %2342 = vmatpush.msra.mxu0 %v276
  %2343 = vmatpush.msra.mxu0 %v271
  %2344 = vmatpush.msra.mxu0 %v266
  %2345 = vmatpush.msra.mxu0 %v261
  %2346 = vmatpush.msra.mxu0 %v256
  %2347 = vmatpush.msra.mxu0 %v251
  %2348 = vmatpush.msra.mxu0 %v246
  %2349 = vmatpush.msra.mxu0 %v241
  %2350 = vmatpush.msra.mxu0 %v236
  %2351 = vmatpush.msra.mxu0 %v231
  %2352 = vmatpush.msra.mxu0 %v226
  %2353 = vmatpush.msra.mxu0 %v221
  %2354 = vmatpush.msra.mxu0 %v216
  %2355 = vmatpush.msra.mxu0 %v211
  %2356 = vmatmul.f32.gmra.mxu0 %v34
  %v2357 = vpop.f32.mrf.mxu0
  %v2358 = vadd.f32 %v2338, %v2357
  %2359 = vdwg.mxu0
  %2360 = vmatpush.msra.mxu0 %v366
  %2361 = vmatpush.msra.mxu0 %v361
  %2362 = vmatpush.msra.mxu0 %v356
  %2363 = vmatpush.msra.mxu0 %v351
  %2364 = vmatpush.msra.mxu0 %v346
  %2365 = vmatpush.msra.mxu0 %v341
  %2366 = vmatpush.msra.mxu0 %v336
  %2367 = vmatpush.msra.mxu0 %v331
  %2368 = vmatpush.msra.mxu0 %v326
  %2369 = vmatpush.msra.mxu0 %v321
  %2370 = vmatpush.msra.mxu0 %v316
  %2371 = vmatpush.msra.mxu0 %v311
  %2372 = vmatpush.msra.mxu0 %v306
  %2373 = vmatpush.msra.mxu0 %v301
  %2374 = vmatpush.msra.mxu0 %v296
  %2375 = vmatpush.msra.mxu0 %v291
  %2376 = vmatmul.f32.gmra.mxu0 %v35
  %v2377 = vpop.f32.mrf.mxu0
  %v2378 = vadd.f32 %v2358, %v2377
  %2379 = vdwg.mxu0
  %2380 = vmatpush.msra.mxu0 %v446
  %2381 = vmatpush.msra.mxu0 %v441
  %2382 = vmatpush.msra.mxu0 %v436
  %2383 = vmatpush.msra.mxu0 %v431
  %2384 = vmatpush.msra.mxu0 %v426
  %2385 = vmatpush.msra.mxu0 %v421
  %2386 = vmatpush.msra.mxu0 %v416
  %2387 = vmatpush.msra.mxu0 %v411
  %2388 = vmatpush.msra.mxu0 %v406
  %2389 = vmatpush.msra.mxu0 %v401
  %2390 = vmatpush.msra.mxu0 %v396
  %2391 = vmatpush.msra.mxu0 %v391
  %2392 = vmatpush.msra.mxu0 %v386
  %2393 = vmatpush.msra.mxu0 %v381
  %2394 = vmatpush.msra.mxu0 %v376
  %2395 = vmatpush.msra.mxu0 %v371
  %2396 = vmatmul.f32.gmra.mxu0 %v36
  %v2397 = vpop.f32.mrf.mxu0
  %v2398 = vadd.f32 %v2378, %v2397
  %2399 = vdwg.mxu0
  %2400 = vmatpush.msra.mxu0 %v526
  %2401 = vmatpush.msra.mxu0 %v521
  %2402 = vmatpush.msra.mxu0 %v516
  %2403 = vmatpush.msra.mxu0 %v511
  %2404 = vmatpush.msra.mxu0 %v506
  %2405 = vmatpush.msra.mxu0 %v501
  %2406 = vmatpush.msra.mxu0 %v496
  %2407 = vmatpush.msra.mxu0 %v491
  %2408 = vmatpush.msra.mxu0 %v486
  %2409 = vmatpush.msra.mxu0 %v481
  %2410 = vmatpush.msra.mxu0 %v476
  %2411 = vmatpush.msra.mxu0 %v471
  %2412 = vmatpush.msra.mxu0 %v466
  %2413 = vmatpush.msra.mxu0 %v461
  %2414 = vmatpush.msra.mxu0 %v456
  %2415 = vmatpush.msra.mxu0 %v451
  %2416 = vmatmul.f32.gmra.mxu0 %v37
  %v2417 = vpop.f32.mrf.mxu0
  %v2418 = vadd.f32 %v2398, %v2417
  %2419 = vdwg.mxu0
  %2420 = vmatpush.msra.mxu0 %v606
  %2421 = vmatpush.msra.mxu0 %v601
  %2422 = vmatpush.msra.mxu0 %v596
  %2423 = vmatpush.msra.mxu0 %v591
  %2424 = vmatpush.msra.mxu0 %v586
  %2425 = vmatpush.msra.mxu0 %v581
  %2426 = vmatpush.msra.mxu0 %v576
  %2427 = vmatpush.msra.mxu0 %v571
  %2428 = vmatpush.msra.mxu0 %v566
  %2429 = vmatpush.msra.mxu0 %v561
  %2430 = vmatpush.msra.mxu0 %v556
  %2431 = vmatpush.msra.mxu0 %v551
  %2432 = vmatpush.msra.mxu0 %v546
  %2433 = vmatpush.msra.mxu0 %v541
  %2434 = vmatpush.msra.mxu0 %v536
  %2435 = vmatpush.msra.mxu0 %v531
  %2436 = vmatmul.f32.gmra.mxu0 %v38
  %v2437 = vpop.f32.mrf.mxu0
  %v2438 = vadd.f32 %v2418, %v2437
  %2439 = vdwg.mxu0
  %2440 = vmatpush.msra.mxu0 %v686
  %2441 = vmatpush.msra.mxu0 %v681
  %2442 = vmatpush.msra.mxu0 %v676
  %2443 = vmatpush.msra.mxu0 %v671
  %2444 = vmatpush.msra.mxu0 %v666
  %2445 = vmatpush.msra.mxu0 %v661
  %2446 = vmatpush.msra.mxu0 %v656
  %2447 = vmatpush.msra.mxu0 %v651
  %2448 = vmatpush.msra.mxu0 %v646
  %2449 = vmatpush.msra.mxu0 %v641
  %2450 = vmatpush.msra.mxu0 %v636
  %2451 = vmatpush.msra.mxu0 %v631
  %2452 = vmatpush.msra.mxu0 %v626
  %2453 = vmatpush.msra.mxu0 %v621
  %2454 = vmatpush.msra.mxu0 %v616
  %2455 = vmatpush.msra.mxu0 %v611
  %2456 = vmatmul.f32.gmra.mxu0 %v39
  %v2457 = vpop.f32.mrf.mxu0
  %v2458 = vadd.f32 %v2438, %v2457
  %2459 = vdwg.mxu0
  %2460 = vmatpush.msra.mxu0 %v766
  %2461 = vmatpush.msra.mxu0 %v761
  %2462 = vmatpush.msra.mxu0 %v756
  %2463 = vmatpush.msra.mxu0 %v751
  %2464 = vmatpush.msra.mxu0 %v746
  %2465 = vmatpush.msra.mxu0 %v741
  %2466 = vmatpush.msra.mxu0 %v736
  %2467 = vmatpush.msra.mxu0 %v731
  %2468 = vmatpush.msra.mxu0 %v726
  %2469 = vmatpush.msra.mxu0 %v721
  %2470 = vmatpush.msra.mxu0 %v716
  %2471 = vmatpush.msra.mxu0 %v711
  %2472 = vmatpush.msra.mxu0 %v706
  %2473 = vmatpush.msra.mxu0 %v701
  %2474 = vmatpush.msra.mxu0 %v696
  %2475 = vmatpush.msra.mxu0 %v691
  %2476 = vmatmul.f32.gmra.mxu0 %v40
  %v2477 = vpop.f32.mrf.mxu0
  %v2478 = vadd.f32 %v2458, %v2477
  %2479 = vdwg.mxu0
  %2480 = vmatpush.msra.mxu0 %v846
  %2481 = vmatpush.msra.mxu0 %v841
  %2482 = vmatpush.msra.mxu0 %v836
  %2483 = vmatpush.msra.mxu0 %v831
  %2484 = vmatpush.msra.mxu0 %v826
  %2485 = vmatpush.msra.mxu0 %v821
  %2486 = vmatpush.msra.mxu0 %v816
  %2487 = vmatpush.msra.mxu0 %v811
  %2488 = vmatpush.msra.mxu0 %v806
  %2489 = vmatpush.msra.mxu0 %v801
  %2490 = vmatpush.msra.mxu0 %v796
  %2491 = vmatpush.msra.mxu0 %v791
  %2492 = vmatpush.msra.mxu0 %v786
  %2493 = vmatpush.msra.mxu0 %v781
  %2494 = vmatpush.msra.mxu0 %v776
  %2495 = vmatpush.msra.mxu0 %v771
  %2496 = vmatmul.f32.gmra.mxu0 %v41
  %v2497 = vpop.f32.mrf.mxu0
  %v2498 = vadd.f32 %v2478, %v2497
  %2499 = vdwg.mxu0
  %2500 = vmatpush.msra.mxu0 %v926
  %2501 = vmatpush.msra.mxu0 %v921
  %2502 = vmatpush.msra.mxu0 %v916
  %2503 = vmatpush.msra.mxu0 %v911
  %2504 = vmatpush.msra.mxu0 %v906
  %2505 = vmatpush.msra.mxu0 %v901
  %2506 = vmatpush.msra.mxu0 %v896
  %2507 = vmatpush.msra.mxu0 %v891
  %2508 = vmatpush.msra.mxu0 %v886
  %2509 = vmatpush.msra.mxu0 %v881
  %2510 = vmatpush.msra.mxu0 %v876
  %2511 = vmatpush.msra.mxu0 %v871
  %2512 = vmatpush.msra.mxu0 %v866
  %2513 = vmatpush.msra.mxu0 %v861
  %2514 = vmatpush.msra.mxu0 %v856
  %2515 = vmatpush.msra.mxu0 %v851
  %2516 = vmatmul.f32.gmra.mxu0 %v42
  %v2517 = vpop.f32.mrf.mxu0
  %v2518 = vadd.f32 %v2498, %v2517
  %2519 = vdwg.mxu0
  %2520 = vmatpush.msra.mxu0 %v1006
  %2521 = vmatpush.msra.mxu0 %v1001
  %2522 = vmatpush.msra.mxu0 %v996
  %2523 = vmatpush.msra.mxu0 %v991
  %2524 = vmatpush.msra.mxu0 %v986
  %2525 = vmatpush.msra.mxu0 %v981
  %2526 = vmatpush.msra.mxu0 %v976
  %2527 = vmatpush.msra.mxu0 %v971
  %2528 = vmatpush.msra.mxu0 %v966
  %2529 = vmatpush.msra.mxu0 %v961
  %2530 = vmatpush.msra.mxu0 %v956
  %2531 = vmatpush.msra.mxu0 %v951
  %2532 = vmatpush.msra.mxu0 %v946
  %2533 = vmatpush.msra.mxu0 %v941
  %2534 = vmatpush.msra.mxu0 %v936
  %2535 = vmatpush.msra.mxu0 %v931
  %2536 = vmatmul.f32.gmra.mxu0 %v43
  %v2537 = vpop.f32.mrf.mxu0
  %v2538 = vadd.f32 %v2518, %v2537
  %2539 = vdwg.mxu0
  %2540 = vmatpush.msra.mxu0 %v1086
  %2541 = vmatpush.msra.mxu0 %v1081
  %2542 = vmatpush.msra.mxu0 %v1076
  %2543 = vmatpush.msra.mxu0 %v1071
  %2544 = vmatpush.msra.mxu0 %v1066
  %2545 = vmatpush.msra.mxu0 %v1061
  %2546 = vmatpush.msra.mxu0 %v1056
  %2547 = vmatpush.msra.mxu0 %v1051
  %2548 = vmatpush.msra.mxu0 %v1046
  %2549 = vmatpush.msra.mxu0 %v1041
  %2550 = vmatpush.msra.mxu0 %v1036
  %2551 = vmatpush.msra.mxu0 %v1031
  %2552 = vmatpush.msra.mxu0 %v1026
  %2553 = vmatpush.msra.mxu0 %v1021
  %2554 = vmatpush.msra.mxu0 %v1016
  %2555 = vmatpush.msra.mxu0 %v1011
  %2556 = vmatmul.f32.gmra.mxu0 %v44
  %v2557 = vpop.f32.mrf.mxu0
  %v2558 = vadd.f32 %v2538, %v2557
  %2559 = vdwg.mxu0
  %2560 = vmatpush.msra.mxu0 %v1166
  %2561 = vmatpush.msra.mxu0 %v1161
  %2562 = vmatpush.msra.mxu0 %v1156
  %2563 = vmatpush.msra.mxu0 %v1151
  %2564 = vmatpush.msra.mxu0 %v1146
  %2565 = vmatpush.msra.mxu0 %v1141
  %2566 = vmatpush.msra.mxu0 %v1136
  %2567 = vmatpush.msra.mxu0 %v1131
  %2568 = vmatpush.msra.mxu0 %v1126
  %2569 = vmatpush.msra.mxu0 %v1121
  %2570 = vmatpush.msra.mxu0 %v1116
  %2571 = vmatpush.msra.mxu0 %v1111
  %2572 = vmatpush.msra.mxu0 %v1106
  %2573 = vmatpush.msra.mxu0 %v1101
  %2574 = vmatpush.msra.mxu0 %v1096
  %2575 = vmatpush.msra.mxu0 %v1091
  %2576 = vmatmul.f32.gmra.mxu0 %v45
  %v2577 = vpop.f32.mrf.mxu0
  %v2578 = vadd.f32 %v2558, %v2577
  %2579 = vdwg.mxu0
  %2580 = vmatpush.msra.mxu0 %v1246
  %2581 = vmatpush.msra.mxu0 %v1241
  %2582 = vmatpush.msra.mxu0 %v1236
  %2583 = vmatpush.msra.mxu0 %v1231
  %2584 = vmatpush.msra.mxu0 %v1226
  %2585 = vmatpush.msra.mxu0 %v1221
  %2586 = vmatpush.msra.mxu0 %v1216
  %2587 = vmatpush.msra.mxu0 %v1211
  %2588 = vmatpush.msra.mxu0 %v1206
  %2589 = vmatpush.msra.mxu0 %v1201
  %2590 = vmatpush.msra.mxu0 %v1196
  %2591 = vmatpush.msra.mxu0 %v1191
  %2592 = vmatpush.msra.mxu0 %v1186
  %2593 = vmatpush.msra.mxu0 %v1181
  %2594 = vmatpush.msra.mxu0 %v1176
  %2595 = vmatpush.msra.mxu0 %v1171
  %2596 = vmatmul.f32.gmra.mxu0 %v46
  %v2597 = vpop.f32.mrf.mxu0
  %v2598 = vadd.f32 %v2578, %v2597
  %2599 = vdwg.mxu0
  %2600 = vmatpush.msra.mxu0 %v1326
  %2601 = vmatpush.msra.mxu0 %v1321
  %2602 = vmatpush.msra.mxu0 %v1316
  %2603 = vmatpush.msra.mxu0 %v1311
  %2604 = vmatpush.msra.mxu0 %v1306
  %2605 = vmatpush.msra.mxu0 %v1301
  %2606 = vmatpush.msra.mxu0 %v1296
  %2607 = vmatpush.msra.mxu0 %v1291
  %2608 = vmatpush.msra.mxu0 %v1286
  %2609 = vmatpush.msra.mxu0 %v1281
  %2610 = vmatpush.msra.mxu0 %v1276
  %2611 = vmatpush.msra.mxu0 %v1271
  %2612 = vmatpush.msra.mxu0 %v1266
  %2613 = vmatpush.msra.mxu0 %v1261
  %2614 = vmatpush.msra.mxu0 %v1256
  %2615 = vmatpush.msra.mxu0 %v1251
  %2616 = vmatmul.f32.gmra.mxu0 %v47
  %v2617 = vpop.f32.mrf.mxu0
  %v2618 = vadd.f32 %v2598, %v2617
  %2619 = vdwg.mxu0
  %2620 = vmatpush.msra.mxu0 %v127
  %2621 = vmatpush.msra.mxu0 %v122
  %2622 = vmatpush.msra.mxu0 %v117
  %2623 = vmatpush.msra.mxu0 %v112
  %2624 = vmatpush.msra.mxu0 %v107
  %2625 = vmatpush.msra.mxu0 %v102
  %2626 = vmatpush.msra.mxu0 %v97
  %2627 = vmatpush.msra.mxu0 %v92
  %2628 = vmatpush.msra.mxu0 %v87
  %2629 = vmatpush.msra.mxu0 %v82
  %2630 = vmatpush.msra.mxu0 %v77
  %2631 = vmatpush.msra.mxu0 %v72
  %2632 = vmatpush.msra.mxu0 %v67
  %2633 = vmatpush.msra.mxu0 %v62
  %2634 = vmatpush.msra.mxu0 %v57
  %2635 = vmatpush.msra.mxu0 %v52
  %2636 = vmatmul.f32.gmra.mxu0 %v32
  %v2637 = vpop.f32.mrf.mxu0
  %v2638 = vadd.f32 %v1334, %v2637
  %2639 = vdwg.mxu0
  %2640 = vmatpush.msra.mxu0 %v207
  %2641 = vmatpush.msra.mxu0 %v202
  %2642 = vmatpush.msra.mxu0 %v197
  %2643 = vmatpush.msra.mxu0 %v192
  %2644 = vmatpush.msra.mxu0 %v187
  %2645 = vmatpush.msra.mxu0 %v182
  %2646 = vmatpush.msra.mxu0 %v177
  %2647 = vmatpush.msra.mxu0 %v172
  %2648 = vmatpush.msra.mxu0 %v167
  %2649 = vmatpush.msra.mxu0 %v162
  %2650 = vmatpush.msra.mxu0 %v157
  %2651 = vmatpush.msra.mxu0 %v152
  %2652 = vmatpush.msra.mxu0 %v147
  %2653 = vmatpush.msra.mxu0 %v142
  %2654 = vmatpush.msra.mxu0 %v137
  %2655 = vmatpush.msra.mxu0 %v132
  %2656 = vmatmul.f32.gmra.mxu0 %v33
  %v2657 = vpop.f32.mrf.mxu0
  %v2658 = vadd.f32 %v2638, %v2657
  %2659 = vdwg.mxu0
  %2660 = vmatpush.msra.mxu0 %v287
  %2661 = vmatpush.msra.mxu0 %v282
  %2662 = vmatpush.msra.mxu0 %v277
  %2663 = vmatpush.msra.mxu0 %v272
  %2664 = vmatpush.msra.mxu0 %v267
  %2665 = vmatpush.msra.mxu0 %v262
  %2666 = vmatpush.msra.mxu0 %v257
  %2667 = vmatpush.msra.mxu0 %v252
  %2668 = vmatpush.msra.mxu0 %v247
  %2669 = vmatpush.msra.mxu0 %v242
  %2670 = vmatpush.msra.mxu0 %v237
  %2671 = vmatpush.msra.mxu0 %v232
  %2672 = vmatpush.msra.mxu0 %v227
  %2673 = vmatpush.msra.mxu0 %v222
  %2674 = vmatpush.msra.mxu0 %v217
  %2675 = vmatpush.msra.mxu0 %v212
  %2676 = vmatmul.f32.gmra.mxu0 %v34
  %v2677 = vpop.f32.mrf.mxu0
  %v2678 = vadd.f32 %v2658, %v2677
  %2679 = vdwg.mxu0
  %2680 = vmatpush.msra.mxu0 %v367
  %2681 = vmatpush.msra.mxu0 %v362
  %2682 = vmatpush.msra.mxu0 %v357
  %2683 = vmatpush.msra.mxu0 %v352
  %2684 = vmatpush.msra.mxu0 %v347
  %2685 = vmatpush.msra.mxu0 %v342
  %2686 = vmatpush.msra.mxu0 %v337
  %2687 = vmatpush.msra.mxu0 %v332
  %2688 = vmatpush.msra.mxu0 %v327
  %2689 = vmatpush.msra.mxu0 %v322
  %2690 = vmatpush.msra.mxu0 %v317
  %2691 = vmatpush.msra.mxu0 %v312
  %2692 = vmatpush.msra.mxu0 %v307
  %2693 = vmatpush.msra.mxu0 %v302
  %2694 = vmatpush.msra.mxu0 %v297
  %2695 = vmatpush.msra.mxu0 %v292
  %2696 = vmatmul.f32.gmra.mxu0 %v35
  %v2697 = vpop.f32.mrf.mxu0
  %v2698 = vadd.f32 %v2678, %v2697
  %2699 = vdwg.mxu0
  %2700 = vmatpush.msra.mxu0 %v447
  %2701 = vmatpush.msra.mxu0 %v442
  %2702 = vmatpush.msra.mxu0 %v437
  %2703 = vmatpush.msra.mxu0 %v432
  %2704 = vmatpush.msra.mxu0 %v427
  %2705 = vmatpush.msra.mxu0 %v422
  %2706 = vmatpush.msra.mxu0 %v417
  %2707 = vmatpush.msra.mxu0 %v412
  %2708 = vmatpush.msra.mxu0 %v407
  %2709 = vmatpush.msra.mxu0 %v402
  %2710 = vmatpush.msra.mxu0 %v397
  %2711 = vmatpush.msra.mxu0 %v392
  %2712 = vmatpush.msra.mxu0 %v387
  %2713 = vmatpush.msra.mxu0 %v382
  %2714 = vmatpush.msra.mxu0 %v377
  %2715 = vmatpush.msra.mxu0 %v372
  %2716 = vmatmul.f32.gmra.mxu0 %v36
  %v2717 = vpop.f32.mrf.mxu0
  %v2718 = vadd.f32 %v2698, %v2717
  %2719 = vdwg.mxu0
  %2720 = vmatpush.msra.mxu0 %v527
  %2721 = vmatpush.msra.mxu0 %v522
  %2722 = vmatpush.msra.mxu0 %v517
  %2723 = vmatpush.msra.mxu0 %v512
  %2724 = vmatpush.msra.mxu0 %v507
  %2725 = vmatpush.msra.mxu0 %v502
  %2726 = vmatpush.msra.mxu0 %v497
  %2727 = vmatpush.msra.mxu0 %v492
  %2728 = vmatpush.msra.mxu0 %v487
  %2729 = vmatpush.msra.mxu0 %v482
  %2730 = vmatpush.msra.mxu0 %v477
  %2731 = vmatpush.msra.mxu0 %v472
  %2732 = vmatpush.msra.mxu0 %v467
  %2733 = vmatpush.msra.mxu0 %v462
  %2734 = vmatpush.msra.mxu0 %v457
  %2735 = vmatpush.msra.mxu0 %v452
  %2736 = vmatmul.f32.gmra.mxu0 %v37
  %v2737 = vpop.f32.mrf.mxu0
  %v2738 = vadd.f32 %v2718, %v2737
  %2739 = vdwg.mxu0
  %2740 = vmatpush.msra.mxu0 %v607
  %2741 = vmatpush.msra.mxu0 %v602
  %2742 = vmatpush.msra.mxu0 %v597
  %2743 = vmatpush.msra.mxu0 %v592
  %2744 = vmatpush.msra.mxu0 %v587
  %2745 = vmatpush.msra.mxu0 %v582
  %2746 = vmatpush.msra.mxu0 %v577
  %2747 = vmatpush.msra.mxu0 %v572
  %2748 = vmatpush.msra.mxu0 %v567
  %2749 = vmatpush.msra.mxu0 %v562
  %2750 = vmatpush.msra.mxu0 %v557
  %2751 = vmatpush.msra.mxu0 %v552
  %2752 = vmatpush.msra.mxu0 %v547
  %2753 = vmatpush.msra.mxu0 %v542
  %2754 = vmatpush.msra.mxu0 %v537
  %2755 = vmatpush.msra.mxu0 %v532
  %2756 = vmatmul.f32.gmra.mxu0 %v38
  %v2757 = vpop.f32.mrf.mxu0
  %v2758 = vadd.f32 %v2738, %v2757
  %2759 = vdwg.mxu0
  %2760 = vmatpush.msra.mxu0 %v687
  %2761 = vmatpush.msra.mxu0 %v682
  %2762 = vmatpush.msra.mxu0 %v677
  %2763 = vmatpush.msra.mxu0 %v672
  %2764 = vmatpush.msra.mxu0 %v667
  %2765 = vmatpush.msra.mxu0 %v662
  %2766 = vmatpush.msra.mxu0 %v657
  %2767 = vmatpush.msra.mxu0 %v652
  %2768 = vmatpush.msra.mxu0 %v647
  %2769 = vmatpush.msra.mxu0 %v642
  %2770 = vmatpush.msra.mxu0 %v637
  %2771 = vmatpush.msra.mxu0 %v632
  %2772 = vmatpush.msra.mxu0 %v627
  %2773 = vmatpush.msra.mxu0 %v622
  %2774 = vmatpush.msra.mxu0 %v617
  %2775 = vmatpush.msra.mxu0 %v612
  %2776 = vmatmul.f32.gmra.mxu0 %v39
  %v2777 = vpop.f32.mrf.mxu0
  %v2778 = vadd.f32 %v2758, %v2777
  %2779 = vdwg.mxu0
  %2780 = vmatpush.msra.mxu0 %v767
  %2781 = vmatpush.msra.mxu0 %v762
  %2782 = vmatpush.msra.mxu0 %v757
  %2783 = vmatpush.msra.mxu0 %v752
  %2784 = vmatpush.msra.mxu0 %v747
  %2785 = vmatpush.msra.mxu0 %v742
  %2786 = vmatpush.msra.mxu0 %v737
  %2787 = vmatpush.msra.mxu0 %v732
  %2788 = vmatpush.msra.mxu0 %v727
  %2789 = vmatpush.msra.mxu0 %v722
  %2790 = vmatpush.msra.mxu0 %v717
  %2791 = vmatpush.msra.mxu0 %v712
  %2792 = vmatpush.msra.mxu0 %v707
  %2793 = vmatpush.msra.mxu0 %v702
  %2794 = vmatpush.msra.mxu0 %v697
  %2795 = vmatpush.msra.mxu0 %v692
  %2796 = vmatmul.f32.gmra.mxu0 %v40
  %v2797 = vpop.f32.mrf.mxu0
  %v2798 = vadd.f32 %v2778, %v2797
  %2799 = vdwg.mxu0
  %2800 = vmatpush.msra.mxu0 %v847
  %2801 = vmatpush.msra.mxu0 %v842
  %2802 = vmatpush.msra.mxu0 %v837
  %2803 = vmatpush.msra.mxu0 %v832
  %2804 = vmatpush.msra.mxu0 %v827
  %2805 = vmatpush.msra.mxu0 %v822
  %2806 = vmatpush.msra.mxu0 %v817
  %2807 = vmatpush.msra.mxu0 %v812
  %2808 = vmatpush.msra.mxu0 %v807
  %2809 = vmatpush.msra.mxu0 %v802
  %2810 = vmatpush.msra.mxu0 %v797
  %2811 = vmatpush.msra.mxu0 %v792
  %2812 = vmatpush.msra.mxu0 %v787
  %2813 = vmatpush.msra.mxu0 %v782
  %2814 = vmatpush.msra.mxu0 %v777
  %2815 = vmatpush.msra.mxu0 %v772
  %2816 = vmatmul.f32.gmra.mxu0 %v41
  %v2817 = vpop.f32.mrf.mxu0
  %v2818 = vadd.f32 %v2798, %v2817
  %2819 = vdwg.mxu0
  %2820 = vmatpush.msra.mxu0 %v927
  %2821 = vmatpush.msra.mxu0 %v922
  %2822 = vmatpush.msra.mxu0 %v917
  %2823 = vmatpush.msra.mxu0 %v912
  %2824 = vmatpush.msra.mxu0 %v907
  %2825 = vmatpush.msra.mxu0 %v902
  %2826 = vmatpush.msra.mxu0 %v897
  %2827 = vmatpush.msra.mxu0 %v892
  %2828 = vmatpush.msra.mxu0 %v887
  %2829 = vmatpush.msra.mxu0 %v882
  %2830 = vmatpush.msra.mxu0 %v877
  %2831 = vmatpush.msra.mxu0 %v872
  %2832 = vmatpush.msra.mxu0 %v867
  %2833 = vmatpush.msra.mxu0 %v862
  %2834 = vmatpush.msra.mxu0 %v857
  %2835 = vmatpush.msra.mxu0 %v852
  %2836 = vmatmul.f32.gmra.mxu0 %v42
  %v2837 = vpop.f32.mrf.mxu0
  %v2838 = vadd.f32 %v2818, %v2837
  %2839 = vdwg.mxu0
  %2840 = vmatpush.msra.mxu0 %v1007
  %2841 = vmatpush.msra.mxu0 %v1002
  %2842 = vmatpush.msra.mxu0 %v997
  %2843 = vmatpush.msra.mxu0 %v992
  %2844 = vmatpush.msra.mxu0 %v987
  %2845 = vmatpush.msra.mxu0 %v982
  %2846 = vmatpush.msra.mxu0 %v977
  %2847 = vmatpush.msra.mxu0 %v972
  %2848 = vmatpush.msra.mxu0 %v967
  %2849 = vmatpush.msra.mxu0 %v962
  %2850 = vmatpush.msra.mxu0 %v957
  %2851 = vmatpush.msra.mxu0 %v952
  %2852 = vmatpush.msra.mxu0 %v947
  %2853 = vmatpush.msra.mxu0 %v942
  %2854 = vmatpush.msra.mxu0 %v937
  %2855 = vmatpush.msra.mxu0 %v932
  %2856 = vmatmul.f32.gmra.mxu0 %v43
  %v2857 = vpop.f32.mrf.mxu0
  %v2858 = vadd.f32 %v2838, %v2857
  %2859 = vdwg.mxu0
  %2860 = vmatpush.msra.mxu0 %v1087
  %2861 = vmatpush.msra.mxu0 %v1082
  %2862 = vmatpush.msra.mxu0 %v1077
  %2863 = vmatpush.msra.mxu0 %v1072
  %2864 = vmatpush.msra.mxu0 %v1067
  %2865 = vmatpush.msra.mxu0 %v1062
  %2866 = vmatpush.msra.mxu0 %v1057
  %2867 = vmatpush.msra.mxu0 %v1052
  %2868 = vmatpush.msra.mxu0 %v1047
  %2869 = vmatpush.msra.mxu0 %v1042
  %2870 = vmatpush.msra.mxu0 %v1037
  %2871 = vmatpush.msra.mxu0 %v1032
  %2872 = vmatpush.msra.mxu0 %v1027
  %2873 = vmatpush.msra.mxu0 %v1022
  %2874 = vmatpush.msra.mxu0 %v1017
  %2875 = vmatpush.msra.mxu0 %v1012
  %2876 = vmatmul.f32.gmra.mxu0 %v44
  %v2877 = vpop.f32.mrf.mxu0
  %v2878 = vadd.f32 %v2858, %v2877
  %2879 = vdwg.mxu0
  %2880 = vmatpush.msra.mxu0 %v1167
  %2881 = vmatpush.msra.mxu0 %v1162
  %2882 = vmatpush.msra.mxu0 %v1157
  %2883 = vmatpush.msra.mxu0 %v1152
  %2884 = vmatpush.msra.mxu0 %v1147
  %2885 = vmatpush.msra.mxu0 %v1142
  %2886 = vmatpush.msra.mxu0 %v1137
  %2887 = vmatpush.msra.mxu0 %v1132
  %2888 = vmatpush.msra.mxu0 %v1127
  %2889 = vmatpush.msra.mxu0 %v1122
  %2890 = vmatpush.msra.mxu0 %v1117
  %2891 = vmatpush.msra.mxu0 %v1112
  %2892 = vmatpush.msra.mxu0 %v1107
  %2893 = vmatpush.msra.mxu0 %v1102
  %2894 = vmatpush.msra.mxu0 %v1097
  %2895 = vmatpush.msra.mxu0 %v1092
  %2896 = vmatmul.f32.gmra.mxu0 %v45
  %v2897 = vpop.f32.mrf.mxu0
  %v2898 = vadd.f32 %v2878, %v2897
  %2899 = vdwg.mxu0
  %2900 = vmatpush.msra.mxu0 %v1247
  %2901 = vmatpush.msra.mxu0 %v1242
  %2902 = vmatpush.msra.mxu0 %v1237
  %2903 = vmatpush.msra.mxu0 %v1232
  %2904 = vmatpush.msra.mxu0 %v1227
  %2905 = vmatpush.msra.mxu0 %v1222
  %2906 = vmatpush.msra.mxu0 %v1217
  %2907 = vmatpush.msra.mxu0 %v1212
  %2908 = vmatpush.msra.mxu0 %v1207
  %2909 = vmatpush.msra.mxu0 %v1202
  %2910 = vmatpush.msra.mxu0 %v1197
  %2911 = vmatpush.msra.mxu0 %v1192
  %2912 = vmatpush.msra.mxu0 %v1187
  %2913 = vmatpush.msra.mxu0 %v1182
  %2914 = vmatpush.msra.mxu0 %v1177
  %2915 = vmatpush.msra.mxu0 %v1172
  %2916 = vmatmul.f32.gmra.mxu0 %v46
  %v2917 = vpop.f32.mrf.mxu0
  %v2918 = vadd.f32 %v2898, %v2917
  %2919 = vdwg.mxu0
  %2920 = vmatpush.msra.mxu0 %v1327
  %2921 = vmatpush.msra.mxu0 %v1322
  %2922 = vmatpush.msra.mxu0 %v1317
  %2923 = vmatpush.msra.mxu0 %v1312
  %2924 = vmatpush.msra.mxu0 %v1307
  %2925 = vmatpush.msra.mxu0 %v1302
  %2926 = vmatpush.msra.mxu0 %v1297
  %2927 = vmatpush.msra.mxu0 %v1292
  %2928 = vmatpush.msra.mxu0 %v1287
  %2929 = vmatpush.msra.mxu0 %v1282
  %2930 = vmatpush.msra.mxu0 %v1277
  %2931 = vmatpush.msra.mxu0 %v1272
  %2932 = vmatpush.msra.mxu0 %v1267
  %2933 = vmatpush.msra.mxu0 %v1262
  %2934 = vmatpush.msra.mxu0 %v1257
  %2935 = vmatpush.msra.mxu0 %v1252
  %2936 = vmatmul.f32.gmra.mxu0 %v47
  %v2937 = vpop.f32.mrf.mxu0
  %v2938 = vadd.f32 %v2918, %v2937
  %2939 = vdwg.mxu0
  %v2940 = vmax.f32 %v1658, 0.0
  %v2941 = vmax.f32 %v1978, 0.0
  %v2942 = vmax.f32 %v2298, 0.0
  %v2943 = vmax.f32 %v2618, 0.0
  %v2944 = vmax.f32 %v2938, 0.0
  %v2945 = vld [vmem:[%s3] sm:$0xff]
  %v2946 = vld [vmem:[%s3 + $0x8] sm:$0xff]
  %v2947 = vld [vmem:[%s3 + $0x10] sm:$0xff]
  %v2948 = vld [vmem:[%s3 + $0x18] sm:$0xff]
  %v2949 = vld [vmem:[%s3 + $0x20] sm:$0xff]
  %v2950 = vld [vmem:[%s3 + $0x28] sm:$0xff]
  %v2951 = vld [vmem:[%s3 + $0x30] sm:$0xff]
  %v2952 = vld [vmem:[%s3 + $0x38] sm:$0xff]
  %v2953 = vld [vmem:[%s3 + $0x40] sm:$0xff]
  %v2954 = vld [vmem:[%s3 + $0x48] sm:$0xff]
  %v2955 = vld [vmem:[%s3 + $0x50] sm:$0xff]
  %v2956 = vld [vmem:[%s3 + $0x58] sm:$0xff]
  %v2957 = vld [vmem:[%s3 + $0x60] sm:$0xff]
  %v2958 = vld [vmem:[%s3 + $0x68] sm:$0xff]
  %v2959 = vld [vmem:[%s3 + $0x70] sm:$0xff]
  %v2960 = vld [vmem:[%s3 + $0x78] sm:$0xff]
  %v2961 = vld [vmem:[%s3 + $0x80] sm:$0xff]
  %v2962 = vld [vmem:[%s3 + $0x88] sm:$0xff]
  %v2963 = vld [vmem:[%s3 + $0x90] sm:$0xff]
  %v2964 = vld [vmem:[%s3 + $0x98] sm:$0xff]
  %v2965 = vld [vmem:[%s3 + $0xa0] sm:$0xff]
  %v2966 = vld [vmem:[%s3 + $0xa8] sm:$0xff]
  %v2967 = vld [vmem:[%s3 + $0xb0] sm:$0xff]
  %v2968 = vld [vmem:[%s3 + $0xb8] sm:$0xff]
  %v2969 = vld [vmem:[%s3 + $0xc0] sm:$0xff]
  %v2970 = vld [vmem:[%s3 + $0xc8] sm:$0xff]
  %v2971 = vld [vmem:[%s3 + $0xd0] sm:$0xff]
  %v2972 = vld [vmem:[%s3 + $0xd8] sm:$0xff]
  %v2973 = vld [vmem:[%s3 + $0xe0] sm:$0xff]
  %v2974 = vld [vmem:[%s3 + $0xe8] sm:$0xff]
  %v2975 = vld [vmem:[%s3 + $0xf0] sm:$0xff]
  %v2976 = vld [vmem:[%s3 + $0xf8] sm:$0xff]
  %v2977 = vld [vmem:[%s3 + $0x100] sm:$0xff]
  %v2978 = vld [vmem:[%s3 + $0x108] sm:$0xff]
  %v2979 = vld [vmem:[%s3 + $0x110] sm:$0xff]
  %v2980 = vld [vmem:[%s3 + $0x118] sm:$0xff]
  %v2981 = vld [vmem:[%s3 + $0x120] sm:$0xff]
  %v2982 = vld [vmem:[%s3 + $0x128] sm:$0xff]
  %v2983 = vld [vmem:[%s3 + $0x130] sm:$0xff]
  %v2984 = vld [vmem:[%s3 + $0x138] sm:$0xff]
  %v2985 = vld [vmem:[%s3 + $0x140] sm:$0xff]
  %v2986 = vld [vmem:[%s3 + $0x148] sm:$0xff]
  %v2987 = vld [vmem:[%s3 + $0x150] sm:$0xff]
  %v2988 = vld [vmem:[%s3 + $0x158] sm:$0xff]
  %v2989 = vld [vmem:[%s3 + $0x160] sm:$0xff]
  %v2990 = vld [vmem:[%s3 + $0x168] sm:$0xff]
  %v2991 = vld [vmem:[%s3 + $0x170] sm:$0xff]
  %v2992 = vld [vmem:[%s3 + $0x178] sm:$0xff]
  %v2993 = vld [vmem:[%s3 + $0x180] sm:$0xff]
  %v2994 = vld [vmem:[%s3 + $0x188] sm:$0xff]
  %v2995 = vld [vmem:[%s3 + $0x190] sm:$0xff]
  %v2996 = vld [vmem:[%s3 + $0x198] sm:$0xff]
  %v2997 = vld [vmem:[%s3 + $0x1a0] sm:$0xff]
  %v2998 = vld [vmem:[%s3 + $0x1a8] sm:$0xff]
  %v2999 = vld [vmem:[%s3 + $0x1b0] sm:$0xff]
  %v3000 = vld [vmem:[%s3 + $0x1b8] sm:$0xff]
  %v3001 = vld [vmem:[%s3 + $0x1c0] sm:$0xff]
  %v3002 = vld [vmem:[%s3 + $0x1c8] sm:$0xff]
  %v3003 = vld [vmem:[%s3 + $0x1d0] sm:$0xff]
  %v3004 = vld [vmem:[%s3 + $0x1d8] sm:$0xff]
  %v3005 = vld [vmem:[%s3 + $0x1e0] sm:$0xff]
  %v3006 = vld [vmem:[%s3 + $0x1e8] sm:$0xff]
  %v3007 = vld [vmem:[%s3 + $0x1f0] sm:$0xff]
  %v3008 = vld [vmem:[%s3 + $0x1f8] sm:$0xff]
  %v3009 = vld [vmem:[%s3 + $0x200] sm:$0xff]
  %v3010 = vld [vmem:[%s3 + $0x208] sm:$0xff]
  %v3011 = vld [vmem:[%s3 + $0x210] sm:$0xff]
  %v3012 = vld [vmem:[%s3 + $0x218] sm:$0xff]
  %v3013 = vld [vmem:[%s3 + $0x220] sm:$0xff]
  %v3014 = vld [vmem:[%s3 + $0x228] sm:$0xff]
  %v3015 = vld [vmem:[%s3 + $0x230] sm:$0xff]
  %v3016 = vld [vmem:[%s3 + $0x238] sm:$0xff]
  %v3017 = vld [vmem:[%s3 + $0x240] sm:$0xff]
  %v3018 = vld [vmem:[%s3 + $0x248] sm:$0xff]
  %v3019 = vld [vmem:[%s3 + $0x250] sm:$0xff]
  %v3020 = vld [vmem:[%s3 + $0x258] sm:$0xff]
  %v3021 = vld [vmem:[%s3 + $0x260] sm:$0xff]
  %v3022 = vld [vmem:[%s3 + $0x268] sm:$0xff]
  %v3023 = vld [vmem:[%s3 + $0x270] sm:$0xff]
  %v3024 = vld [vmem:[%s3 + $0x278] sm:$0xff]
  %v3025 = vld [vmem:[%s4] sm:$0x1]
  %v3027 = vperm.slane %v3025, 0
  %3029 = vmatpush.msra.mxu0 %v2960
  %3030 = vmatpush.msra.mxu0 %v2959
  %3031 = vmatpush.msra.mxu0 %v2958
  %3032 = vmatpush.msra.mxu0 %v2957
  %3033 = vmatpush.msra.mxu0 %v2956
  %3034 = vmatpush.msra.mxu0 %v2955
  %3035 = vmatpush.msra.mxu0 %v2954
  %3036 = vmatpush.msra.mxu0 %v2953
  %3037 = vmatpush.msra.mxu0 %v2952
  %3038 = vmatpush.msra.mxu0 %v2951
  %3039 = vmatpush.msra.mxu0 %v2950
  %3040 = vmatpush.msra.mxu0 %v2949
  %3041 = vmatpush.msra.mxu0 %v2948
  %3042 = vmatpush.msra.mxu0 %v2947
  %3043 = vmatpush.msra.mxu0 %v2946
  %3044 = vmatpush.msra.mxu0 %v2945
  %3045 = vmatmul.f32.gmra.mxu0 %v2940
  %v3046 = vpop.f32.mrf.mxu0
  %v3047 = vadd.f32 %v3027, %v3046
  %3048 = vdwg.mxu0
  %3049 = vmatpush.msra.mxu0 %v2976
  %3050 = vmatpush.msra.mxu0 %v2975
  %3051 = vmatpush.msra.mxu0 %v2974
  %3052 = vmatpush.msra.mxu0 %v2973
  %3053 = vmatpush.msra.mxu0 %v2972
  %3054 = vmatpush.msra.mxu0 %v2971
  %3055 = vmatpush.msra.mxu0 %v2970
  %3056 = vmatpush.msra.mxu0 %v2969
  %3057 = vmatpush.msra.mxu0 %v2968
  %3058 = vmatpush.msra.mxu0 %v2967
  %3059 = vmatpush.msra.mxu0 %v2966
  %3060 = vmatpush.msra.mxu0 %v2965
  %3061 = vmatpush.msra.mxu0 %v2964
  %3062 = vmatpush.msra.mxu0 %v2963
  %3063 = vmatpush.msra.mxu0 %v2962
  %3064 = vmatpush.msra.mxu0 %v2961
  %3065 = vmatmul.f32.gmra.mxu0 %v2941
  %v3066 = vpop.f32.mrf.mxu0
  %v3067 = vadd.f32 %v3047, %v3066
  %3068 = vdwg.mxu0
  %3069 = vmatpush.msra.mxu0 %v2992
  %3070 = vmatpush.msra.mxu0 %v2991
  %3071 = vmatpush.msra.mxu0 %v2990
  %3072 = vmatpush.msra.mxu0 %v2989
  %3073 = vmatpush.msra.mxu0 %v2988
  %3074 = vmatpush.msra.mxu0 %v2987
  %3075 = vmatpush.msra.mxu0 %v2986
  %3076 = vmatpush.msra.mxu0 %v2985
  %3077 = vmatpush.msra.mxu0 %v2984
  %3078 = vmatpush.msra.mxu0 %v2983
  %3079 = vmatpush.msra.mxu0 %v2982
  %3080 = vmatpush.msra.mxu0 %v2981
  %3081 = vmatpush.msra.mxu0 %v2980
  %3082 = vmatpush.msra.mxu0 %v2979
  %3083 = vmatpush.msra.mxu0 %v2978
  %3084 = vmatpush.msra.mxu0 %v2977
  %3085 = vmatmul.f32.gmra.mxu0 %v2942
  %v3086 = vpop.f32.mrf.mxu0
  %v3087 = vadd.f32 %v3067, %v3086
  %3088 = vdwg.mxu0
  %3089 = vmatpush.msra.mxu0 %v3008
  %3090 = vmatpush.msra.mxu0 %v3007
  %3091 = vmatpush.msra.mxu0 %v3006
  %3092 = vmatpush.msra.mxu0 %v3005
  %3093 = vmatpush.msra.mxu0 %v3004
  %3094 = vmatpush.msra.mxu0 %v3003
  %3095 = vmatpush.msra.mxu0 %v3002
  %3096 = vmatpush.msra.mxu0 %v3001
  %3097 = vmatpush.msra.mxu0 %v3000
  %3098 = vmatpush.msra.mxu0 %v2999
  %3099 = vmatpush.msra.mxu0 %v2998
  %3100 = vmatpush.msra.mxu0 %v2997
  %3101 = vmatpush.msra.mxu0 %v2996
  %3102 = vmatpush.msra.mxu0 %v2995
  %3103 = vmatpush.msra.mxu0 %v2994
  %3104 = vmatpush.msra.mxu0 %v2993
  %3105 = vmatmul.f32.gmra.mxu0 %v2943
  %v3106 = vpop.f32.mrf.mxu0
  %v3107 = vadd.f32 %v3087, %v3106
  %3108 = vdwg.mxu0
  %3109 = vmatpush.msra.mxu0 %v3024
  %3110 = vmatpush.msra.mxu0 %v3023
  %3111 = vmatpush.msra.mxu0 %v3022
  %3112 = vmatpush.msra.mxu0 %v3021
  %3113 = vmatpush.msra.mxu0 %v3020
  %3114 = vmatpush.msra.mxu0 %v3019
  %3115 = vmatpush.msra.mxu0 %v3018
  %3116 = vmatpush.msra.mxu0 %v3017
  %3117 = vmatpush.msra.mxu0 %v3016
  %3118 = vmatpush.msra.mxu0 %v3015
  %3119 = vmatpush.msra.mxu0 %v3014
  %3120 = vmatpush.msra.mxu0 %v3013
  %3121 = vmatpush.msra.mxu0 %v3012
  %3122 = vmatpush.msra.mxu0 %v3011
  %3123 = vmatpush.msra.mxu0 %v3010
  %3124 = vmatpush.msra.mxu0 %v3009
  %3125 = vmatmul.f32.gmra.mxu0 %v2944
  %v3126 = vpop.f32.mrf.mxu0
  %v3127 = vadd.f32 %v3107, %v3126
  %3128 = vdwg.mxu0
  %v3129 = vmax.f32 %v3127, 0.0
  %v3130 = vld [vmem:[%s5] sm:$0xff]
  %v3131 = vld [vmem:[%s5 + $0x8] sm:$0xff]
  %v3132 = vld [vmem:[%s5 + $0x10] sm:$0xff]
  %v3133 = vld [vmem:[%s5 + $0x18] sm:$0xff]
  %v3134 = vld [vmem:[%s5 + $0x20] sm:$0xff]
  %v3135 = vld [vmem:[%s5 + $0x28] sm:$0xff]
  %v3136 = vld [vmem:[%s5 + $0x30] sm:$0xff]
  %v3137 = vld [vmem:[%s5 + $0x38] sm:$0xff]
  %v3138 = vld [vmem:[%s5 + $0x40] sm:$0xff]
  %v3139 = vld [vmem:[%s5 + $0x48] sm:$0xff]
  %v3140 = vld [vmem:[%s5 + $0x50] sm:$0xff]
  %v3141 = vld [vmem:[%s5 + $0x58] sm:$0xff]
  %v3142 = vld [vmem:[%s5 + $0x60] sm:$0xff]
  %v3143 = vld [vmem:[%s5 + $0x68] sm:$0xff]
  %v3144 = vld [vmem:[%s5 + $0x70] sm:$0xff]
  %v3145 = vld [vmem:[%s5 + $0x78] sm:$0xff]
  %v3146 = vld [vmem:[%s5 + $0x80] sm:$0xff]
  %v3147 = vld [vmem:[%s5 + $0x88] sm:$0xff]
  %v3148 = vld [vmem:[%s5 + $0x90] sm:$0xff]
  %v3149 = vld [vmem:[%s5 + $0x98] sm:$0xff]
  %v3150 = vld [vmem:[%s5 + $0xa0] sm:$0xff]
  %v3151 = vld [vmem:[%s5 + $0xa8] sm:$0xff]
  %v3152 = vld [vmem:[%s5 + $0xb0] sm:$0xff]
  %v3153 = vld [vmem:[%s5 + $0xb8] sm:$0xff]
  %v3154 = vld [vmem:[%s5 + $0xc0] sm:$0xff]
  %v3155 = vld [vmem:[%s5 + $0xc8] sm:$0xff]
  %v3156 = vld [vmem:[%s5 + $0xd0] sm:$0xff]
  %v3157 = vld [vmem:[%s5 + $0xd8] sm:$0xff]
  %v3158 = vld [vmem:[%s5 + $0xe0] sm:$0xff]
  %v3159 = vld [vmem:[%s5 + $0xe8] sm:$0xff]
  %v3160 = vld [vmem:[%s5 + $0xf0] sm:$0xff]
  %v3161 = vld [vmem:[%s5 + $0xf8] sm:$0xff]
  %v3162 = vld [vmem:[%s5 + $0x100] sm:$0xff]
  %v3163 = vld [vmem:[%s5 + $0x108] sm:$0xff]
  %v3164 = vld [vmem:[%s5 + $0x110] sm:$0xff]
  %v3165 = vld [vmem:[%s5 + $0x118] sm:$0xff]
  %v3166 = vld [vmem:[%s5 + $0x120] sm:$0xff]
  %v3167 = vld [vmem:[%s5 + $0x128] sm:$0xff]
  %v3168 = vld [vmem:[%s5 + $0x130] sm:$0xff]
  %v3169 = vld [vmem:[%s5 + $0x138] sm:$0xff]
  %v3170 = vld [vmem:[%s5 + $0x140] sm:$0xff]
  %v3171 = vld [vmem:[%s5 + $0x148] sm:$0xff]
  %v3172 = vld [vmem:[%s5 + $0x150] sm:$0xff]
  %v3173 = vld [vmem:[%s5 + $0x158] sm:$0xff]
  %v3174 = vld [vmem:[%s5 + $0x160] sm:$0xff]
  %v3175 = vld [vmem:[%s5 + $0x168] sm:$0xff]
  %v3176 = vld [vmem:[%s5 + $0x170] sm:$0xff]
  %v3177 = vld [vmem:[%s5 + $0x178] sm:$0xff]
  %v3178 = vld [vmem:[%s5 + $0x180] sm:$0xff]
  %v3179 = vld [vmem:[%s5 + $0x188] sm:$0xff]
  %v3180 = vld [vmem:[%s5 + $0x190] sm:$0xff]
  %v3181 = vld [vmem:[%s5 + $0x198] sm:$0xff]
  %v3182 = vld [vmem:[%s5 + $0x1a0] sm:$0xff]
  %v3183 = vld [vmem:[%s5 + $0x1a8] sm:$0xff]
  %v3184 = vld [vmem:[%s5 + $0x1b0] sm:$0xff]
  %v3185 = vld [vmem:[%s5 + $0x1b8] sm:$0xff]
  %v3186 = vld [vmem:[%s5 + $0x1c0] sm:$0xff]
  %v3187 = vld [vmem:[%s5 + $0x1c8] sm:$0xff]
  %v3188 = vld [vmem:[%s5 + $0x1d0] sm:$0xff]
  %v3189 = vld [vmem:[%s5 + $0x1d8] sm:$0xff]
  %v3190 = vld [vmem:[%s5 + $0x1e0] sm:$0xff]
  %v3191 = vld [vmem:[%s5 + $0x1e8] sm:$0xff]
  %v3192 = vld [vmem:[%s5 + $0x1f0] sm:$0xff]
  %v3193 = vld [vmem:[%s5 + $0x1f8] sm:$0xff]
  %v3194 = vld [vmem:[%s6] sm:$0xf]
  %v3196 = vperm.slane %v3194, 0
  %v3197 = vperm.slane %v3194, 1
  %v3198 = vperm.slane %v3194, 2
  %v3199 = vperm.slane %v3194, 3
  %3204 = vmatpush.msra.mxu0 %v3190
  %3205 = vmatpush.msra.mxu0 %v3186
  %3206 = vmatpush.msra.mxu0 %v3182
  %3207 = vmatpush.msra.mxu0 %v3178
  %3208 = vmatpush.msra.mxu0 %v3174
  %3209 = vmatpush.msra.mxu0 %v3170
  %3210 = vmatpush.msra.mxu0 %v3166
  %3211 = vmatpush.msra.mxu0 %v3162
  %3212 = vmatpush.msra.mxu0 %v3158
  %3213 = vmatpush.msra.mxu0 %v3154
  %3214 = vmatpush.msra.mxu0 %v3150
  %3215 = vmatpush.msra.mxu0 %v3146
  %3216 = vmatpush.msra.mxu0 %v3142
  %3217 = vmatpush.msra.mxu0 %v3138
  %3218 = vmatpush.msra.mxu0 %v3134
  %3219 = vmatpush.msra.mxu0 %v3130
  %3220 = vmatmul.f32.gmra.mxu0 %v3129
  %v3221 = vpop.f32.mrf.mxu0
  %v3222 = vadd.f32 %v3196, %v3221
  %3223 = vdwg.mxu0
  %3224 = vmatpush.msra.mxu0 %v3191
  %3225 = vmatpush.msra.mxu0 %v3187
  %3226 = vmatpush.msra.mxu0 %v3183
  %3227 = vmatpush.msra.mxu0 %v3179
  %3228 = vmatpush.msra.mxu0 %v3175
  %3229 = vmatpush.msra.mxu0 %v3171
  %3230 = vmatpush.msra.mxu0 %v3167
  %3231 = vmatpush.msra.mxu0 %v3163
  %3232 = vmatpush.msra.mxu0 %v3159
  %3233 = vmatpush.msra.mxu0 %v3155
  %3234 = vmatpush.msra.mxu0 %v3151
  %3235 = vmatpush.msra.mxu0 %v3147
  %3236 = vmatpush.msra.mxu0 %v3143
  %3237 = vmatpush.msra.mxu0 %v3139
  %3238 = vmatpush.msra.mxu0 %v3135
  %3239 = vmatpush.msra.mxu0 %v3131
  %3240 = vmatmul.f32.gmra.mxu0 %v3129
  %v3241 = vpop.f32.mrf.mxu0
  %v3242 = vadd.f32 %v3197, %v3241
  %3243 = vdwg.mxu0
  %3244 = vmatpush.msra.mxu0 %v3192
  %3245 = vmatpush.msra.mxu0 %v3188
  %3246 = vmatpush.msra.mxu0 %v3184
  %3247 = vmatpush.msra.mxu0 %v3180
  %3248 = vmatpush.msra.mxu0 %v3176
  %3249 = vmatpush.msra.mxu0 %v3172
  %3250 = vmatpush.msra.mxu0 %v3168
  %3251 = vmatpush.msra.mxu0 %v3164
  %3252 = vmatpush.msra.mxu0 %v3160
  %3253 = vmatpush.msra.mxu0 %v3156
  %3254 = vmatpush.msra.mxu0 %v3152
  %3255 = vmatpush.msra.mxu0 %v3148
  %3256 = vmatpush.msra.mxu0 %v3144
  %3257 = vmatpush.msra.mxu0 %v3140
  %3258 = vmatpush.msra.mxu0 %v3136
  %3259 = vmatpush.msra.mxu0 %v3132
  %3260 = vmatmul.f32.gmra.mxu0 %v3129
  %v3261 = vpop.f32.mrf.mxu0
  %v3262 = vadd.f32 %v3198, %v3261
  %3263 = vdwg.mxu0
  %3264 = vmatpush.msra.mxu0 %v3193
  %3265 = vmatpush.msra.mxu0 %v3189
  %3266 = vmatpush.msra.mxu0 %v3185
  %3267 = vmatpush.msra.mxu0 %v3181
  %3268 = vmatpush.msra.mxu0 %v3177
  %3269 = vmatpush.msra.mxu0 %v3173
  %3270 = vmatpush.msra.mxu0 %v3169
  %3271 = vmatpush.msra.mxu0 %v3165
  %3272 = vmatpush.msra.mxu0 %v3161
  %3273 = vmatpush.msra.mxu0 %v3157
  %3274 = vmatpush.msra.mxu0 %v3153
  %3275 = vmatpush.msra.mxu0 %v3149
  %3276 = vmatpush.msra.mxu0 %v3145
  %3277 = vmatpush.msra.mxu0 %v3141
  %3278 = vmatpush.msra.mxu0 %v3137
  %3279 = vmatpush.msra.mxu0 %v3133
  %3280 = vmatmul.f32.gmra.mxu0 %v3129
  %v3281 = vpop.f32.mrf.mxu0
  %v3282 = vadd.f32 %v3199, %v3281
  %3283 = vdwg.mxu0
  %v3284 = vmax.f32 %v3222, 0.0
  %v3285 = vmax.f32 %v3242, 0.0
  %v3286 = vmax.f32 %v3262, 0.0
  %v3287 = vmax.f32 %v3282, 0.0
  %v3288 = vld [vmem:[%s7] sm:$0xff]
  %v3289 = vld [vmem:[%s7 + $0x8] sm:$0xff]
  %v3290 = vld [vmem:[%s7 + $0x10] sm:$0xff]
  %v3291 = vld [vmem:[%s7 + $0x18] sm:$0xff]
  %v3292 = vld [vmem:[%s7 + $0x20] sm:$0xff]
  %v3293 = vld [vmem:[%s7 + $0x28] sm:$0xff]
  %v3294 = vld [vmem:[%s7 + $0x30] sm:$0xff]
  %v3295 = vld [vmem:[%s7 + $0x38] sm:$0xff]
  %v3296 = vld [vmem:[%s7 + $0x40] sm:$0xff]
  %v3297 = vld [vmem:[%s7 + $0x48] sm:$0xff]
  %v3298 = vld [vmem:[%s7 + $0x50] sm:$0xff]
  %v3299 = vld [vmem:[%s7 + $0x58] sm:$0xff]
  %v3300 = vld [vmem:[%s7 + $0x60] sm:$0xff]
  %v3301 = vld [vmem:[%s7 + $0x68] sm:$0xff]
  %v3302 = vld [vmem:[%s7 + $0x70] sm:$0xff]
  %v3303 = vld [vmem:[%s7 + $0x78] sm:$0xff]
  %v3304 = vld [vmem:[%s7 + $0x80] sm:$0xff]
  %v3305 = vld [vmem:[%s7 + $0x88] sm:$0xff]
  %v3306 = vld [vmem:[%s7 + $0x90] sm:$0xff]
  %v3307 = vld [vmem:[%s7 + $0x98] sm:$0xff]
  %v3308 = vld [vmem:[%s7 + $0xa0] sm:$0xff]
  %v3309 = vld [vmem:[%s7 + $0xa8] sm:$0xff]
  %v3310 = vld [vmem:[%s7 + $0xb0] sm:$0xff]
  %v3311 = vld [vmem:[%s7 + $0xb8] sm:$0xff]
  %v3312 = vld [vmem:[%s7 + $0xc0] sm:$0xff]
  %v3313 = vld [vmem:[%s7 + $0xc8] sm:$0xff]
  %v3314 = vld [vmem:[%s7 + $0xd0] sm:$0xff]
  %v3315 = vld [vmem:[%s7 + $0xd8] sm:$0xff]
  %v3316 = vld [vmem:[%s7 + $0xe0] sm:$0xff]
  %v3317 = vld [vmem:[%s7 + $0xe8] sm:$0xff]
  %v3318 = vld [vmem:[%s7 + $0xf0] sm:$0xff]
  %v3319 = vld [vmem:[%s7 + $0xf8] sm:$0xff]
  %v3320 = vld [vmem:[%s7 + $0x100] sm:$0xff]
  %v3321 = vld [vmem:[%s7 + $0x108] sm:$0xff]
  %v3322 = vld [vmem:[%s7 + $0x110] sm:$0xff]
  %v3323 = vld [vmem:[%s7 + $0x118] sm:$0xff]
  %v3324 = vld [vmem:[%s7 + $0x120] sm:$0xff]
  %v3325 = vld [vmem:[%s7 + $0x128] sm:$0xff]
  %v3326 = vld [vmem:[%s7 + $0x130] sm:$0xff]
  %v3327 = vld [vmem:[%s7 + $0x138] sm:$0xff]
  %v3328 = vld [vmem:[%s7 + $0x140] sm:$0xff]
  %v3329 = vld [vmem:[%s7 + $0x148] sm:$0xff]
  %v3330 = vld [vmem:[%s7 + $0x150] sm:$0xff]
  %v3331 = vld [vmem:[%s7 + $0x158] sm:$0xff]
  %v3332 = vld [vmem:[%s7 + $0x160] sm:$0xff]
  %v3333 = vld [vmem:[%s7 + $0x168] sm:$0xff]
  %v3334 = vld [vmem:[%s7 + $0x170] sm:$0xff]
  %v3335 = vld [vmem:[%s7 + $0x178] sm:$0xff]
  %v3336 = vld [vmem:[%s7 + $0x180] sm:$0xff]
  %v3337 = vld [vmem:[%s7 + $0x188] sm:$0xff]
  %v3338 = vld [vmem:[%s7 + $0x190] sm:$0xff]
  %v3339 = vld [vmem:[%s7 + $0x198] sm:$0xff]
  %v3340 = vld [vmem:[%s7 + $0x1a0] sm:$0xff]
  %v3341 = vld [vmem:[%s7 + $0x1a8] sm:$0xff]
  %v3342 = vld [vmem:[%s7 + $0x1b0] sm:$0xff]
  %v3343 = vld [vmem:[%s7 + $0x1b8] sm:$0xff]
  %v3344 = vld [vmem:[%s7 + $0x1c0] sm:$0xff]
  %v3345 = vld [vmem:[%s7 + $0x1c8] sm:$0xff]
  %v3346 = vld [vmem:[%s7 + $0x1d0] sm:$0xff]
  %v3347 = vld [vmem:[%s7 + $0x1d8] sm:$0xff]
  %v3348 = vld [vmem:[%s7 + $0x1e0] sm:$0xff]
  %v3349 = vld [vmem:[%s7 + $0x1e8] sm:$0xff]
  %v3350 = vld [vmem:[%s7 + $0x1f0] sm:$0xff]
  %v3351 = vld [vmem:[%s7 + $0x1f8] sm:$0xff]
  %v3352 = vld [vmem:[%s8] sm:$0x1]
  %v3354 = vperm.slane %v3352, 0
  %3356 = vmatpush.msra.mxu0 %v3303
  %3357 = vmatpush.msra.mxu0 %v3302
  %3358 = vmatpush.msra.mxu0 %v3301
  %3359 = vmatpush.msra.mxu0 %v3300
  %3360 = vmatpush.msra.mxu0 %v3299
  %3361 = vmatpush.msra.mxu0 %v3298
  %3362 = vmatpush.msra.mxu0 %v3297
  %3363 = vmatpush.msra.mxu0 %v3296
  %3364 = vmatpush.msra.mxu0 %v3295
  %3365 = vmatpush.msra.mxu0 %v3294
  %3366 = vmatpush.msra.mxu0 %v3293
  %3367 = vmatpush.msra.mxu0 %v3292
  %3368 = vmatpush.msra.mxu0 %v3291
  %3369 = vmatpush.msra.mxu0 %v3290
  %3370 = vmatpush.msra.mxu0 %v3289
  %3371 = vmatpush.msra.mxu0 %v3288
  %3372 = vmatmul.f32.gmra.mxu0 %v3284
  %v3373 = vpop.f32.mrf.mxu0
  %v3374 = vadd.f32 %v3354, %v3373
  %3375 = vdwg.mxu0
  %3376 = vmatpush.msra.mxu0 %v3319
  %3377 = vmatpush.msra.mxu0 %v3318
  %3378 = vmatpush.msra.mxu0 %v3317
  %3379 = vmatpush.msra.mxu0 %v3316
  %3380 = vmatpush.msra.mxu0 %v3315
  %3381 = vmatpush.msra.mxu0 %v3314
  %3382 = vmatpush.msra.mxu0 %v3313
  %3383 = vmatpush.msra.mxu0 %v3312
  %3384 = vmatpush.msra.mxu0 %v3311
  %3385 = vmatpush.msra.mxu0 %v3310
  %3386 = vmatpush.msra.mxu0 %v3309
  %3387 = vmatpush.msra.mxu0 %v3308
  %3388 = vmatpush.msra.mxu0 %v3307
  %3389 = vmatpush.msra.mxu0 %v3306
  %3390 = vmatpush.msra.mxu0 %v3305
  %3391 = vmatpush.msra.mxu0 %v3304
  %3392 = vmatmul.f32.gmra.mxu0 %v3285
  %v3393 = vpop.f32.mrf.mxu0
  %v3394 = vadd.f32 %v3374, %v3393
  %3395 = vdwg.mxu0
  %3396 = vmatpush.msra.mxu0 %v3335
  %3397 = vmatpush.msra.mxu0 %v3334
  %3398 = vmatpush.msra.mxu0 %v3333
  %3399 = vmatpush.msra.mxu0 %v3332
  %3400 = vmatpush.msra.mxu0 %v3331
  %3401 = vmatpush.msra.mxu0 %v3330
  %3402 = vmatpush.msra.mxu0 %v3329
  %3403 = vmatpush.msra.mxu0 %v3328
  %3404 = vmatpush.msra.mxu0 %v3327
  %3405 = vmatpush.msra.mxu0 %v3326
  %3406 = vmatpush.msra.mxu0 %v3325
  %3407 = vmatpush.msra.mxu0 %v3324
  %3408 = vmatpush.msra.mxu0 %v3323
  %3409 = vmatpush.msra.mxu0 %v3322
  %3410 = vmatpush.msra.mxu0 %v3321
  %3411 = vmatpush.msra.mxu0 %v3320
  %3412 = vmatmul.f32.gmra.mxu0 %v3286
  %v3413 = vpop.f32.mrf.mxu0
  %v3414 = vadd.f32 %v3394, %v3413
  %3415 = vdwg.mxu0
  %3416 = vmatpush.msra.mxu0 %v3351
  %3417 = vmatpush.msra.mxu0 %v3350
  %3418 = vmatpush.msra.mxu0 %v3349
  %3419 = vmatpush.msra.mxu0 %v3348
  %3420 = vmatpush.msra.mxu0 %v3347
  %3421 = vmatpush.msra.mxu0 %v3346
  %3422 = vmatpush.msra.mxu0 %v3345
  %3423 = vmatpush.msra.mxu0 %v3344
  %3424 = vmatpush.msra.mxu0 %v3343
  %3425 = vmatpush.msra.mxu0 %v3342
  %3426 = vmatpush.msra.mxu0 %v3341
  %3427 = vmatpush.msra.mxu0 %v3340
  %3428 = vmatpush.msra.mxu0 %v3339
  %3429 = vmatpush.msra.mxu0 %v3338
  %3430 = vmatpush.msra.mxu0 %v3337
  %3431 = vmatpush.msra.mxu0 %v3336
  %3432 = vmatmul.f32.gmra.mxu0 %v3287
  %v3433 = vpop.f32.mrf.mxu0
  %v3434 = vadd.f32 %v3414, %v3433
  %3435 = vdwg.mxu0
  %3436 = vst [vmem:[%s9] sm:$0xff] %v3434
  // Predicated region
  $region38: #{player_nn_forward.3} parent=0 // pred_check
    _
  $region39: #{player_nn_forward.3} parent=0 // pred_check_branch
    %3438 = sbr.rel (0) target = $region41
  $region40: #{player_nn_forward.3} parent=0 // pred_region
    _
  $region41: #{player_nn_forward.3} parent=0 // pred_fallthru
    _
  // Predicated region
  $region42: #{player_nn_forward.3} parent=0 // pred_check
    _
  $region43: #{player_nn_forward.3} parent=0 // pred_check_branch
    %3440 = sbr.rel (0) target = $region45
  $region44: #{player_nn_forward.3} parent=0 // pred_region
    _
  $region45: #{player_nn_forward.3} parent=0 // pred_fallthru
    _

</llo_original>
